<compile_context>
chip_gen: v7x
topology: tpu7x:2x2x1
jax: 0.10.0
libtpu: 0.0.40
codegen_flags: <defaults>
</compile_context>

<pallas_src>
import numpy as np
import jax
import jax.numpy as jnp
from jax.experimental import pallas as pl
from jax.experimental.pallas import tpu as pltpu


PARAM_ORDER = ("wt1", "bt1", "wt2", "bt2", "win", "bin", "g1", "be1",
               "wqkv", "bqkv", "wo", "bo", "g2", "be2",
               "w1", "b1", "w2", "b2", "g3", "be3", "wout", "bout")

# Matmul operands are fed to the MXU as bf16 (f32 accumulation via
# preferred_element_type); everything on the VPU/EUP path stays f32.
MXU_WEIGHTS = frozenset({"wt1", "wt2", "win", "wqkv", "wo", "w1", "w2", "wout"})


# ----------------------------------------------------------------------------
# noise schedule ('sqrt', as in Diffusion-LM) and timestep embedding (glue)
# ----------------------------------------------------------------------------
def sqrt_noise_schedule(T):
    def alpha_bar(t):
        return 1.0 - np.sqrt(t + 0.0001)
    betas = np.array(
        [min(1.0 - alpha_bar((i + 1) / T) / alpha_bar(i / T), 0.999) for i in range(T)],
        dtype=np.float64,
    )
    alphas_cumprod = np.cumprod(1.0 - betas)
    return (jnp.asarray(np.sqrt(alphas_cumprod), jnp.float32),
            jnp.asarray(np.sqrt(1.0 - alphas_cumprod), jnp.float32))


def timestep_embedding(t, dim, max_period=10000.0):
    half = dim // 2
    freqs = jnp.exp(-jnp.log(jnp.float32(max_period))
                    * jnp.arange(half, dtype=jnp.float32) / half)
    args = t.astype(jnp.float32)[:, None] * freqs[None, :]
    return jnp.concatenate([jnp.cos(args), jnp.sin(args)], axis=-1)


def _layernorm(x, g, b):
    mu = jnp.mean(x, axis=-1, keepdims=True)
    var = jnp.mean((x - mu) ** 2, axis=-1, keepdims=True)
    return (x - mu) * jax.lax.rsqrt(var + 1e-5) * g + b


# ----------------------------------------------------------------------------
# Fused kernel: q_sample + transformer denoiser (predict_xstart=True)
#   grid = (2,)  -> grid step 0 = teacher, grid step 1 = student (parallel axis)
#   activations are (B*L, channels) so every dense matmul runs at M = B*L.
# ----------------------------------------------------------------------------
def make_fused_kernel(B, L, C, H):
    inv_sqrt_h = 1.0 / float(np.sqrt(H))
    f32, bf16 = jnp.float32, jnp.bfloat16

    def kernel(x0_ref, nz_ref, ca_ref, cb_ref, tsin_ref,
               wt1, bt1, wt2, bt2, win, bin_, g1, be1,
               wqkv, bqkv, wo, bo, g2, be2, w1, b1, w2, b2,
               g3, be3, wout, bout, o_ref):
        # ---- q_sample fused in VMEM: x_t = sqrt(abar_t)*x0 + sqrt(1-abar_t)*eps
        #      (per-batch scalar coefficients come from SMEM; ~2K FMAs, so the
        #       recompute per model is free and x_t never touches HBM) ----
        x0 = x0_ref[...]
        nz = nz_ref[...]
        x_t = jnp.concatenate(
            [ca_ref[b] * x0[b * L:(b + 1) * L, :] + cb_ref[b] * nz[b * L:(b + 1) * L, :]
             for b in range(B)], axis=0)                                   # (B*L, C) f32

        # ---- timestep-embedding MLP (SiLU), hoisted to a single M=B matmul ----
        ht = jnp.dot(tsin_ref[...].astype(bf16), wt1[0],
                     preferred_element_type=f32) + bt1[0]
        ht = ht * jax.nn.sigmoid(ht)
        temb = jnp.dot(ht.astype(bf16), wt2[0],
                       preferred_element_type=f32) + bt2[0]                # (B, H)
        temb_rows = jnp.concatenate(
            [jnp.broadcast_to(temb[b:b + 1, :], (L, H)) for b in range(B)], axis=0)

        # ---- input projection + time conditioning, M = B*L rows ----
        h = jnp.dot(x_t.astype(bf16), win[0],
                    preferred_element_type=f32) + bin_[0] + temb_rows

        # ---- self-attention block (per-example softmax over L keys) ----
        # TODO(synk): the real Diffusion-LM denoiser is a multi-layer, multi-head
        # BERT-like transformer with dropout=0.1 in training mode; a single
        # single-head block without dropout is implemented here.
        h1 = _layernorm(h, g1[0], be1[0])
        qkv = jnp.dot(h1.astype(bf16), wqkv[0],
                      preferred_element_type=f32) + bqkv[0]
        q, k, v = qkv[:, :H], qkv[:, H:2 * H], qkv[:, 2 * H:]
        attn_rows = []
        for b in range(B):                       # static unroll over batch (B small)
            sl = slice(b * L, (b + 1) * L)
            qb, kb, vb = q[sl], k[sl], v[sl]
            s = jnp.dot(qb.astype(bf16), kb.T.astype(bf16),
                        preferred_element_type=f32) * inv_sqrt_h
            s = s - jnp.max(s, axis=-1, keepdims=True)
            p = jnp.exp(s)
            p = p * pl.reciprocal(jnp.sum(p, axis=-1, keepdims=True), approx=True)
            attn_rows.append(jnp.dot(p.astype(bf16), vb.astype(bf16),
                                     preferred_element_type=f32))
        attn = jnp.concatenate(attn_rows, axis=0)                          # (B*L, H)
        h = h + jnp.dot(attn.astype(bf16), wo[0],
                        preferred_element_type=f32) + bo[0]

        # ---- MLP block (tanh-GELU) ----
        h2 = _layernorm(h, g2[0], be2[0])
        m = jnp.dot(h2.astype(bf16), w1[0], preferred_element_type=f32) + b1[0]
        m = 0.5 * m * (1.0 + jnp.tanh(0.7978845608028654 * (m + 0.044715 * m * m * m)))
        h = h + jnp.dot(m.astype(bf16), w2[0], preferred_element_type=f32) + b2[0]

        # ---- output projection -> predicted x_start for this model ----
        h3 = _layernorm(h, g3[0], be3[0])
        o_ref[0] = jnp.dot(h3.astype(bf16), wout[0],
                           preferred_element_type=f32) + bout[0]

    return kernel


def fused_train_step(x_start_rows, noise_rows, coef_a, coef_b, t_sin, stacked_params):
    """One pallas_call: both models' denoiser forward on q_sample(x_start)."""
    BL, C = x_start_rows.shape
    B, H = t_sin.shape
    L = BL // B
    weights = [stacked_params[k] for k in PARAM_ORDER]

    def stacked_spec(shape):
        nzeros = len(shape) - 1
        return pl.BlockSpec((1,) + tuple(shape[1:]),
                            lambda m, _n=nzeros: (m,) + (0,) * _n)

    smem_spec = pl.BlockSpec(memory_space=pltpu.MemorySpace.SMEM)
    in_specs = [
        pl.BlockSpec((BL, C), lambda m: (0, 0)),   # x_start rows (shared by both models)
        pl.BlockSpec((BL, C), lambda m: (0, 0)),   # noise rows
        smem_spec,                                 # sqrt(alpha_bar[t])      (B,) scalars
        smem_spec,                                 # sqrt(1 - alpha_bar[t])  (B,) scalars
        pl.BlockSpec((B, H), lambda m: (0, 0)),    # sinusoidal timestep embedding
    ] + [stacked_spec(w.shape) for w in weights]   # per-model weight slice (m, 0, 0)

    return pl.pallas_call(
        make_fused_kernel(B, L, C, H),
        out_shape=jax.ShapeDtypeStruct((2, BL, C), jnp.float32),
        grid_spec=pltpu.PrefetchScalarGridSpec(
            num_scalar_prefetch=0,
            grid=(2,),                             # axis = {teacher, student}
            in_specs=in_specs,
            out_specs=pl.BlockSpec((1, BL, C), lambda m: (m, 0, 0))),
        compiler_params=pltpu.CompilerParams(
            dimension_semantics=("parallel",)),    # one TensorCore per model on v7x
    )(x_start_rows, noise_rows, coef_a, coef_b, t_sin, *weights)


# ----------------------------------------------------------------------------
# parameter init (deterministic; the .pt checkpoint load is replaced by this)
# ----------------------------------------------------------------------------
def init_denoiser_params(key, C, H):
    ks = jax.random.split(key, 8)
    s = 0.02
    f32 = jnp.float32
    return {
        "wt1": jax.random.normal(ks[0], (H, 4 * H), f32) * s, "bt1": jnp.zeros((1, 4 * H), f32),
        "wt2": jax.random.normal(ks[1], (4 * H, H), f32) * s, "bt2": jnp.zeros((1, H), f32),
        "win": jax.random.normal(ks[2], (C, H), f32) * s,     "bin": jnp.zeros((1, H), f32),
        "g1": jnp.ones((1, H), f32), "be1": jnp.zeros((1, H), f32),
        "wqkv": jax.random.normal(ks[3], (H, 3 * H), f32) * s, "bqkv": jnp.zeros((1, 3 * H), f32),
        "wo": jax.random.normal(ks[4], (H, H), f32) * s,       "bo": jnp.zeros((1, H), f32),
        "g2": jnp.ones((1, H), f32), "be2": jnp.zeros((1, H), f32),
        "w1": jax.random.normal(ks[5], (H, 4 * H), f32) * s,   "b1": jnp.zeros((1, 4 * H), f32),
        "w2": jax.random.normal(ks[6], (4 * H, H), f32) * s,   "b2": jnp.zeros((1, H), f32),
        "g3": jnp.ones((1, H), f32), "be3": jnp.zeros((1, H), f32),
        "wout": jax.random.normal(ks[7], (H, C), f32) * s,     "bout": jnp.zeros((1, C), f32),
    }


def stack_params(teacher_params, student_params):
    """Stack teacher/student on a leading model axis; MXU weights -> bf16."""
    out = {}
    for k in PARAM_ORDER:
        w = jnp.stack([teacher_params[k], student_params[k]], axis=0)
        if k in MXU_WEIGHTS:
            w = w.astype(jnp.bfloat16)
        out[k] = w
    return out


# ----------------------------------------------------------------------------
# forward (stage == 'Train'): teacher step, student step, distillation loss
# ----------------------------------------------------------------------------
def run_diffusion_forward(video_data, tokens, stage, embedding,
                          teacher_params, student_params,
                          noise_key, t_key, T, H):
    # TODO(synk): load_models / load_data_text / rev_tokenizer / compute_logp mapping_func
    #             are tokenizer & data plumbing, not kernel compute.
    # TODO(synk): video_data conditioning inside the modified TrainLoop is not reproducible
    #             from this source; it is accepted but unused here.
    del video_data
    B, L = tokens.shape
    C = embedding.shape[-1]

    if stage != "Train":
        # TODO(synk): stage == 'Test' (p_sample_loop / ddim_sample_loop with
        #             denoised_fn_round vocabulary rounding) is an iterative
        #             sampler; not implemented here.
        raise NotImplementedError("only stage='Train' is implemented")

    x_start = embedding[tokens].reshape(B * L, C)          # emb_scale_factor = 1.0
    noise = jax.random.normal(noise_key, (B * L, C), jnp.float32)
    t = jax.random.randint(t_key, (B,), 0, T)              # uniform schedule sampler
    sqrt_ac, sqrt_1mac = sqrt_noise_schedule(T)            # 'sqrt' noise schedule
    coef_a = sqrt_ac[t]                                    # (B,) scalars -> SMEM
    coef_b = sqrt_1mac[t]
    t_sin = timestep_embedding(t, H)                       # (B, H)

    stacked = stack_params(teacher_params, student_params)

    # single fused kernel launch: q_sample + teacher denoiser + student denoiser
    pred = fused_train_step(x_start, noise, coef_a, coef_b, t_sin, stacked)
    teacher_pred, student_pred = pred[0], pred[1]          # (B*L, C) each

    student_data = student_pred.reshape(B, L, C)
    # mean_flat((teacher - student)**2).sum() == sum((T - S)**2) / (L*C)
    target_loss = jnp.sum((teacher_pred - student_pred) ** 2) / jnp.float32(L * C)
    return student_data, target_loss


if __name__ == "__main__":
    B = 2
    IMAGE_SIZE = 8            # args.image_size
    L = IMAGE_SIZE * IMAGE_SIZE
    C = 16                    # args.in_channel / out_channel
    H = 128                   # args.num_channels
    VOCAB = 821               # args.vocab_size
    T = 2000                  # diffusion steps

    key = jax.random.PRNGKey(0)
    k_emb, k_tok, k_noise, k_t, k_teacher, k_student, k_vid = jax.random.split(key, 7)

    embedding = jax.random.normal(k_emb, (VOCAB, C), jnp.float32) * 0.02
    tokens = jax.random.randint(k_tok, (B, L), 0, VOCAB)          # synthetic e2e-tgt tokens
    video_data = jax.random.normal(k_vid, (B, 8, 32), jnp.float32)

    teacher_params = init_denoiser_params(k_teacher, C, H)
    student_params = init_denoiser_params(k_student, C, H)

    fwd = jax.jit(run_diffusion_forward, static_argnums=(2, 8, 9))
    student_data, target_loss = fwd(video_data, tokens, "Train", embedding,
                                    teacher_params, student_params, k_noise, k_t, T, H)

    jax.block_until_ready((student_data, target_loss))
    assert student_data.shape == (B, L, C) and target_loss.shape == ()
    assert bool(jnp.isfinite(target_loss))
    print("KERNEL_OK")
</pallas_src>

<mosaic_0001>
module attributes {stable_mosaic.version = 11 : i64} {
  func.func @kernel(%arg0: i32, %arg1: memref<128x16xf32, #tpu.memory_space<vmem>>, %arg2: memref<128x16xf32, #tpu.memory_space<vmem>>, %arg3: memref<2xf32, #tpu.memory_space<smem>>, %arg4: memref<2xf32, #tpu.memory_space<smem>>, %arg5: memref<2x128xf32, #tpu.memory_space<vmem>>, %arg6: memref<1x128x512xbf16, #tpu.memory_space<vmem>>, %arg7: memref<1x1x512xf32, #tpu.memory_space<vmem>>, %arg8: memref<1x512x128xbf16, #tpu.memory_space<vmem>>, %arg9: memref<1x1x128xf32, #tpu.memory_space<vmem>>, %arg10: memref<1x16x128xbf16, #tpu.memory_space<vmem>>, %arg11: memref<1x1x128xf32, #tpu.memory_space<vmem>>, %arg12: memref<1x1x128xf32, #tpu.memory_space<vmem>>, %arg13: memref<1x1x128xf32, #tpu.memory_space<vmem>>, %arg14: memref<1x128x384xbf16, #tpu.memory_space<vmem>>, %arg15: memref<1x1x384xf32, #tpu.memory_space<vmem>>, %arg16: memref<1x128x128xbf16, #tpu.memory_space<vmem>>, %arg17: memref<1x1x128xf32, #tpu.memory_space<vmem>>, %arg18: memref<1x1x128xf32, #tpu.memory_space<vmem>>, %arg19: memref<1x1x128xf32, #tpu.memory_space<vmem>>, %arg20: memref<1x128x512xbf16, #tpu.memory_space<vmem>>, %arg21: memref<1x1x512xf32, #tpu.memory_space<vmem>>, %arg22: memref<1x512x128xbf16, #tpu.memory_space<vmem>>, %arg23: memref<1x1x128xf32, #tpu.memory_space<vmem>>, %arg24: memref<1x1x128xf32, #tpu.memory_space<vmem>>, %arg25: memref<1x1x128xf32, #tpu.memory_space<vmem>>, %arg26: memref<1x128x16xbf16, #tpu.memory_space<vmem>>, %arg27: memref<1x1x16xf32, #tpu.memory_space<vmem>>, %arg28: memref<1x128x16xf32, #tpu.memory_space<vmem>>) attributes {dimension_semantics = [#tpu.dimension_semantics<parallel>], iteration_bounds = array<i64: 2>, scalar_prefetch = 0 : i64, scratch_operands = 0 : i64, tpu.core_type = #tpu.core_type<tc>, window_params = [{pipeline_mode = #tpu.pipeline_mode<synchronous>, transform_indices = @transform_0, window_bounds = array<i64: 128, 16>}, {pipeline_mode = #tpu.pipeline_mode<synchronous>, transform_indices = @transform_1, window_bounds = array<i64: 128, 16>}, {transform_indices = @transform_2, window_bounds = array<i64: 2>}, {transform_indices = @transform_3, window_bounds = array<i64: 2>}, {pipeline_mode = #tpu.pipeline_mode<synchronous>, transform_indices = @transform_4, window_bounds = array<i64: 2, 128>}, {transform_indices = @transform_5, window_bounds = array<i64: 1, 128, 512>}, {transform_indices = @transform_6, window_bounds = array<i64: 1, 1, 512>}, {transform_indices = @transform_7, window_bounds = array<i64: 1, 512, 128>}, {transform_indices = @transform_8, window_bounds = array<i64: 1, 1, 128>}, {transform_indices = @transform_9, window_bounds = array<i64: 1, 16, 128>}, {transform_indices = @transform_10, window_bounds = array<i64: 1, 1, 128>}, {transform_indices = @transform_11, window_bounds = array<i64: 1, 1, 128>}, {transform_indices = @transform_12, window_bounds = array<i64: 1, 1, 128>}, {transform_indices = @transform_13, window_bounds = array<i64: 1, 128, 384>}, {transform_indices = @transform_14, window_bounds = array<i64: 1, 1, 384>}, {transform_indices = @transform_15, window_bounds = array<i64: 1, 128, 128>}, {transform_indices = @transform_16, window_bounds = array<i64: 1, 1, 128>}, {transform_indices = @transform_17, window_bounds = array<i64: 1, 1, 128>}, {transform_indices = @transform_18, window_bounds = array<i64: 1, 1, 128>}, {transform_indices = @transform_19, window_bounds = array<i64: 1, 128, 512>}, {transform_indices = @transform_20, window_bounds = array<i64: 1, 1, 512>}, {transform_indices = @transform_21, window_bounds = array<i64: 1, 512, 128>}, {transform_indices = @transform_22, window_bounds = array<i64: 1, 1, 128>}, {transform_indices = @transform_23, window_bounds = array<i64: 1, 1, 128>}, {transform_indices = @transform_24, window_bounds = array<i64: 1, 1, 128>}, {transform_indices = @transform_25, window_bounds = array<i64: 1, 128, 16>}, {transform_indices = @transform_26, window_bounds = array<i64: 1, 1, 16>}, {transform_indices = @transform_27, window_bounds = array<i64: 1, 128, 16>}]} {
    %c0 = arith.constant 0 : index
    %c0_0 = arith.constant 0 : index
    %0 = vector.load %arg1[%c0, %c0_0] : memref<128x16xf32, #tpu.memory_space<vmem>>, vector<128x16xf32>
    %c0_1 = arith.constant 0 : index
    %c0_2 = arith.constant 0 : index
    %1 = vector.load %arg2[%c0_1, %c0_2] : memref<128x16xf32, #tpu.memory_space<vmem>>, vector<128x16xf32>
    %c0_3 = arith.constant 0 : index
    %2 = memref.load %arg3[%c0_3] : memref<2xf32, #tpu.memory_space<smem>>
    %3 = vector.extract_strided_slice %0 {offsets = [0, 0], sizes = [64, 16], strides = [1, 1]} : vector<128x16xf32> to vector<64x16xf32>
    %4 = vector.broadcast %2 : f32 to vector<64x16xf32>
    %5 = arith.mulf %4, %3 : vector<64x16xf32>
    %c0_4 = arith.constant 0 : index
    %6 = memref.load %arg4[%c0_4] : memref<2xf32, #tpu.memory_space<smem>>
    %7 = vector.extract_strided_slice %1 {offsets = [0, 0], sizes = [64, 16], strides = [1, 1]} : vector<128x16xf32> to vector<64x16xf32>
    %8 = vector.broadcast %6 : f32 to vector<64x16xf32>
    %9 = arith.mulf %8, %7 : vector<64x16xf32>
    %10 = arith.addf %5, %9 : vector<64x16xf32>
    %c1 = arith.constant 1 : index
    %11 = memref.load %arg3[%c1] : memref<2xf32, #tpu.memory_space<smem>>
    %12 = vector.extract_strided_slice %0 {offsets = [64, 0], sizes = [64, 16], strides = [1, 1]} : vector<128x16xf32> to vector<64x16xf32>
    %13 = vector.broadcast %11 : f32 to vector<64x16xf32>
    %14 = arith.mulf %13, %12 : vector<64x16xf32>
    %c1_5 = arith.constant 1 : index
    %15 = memref.load %arg4[%c1_5] : memref<2xf32, #tpu.memory_space<smem>>
    %16 = vector.extract_strided_slice %1 {offsets = [64, 0], sizes = [64, 16], strides = [1, 1]} : vector<128x16xf32> to vector<64x16xf32>
    %17 = vector.broadcast %15 : f32 to vector<64x16xf32>
    %18 = arith.mulf %17, %16 : vector<64x16xf32>
    %19 = arith.addf %14, %18 : vector<64x16xf32>
    %20 = tpu.concatenate %10, %19 in 0 : vector<64x16xf32>, vector<64x16xf32> -> vector<128x16xf32>
    %c0_6 = arith.constant 0 : index
    %c0_7 = arith.constant 0 : index
    %21 = vector.load %arg5[%c0_6, %c0_7] : memref<2x128xf32, #tpu.memory_space<vmem>>, vector<2x128xf32>
    %22 = arith.truncf %21 : vector<2x128xf32> to vector<2x128xbf16>
    %c0_8 = arith.constant 0 : index
    %c0_9 = arith.constant 0 : index
    %c0_10 = arith.constant 0 : index
    %23 = vector.load %arg6[%c0_8, %c0_9, %c0_10] : memref<1x128x512xbf16, #tpu.memory_space<vmem>>, vector<1x128x512xbf16>
    %24 = vector.shape_cast %23 : vector<1x128x512xbf16> to vector<128x512xbf16>
    %cst = arith.constant dense<0.000000e+00> : vector<2x512xf32>
    %25 = tpu.matmul %22, %24, %cst {dimension_numbers = #tpu.dot_dimension_numbers<[1], [0], [0], [1], [0, 0, 1, 1], [], []>} : vector<2x128xbf16>, vector<128x512xbf16>, vector<2x512xf32> -> vector<2x512xf32>
    %c0_11 = arith.constant 0 : index
    %c0_12 = arith.constant 0 : index
    %c0_13 = arith.constant 0 : index
    %26 = vector.load %arg7[%c0_11, %c0_12, %c0_13] : memref<1x1x512xf32, #tpu.memory_space<vmem>>, vector<1x1x512xf32>
    %27 = vector.shape_cast %26 : vector<1x1x512xf32> to vector<1x512xf32>
    %28 = vector.broadcast %27 : vector<1x512xf32> to vector<2x512xf32>
    %29 = arith.addf %25, %28 : vector<2x512xf32>
    %30 = arith.negf %29 : vector<2x512xf32>
    %31 = math.exp %30 : vector<2x512xf32>
    %cst_14 = arith.constant 1.000000e+00 : f32
    %32 = vector.broadcast %cst_14 : f32 to vector<2x512xf32>
    %33 = arith.addf %32, %31 : vector<2x512xf32>
    %34 = arith.divf %32, %33 : vector<2x512xf32>
    %35 = arith.mulf %29, %34 : vector<2x512xf32>
    %36 = arith.truncf %35 : vector<2x512xf32> to vector<2x512xbf16>
    %c0_15 = arith.constant 0 : index
    %c0_16 = arith.constant 0 : index
    %c0_17 = arith.constant 0 : index
    %37 = vector.load %arg8[%c0_15, %c0_16, %c0_17] : memref<1x512x128xbf16, #tpu.memory_space<vmem>>, vector<1x512x128xbf16>
    %38 = vector.shape_cast %37 : vector<1x512x128xbf16> to vector<512x128xbf16>
    %cst_18 = arith.constant dense<0.000000e+00> : vector<2x128xf32>
    %39 = tpu.matmul %36, %38, %cst_18 {dimension_numbers = #tpu.dot_dimension_numbers<[1], [0], [0], [1], [0, 0, 1, 1], [], []>} : vector<2x512xbf16>, vector<512x128xbf16>, vector<2x128xf32> -> vector<2x128xf32>
    %c0_19 = arith.constant 0 : index
    %c0_20 = arith.constant 0 : index
    %c0_21 = arith.constant 0 : index
    %40 = vector.load %arg9[%c0_19, %c0_20, %c0_21] : memref<1x1x128xf32, #tpu.memory_space<vmem>>, vector<1x1x128xf32>
    %41 = vector.shape_cast %40 : vector<1x1x128xf32> to vector<1x128xf32>
    %42 = vector.broadcast %41 : vector<1x128xf32> to vector<2x128xf32>
    %43 = arith.addf %39, %42 : vector<2x128xf32>
    %44 = vector.extract_strided_slice %43 {offsets = [0, 0], sizes = [1, 128], strides = [1, 1]} : vector<2x128xf32> to vector<1x128xf32>
    %45 = vector.shape_cast %44 : vector<1x128xf32> to vector<1x128xf32>
    %46 = vector.broadcast %45 : vector<1x128xf32> to vector<64x128xf32>
    %47 = vector.extract_strided_slice %43 {offsets = [1, 0], sizes = [1, 128], strides = [1, 1]} : vector<2x128xf32> to vector<1x128xf32>
    %48 = vector.shape_cast %47 : vector<1x128xf32> to vector<1x128xf32>
    %49 = vector.broadcast %48 : vector<1x128xf32> to vector<64x128xf32>
    %50 = tpu.concatenate %46, %49 in 0 : vector<64x128xf32>, vector<64x128xf32> -> vector<128x128xf32>
    %51 = arith.truncf %20 : vector<128x16xf32> to vector<128x16xbf16>
    %c0_22 = arith.constant 0 : index
    %c0_23 = arith.constant 0 : index
    %c0_24 = arith.constant 0 : index
    %52 = vector.load %arg10[%c0_22, %c0_23, %c0_24] : memref<1x16x128xbf16, #tpu.memory_space<vmem>>, vector<1x16x128xbf16>
    %53 = vector.shape_cast %52 : vector<1x16x128xbf16> to vector<16x128xbf16>
    %cst_25 = arith.constant dense<0.000000e+00> : vector<128x128xf32>
    %54 = tpu.matmul %51, %53, %cst_25 {dimension_numbers = #tpu.dot_dimension_numbers<[1], [0], [0], [1], [0, 0, 1, 1], [], []>} : vector<128x16xbf16>, vector<16x128xbf16>, vector<128x128xf32> -> vector<128x128xf32>
    %c0_26 = arith.constant 0 : index
    %c0_27 = arith.constant 0 : index
    %c0_28 = arith.constant 0 : index
    %55 = vector.load %arg11[%c0_26, %c0_27, %c0_28] : memref<1x1x128xf32, #tpu.memory_space<vmem>>, vector<1x1x128xf32>
    %56 = vector.shape_cast %55 : vector<1x1x128xf32> to vector<1x128xf32>
    %57 = vector.broadcast %56 : vector<1x128xf32> to vector<128x128xf32>
    %58 = arith.addf %54, %57 : vector<128x128xf32>
    %59 = arith.addf %58, %50 : vector<128x128xf32>
    %c0_29 = arith.constant 0 : index
    %c0_30 = arith.constant 0 : index
    %c0_31 = arith.constant 0 : index
    %60 = vector.load %arg12[%c0_29, %c0_30, %c0_31] : memref<1x1x128xf32, #tpu.memory_space<vmem>>, vector<1x1x128xf32>
    %61 = vector.shape_cast %60 : vector<1x1x128xf32> to vector<1x128xf32>
    %c0_32 = arith.constant 0 : index
    %c0_33 = arith.constant 0 : index
    %c0_34 = arith.constant 0 : index
    %62 = vector.load %arg13[%c0_32, %c0_33, %c0_34] : memref<1x1x128xf32, #tpu.memory_space<vmem>>, vector<1x1x128xf32>
    %63 = vector.shape_cast %62 : vector<1x1x128xf32> to vector<1x128xf32>
    %cst_35 = arith.constant dense<0.000000e+00> : vector<128xf32>
    %64 = vector.multi_reduction <add>, %59, %cst_35 [1] : vector<128x128xf32> to vector<128xf32>
    %65 = vector.shape_cast %64 : vector<128xf32> to vector<128x1xf32>
    %cst_36 = arith.constant 1.280000e+02 : f32
    %66 = vector.broadcast %cst_36 : f32 to vector<128x1xf32>
    %67 = arith.divf %65, %66 : vector<128x1xf32>
    %68 = vector.broadcast %67 : vector<128x1xf32> to vector<128x128xf32>
    %69 = arith.subf %59, %68 : vector<128x128xf32>
    %70 = arith.mulf %69, %69 : vector<128x128xf32>
    %cst_37 = arith.constant dense<0.000000e+00> : vector<128xf32>
    %71 = vector.multi_reduction <add>, %70, %cst_37 [1] : vector<128x128xf32> to vector<128xf32>
    %72 = vector.shape_cast %71 : vector<128xf32> to vector<128x1xf32>
    %cst_38 = arith.constant 1.280000e+02 : f32
    %73 = vector.broadcast %cst_38 : f32 to vector<128x1xf32>
    %74 = arith.divf %72, %73 : vector<128x1xf32>
    %75 = vector.broadcast %67 : vector<128x1xf32> to vector<128x128xf32>
    %76 = arith.subf %59, %75 : vector<128x128xf32>
    %cst_39 = arith.constant 9.99999974E-6 : f32
    %77 = vector.broadcast %cst_39 : f32 to vector<128x1xf32>
    %78 = arith.addf %74, %77 : vector<128x1xf32>
    %79 = math.rsqrt %78 : vector<128x1xf32>
    %80 = vector.broadcast %79 : vector<128x1xf32> to vector<128x128xf32>
    %81 = arith.mulf %76, %80 : vector<128x128xf32>
    %82 = vector.broadcast %61 : vector<1x128xf32> to vector<128x128xf32>
    %83 = arith.mulf %81, %82 : vector<128x128xf32>
    %84 = vector.broadcast %63 : vector<1x128xf32> to vector<128x128xf32>
    %85 = arith.addf %83, %84 : vector<128x128xf32>
    %86 = arith.truncf %85 : vector<128x128xf32> to vector<128x128xbf16>
    %c0_40 = arith.constant 0 : index
    %c0_41 = arith.constant 0 : index
    %c0_42 = arith.constant 0 : index
    %87 = vector.load %arg14[%c0_40, %c0_41, %c0_42] : memref<1x128x384xbf16, #tpu.memory_space<vmem>>, vector<1x128x384xbf16>
    %88 = vector.shape_cast %87 : vector<1x128x384xbf16> to vector<128x384xbf16>
    %cst_43 = arith.constant dense<0.000000e+00> : vector<128x384xf32>
    %89 = tpu.matmul %86, %88, %cst_43 {dimension_numbers = #tpu.dot_dimension_numbers<[1], [0], [0], [1], [0, 0, 1, 1], [], []>} : vector<128x128xbf16>, vector<128x384xbf16>, vector<128x384xf32> -> vector<128x384xf32>
    %c0_44 = arith.constant 0 : index
    %c0_45 = arith.constant 0 : index
    %c0_46 = arith.constant 0 : index
    %90 = vector.load %arg15[%c0_44, %c0_45, %c0_46] : memref<1x1x384xf32, #tpu.memory_space<vmem>>, vector<1x1x384xf32>
    %91 = vector.shape_cast %90 : vector<1x1x384xf32> to vector<1x384xf32>
    %92 = vector.broadcast %91 : vector<1x384xf32> to vector<128x384xf32>
    %93 = arith.addf %89, %92 : vector<128x384xf32>
    %94 = vector.extract_strided_slice %93 {offsets = [0, 0], sizes = [128, 128], strides = [1, 1]} : vector<128x384xf32> to vector<128x128xf32>
    %95 = vector.extract_strided_slice %93 {offsets = [0, 128], sizes = [128, 128], strides = [1, 1]} : vector<128x384xf32> to vector<128x128xf32>
    %96 = vector.extract_strided_slice %93 {offsets = [0, 256], sizes = [128, 128], strides = [1, 1]} : vector<128x384xf32> to vector<128x128xf32>
    %97 = vector.extract_strided_slice %94 {offsets = [0, 0], sizes = [64, 128], strides = [1, 1]} : vector<128x128xf32> to vector<64x128xf32>
    %98 = vector.extract_strided_slice %95 {offsets = [0, 0], sizes = [64, 128], strides = [1, 1]} : vector<128x128xf32> to vector<64x128xf32>
    %99 = vector.extract_strided_slice %96 {offsets = [0, 0], sizes = [64, 128], strides = [1, 1]} : vector<128x128xf32> to vector<64x128xf32>
    %100 = arith.truncf %97 : vector<64x128xf32> to vector<64x128xbf16>
    %101 = tpu.transpose %98, [1, 0] : vector<64x128xf32> -> vector<128x64xf32>
    %102 = arith.truncf %101 : vector<128x64xf32> to vector<128x64xbf16>
    %cst_47 = arith.constant dense<0.000000e+00> : vector<64x64xf32>
    %103 = tpu.matmul %100, %102, %cst_47 {dimension_numbers = #tpu.dot_dimension_numbers<[1], [0], [0], [1], [0, 0, 1, 1], [], []>} : vector<64x128xbf16>, vector<128x64xbf16>, vector<64x64xf32> -> vector<64x64xf32>
    %cst_48 = arith.constant 0.0883883461 : f32
    %104 = vector.broadcast %cst_48 : f32 to vector<64x64xf32>
    %105 = arith.mulf %103, %104 : vector<64x64xf32>
    %cst_49 = arith.constant dense<0xFF800000> : vector<64xf32>
    %106 = vector.multi_reduction <maximumf>, %105, %cst_49 [1] : vector<64x64xf32> to vector<64xf32>
    %107 = vector.shape_cast %106 : vector<64xf32> to vector<64x1xf32>
    %108 = vector.broadcast %107 : vector<64x1xf32> to vector<64x64xf32>
    %109 = arith.subf %105, %108 : vector<64x64xf32>
    %110 = math.exp %109 : vector<64x64xf32>
    %cst_50 = arith.constant dense<0.000000e+00> : vector<64xf32>
    %111 = vector.multi_reduction <add>, %110, %cst_50 [1] : vector<64x64xf32> to vector<64xf32>
    %112 = vector.shape_cast %111 : vector<64xf32> to vector<64x1xf32>
    %113 = tpu.reciprocal %112 {approx = true} : vector<64x1xf32> -> vector<64x1xf32>
    %114 = vector.broadcast %113 : vector<64x1xf32> to vector<64x64xf32>
    %115 = arith.mulf %110, %114 : vector<64x64xf32>
    %116 = arith.truncf %115 : vector<64x64xf32> to vector<64x64xbf16>
    %117 = arith.truncf %99 : vector<64x128xf32> to vector<64x128xbf16>
    %cst_51 = arith.constant dense<0.000000e+00> : vector<64x128xf32>
    %118 = tpu.matmul %116, %117, %cst_51 {dimension_numbers = #tpu.dot_dimension_numbers<[1], [0], [0], [1], [0, 0, 1, 1], [], []>} : vector<64x64xbf16>, vector<64x128xbf16>, vector<64x128xf32> -> vector<64x128xf32>
    %119 = vector.extract_strided_slice %94 {offsets = [64, 0], sizes = [64, 128], strides = [1, 1]} : vector<128x128xf32> to vector<64x128xf32>
    %120 = vector.extract_strided_slice %95 {offsets = [64, 0], sizes = [64, 128], strides = [1, 1]} : vector<128x128xf32> to vector<64x128xf32>
    %121 = vector.extract_strided_slice %96 {offsets = [64, 0], sizes = [64, 128], strides = [1, 1]} : vector<128x128xf32> to vector<64x128xf32>
    %122 = arith.truncf %119 : vector<64x128xf32> to vector<64x128xbf16>
    %123 = tpu.transpose %120, [1, 0] : vector<64x128xf32> -> vector<128x64xf32>
    %124 = arith.truncf %123 : vector<128x64xf32> to vector<128x64xbf16>
    %cst_52 = arith.constant dense<0.000000e+00> : vector<64x64xf32>
    %125 = tpu.matmul %122, %124, %cst_52 {dimension_numbers = #tpu.dot_dimension_numbers<[1], [0], [0], [1], [0, 0, 1, 1], [], []>} : vector<64x128xbf16>, vector<128x64xbf16>, vector<64x64xf32> -> vector<64x64xf32>
    %cst_53 = arith.constant 0.0883883461 : f32
    %126 = vector.broadcast %cst_53 : f32 to vector<64x64xf32>
    %127 = arith.mulf %125, %126 : vector<64x64xf32>
    %cst_54 = arith.constant dense<0xFF800000> : vector<64xf32>
    %128 = vector.multi_reduction <maximumf>, %127, %cst_54 [1] : vector<64x64xf32> to vector<64xf32>
    %129 = vector.shape_cast %128 : vector<64xf32> to vector<64x1xf32>
    %130 = vector.broadcast %129 : vector<64x1xf32> to vector<64x64xf32>
    %131 = arith.subf %127, %130 : vector<64x64xf32>
    %132 = math.exp %131 : vector<64x64xf32>
    %cst_55 = arith.constant dense<0.000000e+00> : vector<64xf32>
    %133 = vector.multi_reduction <add>, %132, %cst_55 [1] : vector<64x64xf32> to vector<64xf32>
    %134 = vector.shape_cast %133 : vector<64xf32> to vector<64x1xf32>
    %135 = tpu.reciprocal %134 {approx = true} : vector<64x1xf32> -> vector<64x1xf32>
    %136 = vector.broadcast %135 : vector<64x1xf32> to vector<64x64xf32>
    %137 = arith.mulf %132, %136 : vector<64x64xf32>
    %138 = arith.truncf %137 : vector<64x64xf32> to vector<64x64xbf16>
    %139 = arith.truncf %121 : vector<64x128xf32> to vector<64x128xbf16>
    %cst_56 = arith.constant dense<0.000000e+00> : vector<64x128xf32>
    %140 = tpu.matmul %138, %139, %cst_56 {dimension_numbers = #tpu.dot_dimension_numbers<[1], [0], [0], [1], [0, 0, 1, 1], [], []>} : vector<64x64xbf16>, vector<64x128xbf16>, vector<64x128xf32> -> vector<64x128xf32>
    %141 = tpu.concatenate %118, %140 in 0 : vector<64x128xf32>, vector<64x128xf32> -> vector<128x128xf32>
    %142 = arith.truncf %141 : vector<128x128xf32> to vector<128x128xbf16>
    %c0_57 = arith.constant 0 : index
    %c0_58 = arith.constant 0 : index
    %c0_59 = arith.constant 0 : index
    %143 = vector.load %arg16[%c0_57, %c0_58, %c0_59] : memref<1x128x128xbf16, #tpu.memory_space<vmem>>, vector<1x128x128xbf16>
    %144 = vector.shape_cast %143 : vector<1x128x128xbf16> to vector<128x128xbf16>
    %cst_60 = arith.constant dense<0.000000e+00> : vector<128x128xf32>
    %145 = tpu.matmul %142, %144, %cst_60 {dimension_numbers = #tpu.dot_dimension_numbers<[1], [0], [0], [1], [0, 0, 1, 1], [], []>} : vector<128x128xbf16>, vector<128x128xbf16>, vector<128x128xf32> -> vector<128x128xf32>
    %146 = arith.addf %59, %145 : vector<128x128xf32>
    %c0_61 = arith.constant 0 : index
    %c0_62 = arith.constant 0 : index
    %c0_63 = arith.constant 0 : index
    %147 = vector.load %arg17[%c0_61, %c0_62, %c0_63] : memref<1x1x128xf32, #tpu.memory_space<vmem>>, vector<1x1x128xf32>
    %148 = vector.shape_cast %147 : vector<1x1x128xf32> to vector<1x128xf32>
    %149 = vector.broadcast %148 : vector<1x128xf32> to vector<128x128xf32>
    %150 = arith.addf %146, %149 : vector<128x128xf32>
    %c0_64 = arith.constant 0 : index
    %c0_65 = arith.constant 0 : index
    %c0_66 = arith.constant 0 : index
    %151 = vector.load %arg18[%c0_64, %c0_65, %c0_66] : memref<1x1x128xf32, #tpu.memory_space<vmem>>, vector<1x1x128xf32>
    %152 = vector.shape_cast %151 : vector<1x1x128xf32> to vector<1x128xf32>
    %c0_67 = arith.constant 0 : index
    %c0_68 = arith.constant 0 : index
    %c0_69 = arith.constant 0 : index
    %153 = vector.load %arg19[%c0_67, %c0_68, %c0_69] : memref<1x1x128xf32, #tpu.memory_space<vmem>>, vector<1x1x128xf32>
    %154 = vector.shape_cast %153 : vector<1x1x128xf32> to vector<1x128xf32>
    %cst_70 = arith.constant dense<0.000000e+00> : vector<128xf32>
    %155 = vector.multi_reduction <add>, %150, %cst_70 [1] : vector<128x128xf32> to vector<128xf32>
    %156 = vector.shape_cast %155 : vector<128xf32> to vector<128x1xf32>
    %cst_71 = arith.constant 1.280000e+02 : f32
    %157 = vector.broadcast %cst_71 : f32 to vector<128x1xf32>
    %158 = arith.divf %156, %157 : vector<128x1xf32>
    %159 = vector.broadcast %158 : vector<128x1xf32> to vector<128x128xf32>
    %160 = arith.subf %150, %159 : vector<128x128xf32>
    %161 = arith.mulf %160, %160 : vector<128x128xf32>
    %cst_72 = arith.constant dense<0.000000e+00> : vector<128xf32>
    %162 = vector.multi_reduction <add>, %161, %cst_72 [1] : vector<128x128xf32> to vector<128xf32>
    %163 = vector.shape_cast %162 : vector<128xf32> to vector<128x1xf32>
    %cst_73 = arith.constant 1.280000e+02 : f32
    %164 = vector.broadcast %cst_73 : f32 to vector<128x1xf32>
    %165 = arith.divf %163, %164 : vector<128x1xf32>
    %166 = vector.broadcast %158 : vector<128x1xf32> to vector<128x128xf32>
    %167 = arith.subf %150, %166 : vector<128x128xf32>
    %cst_74 = arith.constant 9.99999974E-6 : f32
    %168 = vector.broadcast %cst_74 : f32 to vector<128x1xf32>
    %169 = arith.addf %165, %168 : vector<128x1xf32>
    %170 = math.rsqrt %169 : vector<128x1xf32>
    %171 = vector.broadcast %170 : vector<128x1xf32> to vector<128x128xf32>
    %172 = arith.mulf %167, %171 : vector<128x128xf32>
    %173 = vector.broadcast %152 : vector<1x128xf32> to vector<128x128xf32>
    %174 = arith.mulf %172, %173 : vector<128x128xf32>
    %175 = vector.broadcast %154 : vector<1x128xf32> to vector<128x128xf32>
    %176 = arith.addf %174, %175 : vector<128x128xf32>
    %177 = arith.truncf %176 : vector<128x128xf32> to vector<128x128xbf16>
    %c0_75 = arith.constant 0 : index
    %c0_76 = arith.constant 0 : index
    %c0_77 = arith.constant 0 : index
    %178 = vector.load %arg20[%c0_75, %c0_76, %c0_77] : memref<1x128x512xbf16, #tpu.memory_space<vmem>>, vector<1x128x512xbf16>
    %179 = vector.shape_cast %178 : vector<1x128x512xbf16> to vector<128x512xbf16>
    %cst_78 = arith.constant dense<0.000000e+00> : vector<128x512xf32>
    %180 = tpu.matmul %177, %179, %cst_78 {dimension_numbers = #tpu.dot_dimension_numbers<[1], [0], [0], [1], [0, 0, 1, 1], [], []>} : vector<128x128xbf16>, vector<128x512xbf16>, vector<128x512xf32> -> vector<128x512xf32>
    %c0_79 = arith.constant 0 : index
    %c0_80 = arith.constant 0 : index
    %c0_81 = arith.constant 0 : index
    %181 = vector.load %arg21[%c0_79, %c0_80, %c0_81] : memref<1x1x512xf32, #tpu.memory_space<vmem>>, vector<1x1x512xf32>
    %182 = vector.shape_cast %181 : vector<1x1x512xf32> to vector<1x512xf32>
    %183 = vector.broadcast %182 : vector<1x512xf32> to vector<128x512xf32>
    %184 = arith.addf %180, %183 : vector<128x512xf32>
    %cst_82 = arith.constant 5.000000e-01 : f32
    %185 = vector.broadcast %cst_82 : f32 to vector<128x512xf32>
    %186 = arith.mulf %185, %184 : vector<128x512xf32>
    %cst_83 = arith.constant 4.471500e-02 : f32
    %187 = vector.broadcast %cst_83 : f32 to vector<128x512xf32>
    %188 = arith.mulf %187, %184 : vector<128x512xf32>
    %189 = arith.mulf %188, %184 : vector<128x512xf32>
    %190 = arith.mulf %189, %184 : vector<128x512xf32>
    %191 = arith.addf %184, %190 : vector<128x512xf32>
    %cst_84 = arith.constant 0.797884583 : f32
    %192 = vector.broadcast %cst_84 : f32 to vector<128x512xf32>
    %193 = arith.mulf %192, %191 : vector<128x512xf32>
    %194 = math.tanh %193 : vector<128x512xf32>
    %cst_85 = arith.constant 1.000000e+00 : f32
    %195 = vector.broadcast %cst_85 : f32 to vector<128x512xf32>
    %196 = arith.addf %195, %194 : vector<128x512xf32>
    %197 = arith.mulf %186, %196 : vector<128x512xf32>
    %198 = arith.truncf %197 : vector<128x512xf32> to vector<128x512xbf16>
    %c0_86 = arith.constant 0 : index
    %c0_87 = arith.constant 0 : index
    %c0_88 = arith.constant 0 : index
    %199 = vector.load %arg22[%c0_86, %c0_87, %c0_88] : memref<1x512x128xbf16, #tpu.memory_space<vmem>>, vector<1x512x128xbf16>
    %200 = vector.shape_cast %199 : vector<1x512x128xbf16> to vector<512x128xbf16>
    %cst_89 = arith.constant dense<0.000000e+00> : vector<128x128xf32>
    %201 = tpu.matmul %198, %200, %cst_89 {dimension_numbers = #tpu.dot_dimension_numbers<[1], [0], [0], [1], [0, 0, 1, 1], [], []>} : vector<128x512xbf16>, vector<512x128xbf16>, vector<128x128xf32> -> vector<128x128xf32>
    %202 = arith.addf %150, %201 : vector<128x128xf32>
    %c0_90 = arith.constant 0 : index
    %c0_91 = arith.constant 0 : index
    %c0_92 = arith.constant 0 : index
    %203 = vector.load %arg23[%c0_90, %c0_91, %c0_92] : memref<1x1x128xf32, #tpu.memory_space<vmem>>, vector<1x1x128xf32>
    %204 = vector.shape_cast %203 : vector<1x1x128xf32> to vector<1x128xf32>
    %205 = vector.broadcast %204 : vector<1x128xf32> to vector<128x128xf32>
    %206 = arith.addf %202, %205 : vector<128x128xf32>
    %c0_93 = arith.constant 0 : index
    %c0_94 = arith.constant 0 : index
    %c0_95 = arith.constant 0 : index
    %207 = vector.load %arg24[%c0_93, %c0_94, %c0_95] : memref<1x1x128xf32, #tpu.memory_space<vmem>>, vector<1x1x128xf32>
    %208 = vector.shape_cast %207 : vector<1x1x128xf32> to vector<1x128xf32>
    %c0_96 = arith.constant 0 : index
    %c0_97 = arith.constant 0 : index
    %c0_98 = arith.constant 0 : index
    %209 = vector.load %arg25[%c0_96, %c0_97, %c0_98] : memref<1x1x128xf32, #tpu.memory_space<vmem>>, vector<1x1x128xf32>
    %210 = vector.shape_cast %209 : vector<1x1x128xf32> to vector<1x128xf32>
    %cst_99 = arith.constant dense<0.000000e+00> : vector<128xf32>
    %211 = vector.multi_reduction <add>, %206, %cst_99 [1] : vector<128x128xf32> to vector<128xf32>
    %212 = vector.shape_cast %211 : vector<128xf32> to vector<128x1xf32>
    %cst_100 = arith.constant 1.280000e+02 : f32
    %213 = vector.broadcast %cst_100 : f32 to vector<128x1xf32>
    %214 = arith.divf %212, %213 : vector<128x1xf32>
    %215 = vector.broadcast %214 : vector<128x1xf32> to vector<128x128xf32>
    %216 = arith.subf %206, %215 : vector<128x128xf32>
    %217 = arith.mulf %216, %216 : vector<128x128xf32>
    %cst_101 = arith.constant dense<0.000000e+00> : vector<128xf32>
    %218 = vector.multi_reduction <add>, %217, %cst_101 [1] : vector<128x128xf32> to vector<128xf32>
    %219 = vector.shape_cast %218 : vector<128xf32> to vector<128x1xf32>
    %cst_102 = arith.constant 1.280000e+02 : f32
    %220 = vector.broadcast %cst_102 : f32 to vector<128x1xf32>
    %221 = arith.divf %219, %220 : vector<128x1xf32>
    %222 = vector.broadcast %214 : vector<128x1xf32> to vector<128x128xf32>
    %223 = arith.subf %206, %222 : vector<128x128xf32>
    %cst_103 = arith.constant 9.99999974E-6 : f32
    %224 = vector.broadcast %cst_103 : f32 to vector<128x1xf32>
    %225 = arith.addf %221, %224 : vector<128x1xf32>
    %226 = math.rsqrt %225 : vector<128x1xf32>
    %227 = vector.broadcast %226 : vector<128x1xf32> to vector<128x128xf32>
    %228 = arith.mulf %223, %227 : vector<128x128xf32>
    %229 = vector.broadcast %208 : vector<1x128xf32> to vector<128x128xf32>
    %230 = arith.mulf %228, %229 : vector<128x128xf32>
    %231 = vector.broadcast %210 : vector<1x128xf32> to vector<128x128xf32>
    %232 = arith.addf %230, %231 : vector<128x128xf32>
    %233 = arith.truncf %232 : vector<128x128xf32> to vector<128x128xbf16>
    %c0_104 = arith.constant 0 : index
    %c0_105 = arith.constant 0 : index
    %c0_106 = arith.constant 0 : index
    %234 = vector.load %arg26[%c0_104, %c0_105, %c0_106] : memref<1x128x16xbf16, #tpu.memory_space<vmem>>, vector<1x128x16xbf16>
    %235 = vector.shape_cast %234 : vector<1x128x16xbf16> to vector<128x16xbf16>
    %cst_107 = arith.constant dense<0.000000e+00> : vector<128x16xf32>
    %236 = tpu.matmul %233, %235, %cst_107 {dimension_numbers = #tpu.dot_dimension_numbers<[1], [0], [0], [1], [0, 0, 1, 1], [], []>} : vector<128x128xbf16>, vector<128x16xbf16>, vector<128x16xf32> -> vector<128x16xf32>
    %c0_108 = arith.constant 0 : index
    %c0_109 = arith.constant 0 : index
    %c0_110 = arith.constant 0 : index
    %237 = vector.load %arg27[%c0_108, %c0_109, %c0_110] : memref<1x1x16xf32, #tpu.memory_space<vmem>>, vector<1x1x16xf32>
    %238 = vector.shape_cast %237 : vector<1x1x16xf32> to vector<1x16xf32>
    %239 = vector.broadcast %238 : vector<1x16xf32> to vector<128x16xf32>
    %240 = arith.addf %236, %239 : vector<128x16xf32>
    %c0_111 = arith.constant 0 : index
    %c0_112 = arith.constant 0 : index
    %c0_113 = arith.constant 0 : index
    %241 = vector.load %arg28[%c0_111, %c0_112, %c0_113] : memref<1x128x16xf32, #tpu.memory_space<vmem>>, vector<1x128x16xf32>
    %242 = vector.shape_cast %241 : vector<1x128x16xf32> to vector<128x16xf32>
    %243 = vector.shape_cast %240 : vector<128x16xf32> to vector<1x128x16xf32>
    tpu.vector_store %arg28[%c0_111, %c0_112, %c0_113], %243 {strides = array<i32>} : memref<1x128x16xf32, #tpu.memory_space<vmem>>, vector<1x128x16xf32>,
    return
  }
  func.func @transform_0(%arg0: i32) -> (i32, i32) {
    %c0_i32 = arith.constant 0 : i32
    %c0_i32_0 = arith.constant 0 : i32
    %c0_i32_1 = arith.constant 0 : i32
    return %c0_i32, %c0_i32_0 : i32, i32
  }
  func.func @transform_1(%arg0: i32) -> (i32, i32) {
    %c0_i32 = arith.constant 0 : i32
    %c0_i32_0 = arith.constant 0 : i32
    %c0_i32_1 = arith.constant 0 : i32
    return %c0_i32, %c0_i32_0 : i32, i32
  }
  func.func @transform_2(%arg0: i32) -> i32 {
    %c0_i32 = arith.constant 0 : i32
    %c0_i32_0 = arith.constant 0 : i32
    return %c0_i32 : i32
  }
  func.func @transform_3(%arg0: i32) -> i32 {
    %c0_i32 = arith.constant 0 : i32
    %c0_i32_0 = arith.constant 0 : i32
    return %c0_i32 : i32
  }
  func.func @transform_4(%arg0: i32) -> (i32, i32) {
    %c0_i32 = arith.constant 0 : i32
    %c0_i32_0 = arith.constant 0 : i32
    %c0_i32_1 = arith.constant 0 : i32
    return %c0_i32, %c0_i32_0 : i32, i32
  }
  func.func @transform_5(%arg0: i32) -> (i32, i32, i32) {
    %c0_i32 = arith.constant 0 : i32
    %c0_i32_0 = arith.constant 0 : i32
    %c0_i32_1 = arith.constant 0 : i32
    return %arg0, %c0_i32, %c0_i32_0 : i32, i32, i32
  }
  func.func @transform_6(%arg0: i32) -> (i32, i32, i32) {
    %c0_i32 = arith.constant 0 : i32
    %c0_i32_0 = arith.constant 0 : i32
    %c0_i32_1 = arith.constant 0 : i32
    return %arg0, %c0_i32, %c0_i32_0 : i32, i32, i32
  }
  func.func @transform_7(%arg0: i32) -> (i32, i32, i32) {
    %c0_i32 = arith.constant 0 : i32
    %c0_i32_0 = arith.constant 0 : i32
    %c0_i32_1 = arith.constant 0 : i32
    return %arg0, %c0_i32, %c0_i32_0 : i32, i32, i32
  }
  func.func @transform_8(%arg0: i32) -> (i32, i32, i32) {
    %c0_i32 = arith.constant 0 : i32
    %c0_i32_0 = arith.constant 0 : i32
    %c0_i32_1 = arith.constant 0 : i32
    return %arg0, %c0_i32, %c0_i32_0 : i32, i32, i32
  }
  func.func @transform_9(%arg0: i32) -> (i32, i32, i32) {
    %c0_i32 = arith.constant 0 : i32
    %c0_i32_0 = arith.constant 0 : i32
    %c0_i32_1 = arith.constant 0 : i32
    return %arg0, %c0_i32, %c0_i32_0 : i32, i32, i32
  }
  func.func @transform_10(%arg0: i32) -> (i32, i32, i32) {
    %c0_i32 = arith.constant 0 : i32
    %c0_i32_0 = arith.constant 0 : i32
    %c0_i32_1 = arith.constant 0 : i32
    return %arg0, %c0_i32, %c0_i32_0 : i32, i32, i32
  }
  func.func @transform_11(%arg0: i32) -> (i32, i32, i32) {
    %c0_i32 = arith.constant 0 : i32
    %c0_i32_0 = arith.constant 0 : i32
    %c0_i32_1 = arith.constant 0 : i32
    return %arg0, %c0_i32, %c0_i32_0 : i32, i32, i32
  }
  func.func @transform_12(%arg0: i32) -> (i32, i32, i32) {
    %c0_i32 = arith.constant 0 : i32
    %c0_i32_0 = arith.constant 0 : i32
    %c0_i32_1 = arith.constant 0 : i32
    return %arg0, %c0_i32, %c0_i32_0 : i32, i32, i32
  }
  func.func @transform_13(%arg0: i32) -> (i32, i32, i32) {
    %c0_i32 = arith.constant 0 : i32
    %c0_i32_0 = arith.constant 0 : i32
    %c0_i32_1 = arith.constant 0 : i32
    return %arg0, %c0_i32, %c0_i32_0 : i32, i32, i32
  }
  func.func @transform_14(%arg0: i32) -> (i32, i32, i32) {
    %c0_i32 = arith.constant 0 : i32
    %c0_i32_0 = arith.constant 0 : i32
    %c0_i32_1 = arith.constant 0 : i32
    return %arg0, %c0_i32, %c0_i32_0 : i32, i32, i32
  }
  func.func @transform_15(%arg0: i32) -> (i32, i32, i32) {
    %c0_i32 = arith.constant 0 : i32
    %c0_i32_0 = arith.constant 0 : i32
    %c0_i32_1 = arith.constant 0 : i32
    return %arg0, %c0_i32, %c0_i32_0 : i32, i32, i32
  }
  func.func @transform_16(%arg0: i32) -> (i32, i32, i32) {
    %c0_i32 = arith.constant 0 : i32
    %c0_i32_0 = arith.constant 0 : i32
    %c0_i32_1 = arith.constant 0 : i32
    return %arg0, %c0_i32, %c0_i32_0 : i32, i32, i32
  }
  func.func @transform_17(%arg0: i32) -> (i32, i32, i32) {
    %c0_i32 = arith.constant 0 : i32
    %c0_i32_0 = arith.constant 0 : i32
    %c0_i32_1 = arith.constant 0 : i32
    return %arg0, %c0_i32, %c0_i32_0 : i32, i32, i32
  }
  func.func @transform_18(%arg0: i32) -> (i32, i32, i32) {
    %c0_i32 = arith.constant 0 : i32
    %c0_i32_0 = arith.constant 0 : i32
    %c0_i32_1 = arith.constant 0 : i32
    return %arg0, %c0_i32, %c0_i32_0 : i32, i32, i32
  }
  func.func @transform_19(%arg0: i32) -> (i32, i32, i32) {
    %c0_i32 = arith.constant 0 : i32
    %c0_i32_0 = arith.constant 0 : i32
    %c0_i32_1 = arith.constant 0 : i32
    return %arg0, %c0_i32, %c0_i32_0 : i32, i32, i32
  }
  func.func @transform_20(%arg0: i32) -> (i32, i32, i32) {
    %c0_i32 = arith.constant 0 : i32
    %c0_i32_0 = arith.constant 0 : i32
    %c0_i32_1 = arith.constant 0 : i32
    return %arg0, %c0_i32, %c0_i32_0 : i32, i32, i32
  }
  func.func @transform_21(%arg0: i32) -> (i32, i32, i32) {
    %c0_i32 = arith.constant 0 : i32
    %c0_i32_0 = arith.constant 0 : i32
    %c0_i32_1 = arith.constant 0 : i32
    return %arg0, %c0_i32, %c0_i32_0 : i32, i32, i32
  }
  func.func @transform_22(%arg0: i32) -> (i32, i32, i32) {
    %c0_i32 = arith.constant 0 : i32
    %c0_i32_0 = arith.constant 0 : i32
    %c0_i32_1 = arith.constant 0 : i32
    return %arg0, %c0_i32, %c0_i32_0 : i32, i32, i32
  }
  func.func @transform_23(%arg0: i32) -> (i32, i32, i32) {
    %c0_i32 = arith.constant 0 : i32
    %c0_i32_0 = arith.constant 0 : i32
    %c0_i32_1 = arith.constant 0 : i32
    return %arg0, %c0_i32, %c0_i32_0 : i32, i32, i32
  }
  func.func @transform_24(%arg0: i32) -> (i32, i32, i32) {
    %c0_i32 = arith.constant 0 : i32
    %c0_i32_0 = arith.constant 0 : i32
    %c0_i32_1 = arith.constant 0 : i32
    return %arg0, %c0_i32, %c0_i32_0 : i32, i32, i32
  }
  func.func @transform_25(%arg0: i32) -> (i32, i32, i32) {
    %c0_i32 = arith.constant 0 : i32
    %c0_i32_0 = arith.constant 0 : i32
    %c0_i32_1 = arith.constant 0 : i32
    return %arg0, %c0_i32, %c0_i32_0 : i32, i32, i32
  }
  func.func @transform_26(%arg0: i32) -> (i32, i32, i32) {
    %c0_i32 = arith.constant 0 : i32
    %c0_i32_0 = arith.constant 0 : i32
    %c0_i32_1 = arith.constant 0 : i32
    return %arg0, %c0_i32, %c0_i32_0 : i32, i32, i32
  }
  func.func @transform_27(%arg0: i32) -> (i32, i32, i32) {
    %c0_i32 = arith.constant 0 : i32
    %c0_i32_0 = arith.constant 0 : i32
    %c0_i32_1 = arith.constant 0 : i32
    return %arg0, %c0_i32, %c0_i32_0 : i32, i32, i32
  }
}

</mosaic_0001>

<llo_original>
// kernel: run_diffusion_forward.1
$region0: #{run_diffusion_forward.1}
  #allocation0 [shape = 'u32[]', space=smem, size = 0x4, offset = 0x4, fixed_abs, tag = 'smem constant byte address 0x4 - core index']
  #allocation1 [shape = 'u32[144,128]{1,0:T(1,128)}', space=vmem, size = 0x12000, scoped, tag = 'internal scratch']
  %s0 = inlined_call_operand.vmem [shape: f32[128,16], index: 0, kind: input, shape index: {}]
  %s1 = inlined_call_operand.vmem [shape: f32[128,16], index: 1, kind: input, shape index: {}]
  %s2 = inlined_call_operand.vmem [shape: f32[2], index: 2, kind: input, shape index: {}]
  %s3 = inlined_call_operand.vmem [shape: f32[2], index: 3, kind: input, shape index: {}]
  %s4 = inlined_call_operand.vmem [shape: f32[2,128], index: 4, kind: input, shape index: {}]
  %s5 = inlined_call_operand.vmem [shape: bf16[2,128,512], index: 5, kind: input, shape index: {}]
  %s6 = inlined_call_operand.vmem [shape: f32[2,1,512], index: 6, kind: input, shape index: {}]
  %s7 = inlined_call_operand.vmem [shape: bf16[2,512,128], index: 7, kind: input, shape index: {}]
  %s8 = inlined_call_operand.vmem [shape: f32[2,1,128], index: 8, kind: input, shape index: {}]
  %s9 = inlined_call_operand.vmem [shape: bf16[2,16,128], index: 9, kind: input, shape index: {}]
  %s10 = inlined_call_operand.vmem [shape: f32[2,1,128], index: 10, kind: input, shape index: {}]
  %s11 = inlined_call_operand.vmem [shape: f32[2,1,128], index: 11, kind: input, shape index: {}]
  %s12 = inlined_call_operand.vmem [shape: f32[2,1,128], index: 12, kind: input, shape index: {}]
  %s13 = inlined_call_operand.vmem [shape: bf16[2,128,384], index: 13, kind: input, shape index: {}]
  %s14 = inlined_call_operand.vmem [shape: f32[2,1,384], index: 14, kind: input, shape index: {}]
  %s15 = inlined_call_operand.vmem [shape: bf16[2,128,128], index: 15, kind: input, shape index: {}]
  %s16 = inlined_call_operand.vmem [shape: f32[2,1,128], index: 16, kind: input, shape index: {}]
  %s17 = inlined_call_operand.vmem [shape: f32[2,1,128], index: 17, kind: input, shape index: {}]
  %s18 = inlined_call_operand.vmem [shape: f32[2,1,128], index: 18, kind: input, shape index: {}]
  %s19 = inlined_call_operand.vmem [shape: bf16[2,128,512], index: 19, kind: input, shape index: {}]
  %s20 = inlined_call_operand.vmem [shape: f32[2,1,512], index: 20, kind: input, shape index: {}]
  %s21 = inlined_call_operand.vmem [shape: bf16[2,512,128], index: 21, kind: input, shape index: {}]
  %s22 = inlined_call_operand.vmem [shape: f32[2,1,128], index: 22, kind: input, shape index: {}]
  %s23 = inlined_call_operand.vmem [shape: f32[2,1,128], index: 23, kind: input, shape index: {}]
  %s24 = inlined_call_operand.vmem [shape: f32[2,1,128], index: 24, kind: input, shape index: {}]
  %s25 = inlined_call_operand.vmem [shape: bf16[2,128,16], index: 25, kind: input, shape index: {}]
  %s26 = inlined_call_operand.vmem [shape: f32[2,1,16], index: 26, kind: input, shape index: {}]
  %s27 = inlined_call_operand.vmem [shape: f32[2,128,16], index: 27, kind: output, shape index: {}]
  %s28 = sld [smem:[#allocation0]]
  $region149: #{run_diffusion_forward.1} parent=0
    _
  %s30 = ssub.s32 1, %s28
  %s31 = scalar_select 0, %s30, %s28
  $region1: #{run_diffusion_forward.1} parent=0
    #allocation2 [shape = 'u8[512]{0}', space=smem, size = 0x200, scoped, tag = 'input window, operand 2, single buffered']
    #allocation3 [shape = 's32[2]{0}', space=sflag, size = 0x8, scoped, tag = 'scoped memory for run_diffusion_forward.1']
    #allocation4 [shape = 'u8[512]{0}', space=smem, size = 0x200, scoped, tag = 'input window, operand 3, single buffered']
    #allocation5 [shape = 's32[1]{0}', space=sflag, size = 0x4, scoped, tag = 'scoped memory for run_diffusion_forward.1']
    %32 = vsyncpa [#allocation3], 0
    %33 = vsyncpa [#allocation5], 0
    loop: start=0, step=1, limit=4
    $region2: #{run_diffusion_forward.1} parent=1 // loop_pre_header
      _
    $region3: #{run_diffusion_forward.1} parent=1 // loop_header
      %s35 = sphi 0, %s39
      %p36 = scmp.ge.s32.totalorder %s35, 4
      %s43 = sphi 0, %s43
      %s45 = sphi 0, %s43
      %s46 = sphi 0, %s45
      %s60 = sphi 0, %s46
      %s64 = sphi 0, %s64
      %s66 = sphi 0, %s64
      %s67 = sphi 0, %s66
      %s81 = sphi 0, %s67
      %s85 = sphi 0, %s85
      %s87 = sphi 0, %s85
      %s88 = sphi 0, %s87
      %s102 = sphi 0, %s88
      %s106 = sphi 0, %s106
      %s108 = sphi 0, %s106
      %s109 = sphi 0, %s108
      %s123 = sphi 0, %s109
      %s127 = sphi 0, %s127
      %s129 = sphi 0, %s127
      %s130 = sphi 0, %s129
      %s144 = sphi 0, %s130
      %s150 = sphi 0, %s152
      %s153 = sphi 0, %s150
      %s154 = sphi 0, %s153
      %s170 = sphi 0, %s154
      %s176 = sphi 0, %s178
      %s179 = sphi 0, %s176
      %s180 = sphi 0, %s179
      %s196 = sphi 0, %s180
      %s202 = sphi 0, %s204
      %s205 = sphi 0, %s202
      %s206 = sphi 0, %s205
      %s222 = sphi 0, %s206
      %s228 = sphi 0, %s230
      %s231 = sphi 0, %s228
      %s232 = sphi 0, %s231
      %s248 = sphi 0, %s232
      %s254 = sphi 0, %s256
      %s257 = sphi 0, %s254
      %s258 = sphi 0, %s257
      %s274 = sphi 0, %s258
      %s280 = sphi 0, %s282
      %s283 = sphi 0, %s280
      %s284 = sphi 0, %s283
      %s300 = sphi 0, %s284
      %s306 = sphi 0, %s308
      %s309 = sphi 0, %s306
      %s310 = sphi 0, %s309
      %s326 = sphi 0, %s310
      %s332 = sphi 0, %s334
      %s335 = sphi 0, %s332
      %s336 = sphi 0, %s335
      %s352 = sphi 0, %s336
      %s358 = sphi 0, %s360
      %s361 = sphi 0, %s358
      %s362 = sphi 0, %s361
      %s378 = sphi 0, %s362
      %s384 = sphi 0, %s386
      %s387 = sphi 0, %s384
      %s388 = sphi 0, %s387
      %s404 = sphi 0, %s388
      %s410 = sphi 0, %s412
      %s413 = sphi 0, %s410
      %s414 = sphi 0, %s413
      %s430 = sphi 0, %s414
      %s436 = sphi 0, %s438
      %s439 = sphi 0, %s436
      %s440 = sphi 0, %s439
      %s456 = sphi 0, %s440
      %s462 = sphi 0, %s464
      %s465 = sphi 0, %s462
      %s466 = sphi 0, %s465
      %s482 = sphi 0, %s466
      %s488 = sphi 0, %s490
      %s491 = sphi 0, %s488
      %s492 = sphi 0, %s491
      %s508 = sphi 0, %s492
      %s514 = sphi 0, %s516
      %s517 = sphi 0, %s514
      %s518 = sphi 0, %s517
      %s534 = sphi 0, %s518
      %s540 = sphi 0, %s542
      %s543 = sphi 0, %s540
      %s544 = sphi 0, %s543
      %s560 = sphi 0, %s544
      %s566 = sphi 0, %s568
      %s569 = sphi 0, %s566
      %s570 = sphi 0, %s569
      %s586 = sphi 0, %s570
      %s592 = sphi 0, %s594
      %s595 = sphi 0, %s592
      %s596 = sphi 0, %s595
      %s612 = sphi 0, %s596
      %s618 = sphi 0, %s620
      %s621 = sphi 0, %s618
      %s622 = sphi 0, %s621
      %s638 = sphi 0, %s622
      %s644 = sphi 0, %s646
      %s647 = sphi 0, %s644
      %s648 = sphi 0, %s647
      %s664 = sphi 0, %s648
      %s670 = sphi 0, %s672
      %s673 = sphi 0, %s670
      %s674 = sphi 0, %s673
      %s690 = sphi 0, %s674
      %s696 = sphi 0, %s698
      %s699 = sphi 0, %s696
      %s700 = sphi 0, %s699
      %s716 = sphi 0, %s700
      %s722 = sphi 0, %s724
      %s725 = sphi 0, %s722
      %s726 = sphi 0, %s725
      %s742 = sphi 0, %s726
    $region4: #{run_diffusion_forward.1} parent=1 // loop_header_branch
      %38 = sbr.rel (%p36) target = $region8
    $region5: #{run_diffusion_forward.1} parent=1 // loop_body
      %s40 = ssub.s32 %s35, 1
      %s41 = ssub.s32 %s35, 2
      %s42 = sadd.s32 %s35, 1
      %s44 = sadd.s32 %s43, 1
      %p47 = scmp.eq.s32.totalorder %s35, 1
      %p48 = scmp.ne.s32.totalorder %s43, %s45
      %p49 = scmp.eq.s32.totalorder %s35, 0
      %p50 = por %p48, %p49
      %p51 = scmp.ne.s32.totalorder %s43, %s45
      %p52 = scmp.eq.s32.totalorder %s40, 1
      %p53 = por %p51, %p52
      %p54 = scmp.ne.s32.totalorder %s45, %s46
      %p55 = scmp.eq.s32.totalorder %s40, 0
      %p56 = por %p54, %p55
      %p57 = scmp.ne.s32.totalorder %s45, %s46
      %p58 = scmp.eq.s32.totalorder %s41, 1
      %p59 = por %p57, %p58
      %p61 = scmp.ne.s32.totalorder %s46, %s60
      %p62 = scmp.eq.s32.totalorder %s41, 0
      %p63 = por %p61, %p62
      %s65 = sadd.s32 %s64, 1
      %p68 = scmp.eq.s32.totalorder %s35, 1
      %p69 = scmp.ne.s32.totalorder %s64, %s66
      %p70 = scmp.eq.s32.totalorder %s35, 0
      %p71 = por %p69, %p70
      %p72 = scmp.ne.s32.totalorder %s64, %s66
      %p73 = scmp.eq.s32.totalorder %s40, 1
      %p74 = por %p72, %p73
      %p75 = scmp.ne.s32.totalorder %s66, %s67
      %p76 = scmp.eq.s32.totalorder %s40, 0
      %p77 = por %p75, %p76
      %p78 = scmp.ne.s32.totalorder %s66, %s67
      %p79 = scmp.eq.s32.totalorder %s41, 1
      %p80 = por %p78, %p79
      %p82 = scmp.ne.s32.totalorder %s67, %s81
      %p83 = scmp.eq.s32.totalorder %s41, 0
      %p84 = por %p82, %p83
      %s86 = sadd.s32 %s85, 1
      %p89 = scmp.eq.s32.totalorder %s35, 1
      %p90 = scmp.ne.s32.totalorder %s85, %s87
      %p91 = scmp.eq.s32.totalorder %s35, 0
      %p92 = por %p90, %p91
      %p93 = scmp.ne.s32.totalorder %s85, %s87
      %p94 = scmp.eq.s32.totalorder %s40, 1
      %p95 = por %p93, %p94
      %p96 = scmp.ne.s32.totalorder %s87, %s88
      %p97 = scmp.eq.s32.totalorder %s40, 0
      %p98 = por %p96, %p97
      %p99 = scmp.ne.s32.totalorder %s87, %s88
      %p100 = scmp.eq.s32.totalorder %s41, 1
      %p101 = por %p99, %p100
      %p103 = scmp.ne.s32.totalorder %s88, %s102
      %p104 = scmp.eq.s32.totalorder %s41, 0
      %p105 = por %p103, %p104
      %s107 = sadd.s32 %s106, 1
      %p110 = scmp.eq.s32.totalorder %s35, 1
      %p111 = scmp.ne.s32.totalorder %s106, %s108
      %p112 = scmp.eq.s32.totalorder %s35, 0
      %p113 = por %p111, %p112
      %p114 = scmp.ne.s32.totalorder %s106, %s108
      %p115 = scmp.eq.s32.totalorder %s40, 1
      %p116 = por %p114, %p115
      %p117 = scmp.ne.s32.totalorder %s108, %s109
      %p118 = scmp.eq.s32.totalorder %s40, 0
      %p119 = por %p117, %p118
      %p120 = scmp.ne.s32.totalorder %s108, %s109
      %p121 = scmp.eq.s32.totalorder %s41, 1
      %p122 = por %p120, %p121
      %p124 = scmp.ne.s32.totalorder %s109, %s123
      %p125 = scmp.eq.s32.totalorder %s41, 0
      %p126 = por %p124, %p125
      %s128 = sadd.s32 %s127, 1
      %p131 = scmp.eq.s32.totalorder %s35, 1
      %p132 = scmp.ne.s32.totalorder %s127, %s129
      %p133 = scmp.eq.s32.totalorder %s35, 0
      %p134 = por %p132, %p133
      %p135 = scmp.ne.s32.totalorder %s127, %s129
      %p136 = scmp.eq.s32.totalorder %s40, 1
      %p137 = por %p135, %p136
      %p138 = scmp.ne.s32.totalorder %s129, %s130
      %p139 = scmp.eq.s32.totalorder %s40, 0
      %p140 = por %p138, %p139
      %p141 = scmp.ne.s32.totalorder %s129, %s130
      %p142 = scmp.eq.s32.totalorder %s41, 1
      %p143 = por %p141, %p142
      %p145 = scmp.ne.s32.totalorder %s130, %s144
      %p146 = scmp.eq.s32.totalorder %s41, 0
      %p147 = por %p145, %p146
      %s148 = ssub.s32 %s35, %s42
      %p149 = scmp.eq.s32.totalorder %s148, 0
      %s151 = sadd.s32 %s150, 1
      %s152 = scalar_select %p149, %s150, %s151
      %p155 = pneg %p149
      %p156 = scmp.eq.s32.totalorder %s35, 1
      %p157 = por %p155, %p156
      %p158 = scmp.ne.s32.totalorder %s150, %s153
      %p159 = scmp.eq.s32.totalorder %s35, 0
      %p160 = por %p158, %p159
      %p161 = scmp.ne.s32.totalorder %s150, %s153
      %p162 = scmp.eq.s32.totalorder %s40, 1
      %p163 = por %p161, %p162
      %p164 = scmp.ne.s32.totalorder %s153, %s154
      %p165 = scmp.eq.s32.totalorder %s40, 0
      %p166 = por %p164, %p165
      %p167 = scmp.ne.s32.totalorder %s153, %s154
      %p168 = scmp.eq.s32.totalorder %s41, 1
      %p169 = por %p167, %p168
      %p171 = scmp.ne.s32.totalorder %s154, %s170
      %p172 = scmp.eq.s32.totalorder %s41, 0
      %p173 = por %p171, %p172
      %s174 = ssub.s32 %s35, %s42
      %p175 = scmp.eq.s32.totalorder %s174, 0
      %s177 = sadd.s32 %s176, 1
      %s178 = scalar_select %p175, %s176, %s177
      %p181 = pneg %p175
      %p182 = scmp.eq.s32.totalorder %s35, 1
      %p183 = por %p181, %p182
      %p184 = scmp.ne.s32.totalorder %s176, %s179
      %p185 = scmp.eq.s32.totalorder %s35, 0
      %p186 = por %p184, %p185
      %p187 = scmp.ne.s32.totalorder %s176, %s179
      %p188 = scmp.eq.s32.totalorder %s40, 1
      %p189 = por %p187, %p188
      %p190 = scmp.ne.s32.totalorder %s179, %s180
      %p191 = scmp.eq.s32.totalorder %s40, 0
      %p192 = por %p190, %p191
      %p193 = scmp.ne.s32.totalorder %s179, %s180
      %p194 = scmp.eq.s32.totalorder %s41, 1
      %p195 = por %p193, %p194
      %p197 = scmp.ne.s32.totalorder %s180, %s196
      %p198 = scmp.eq.s32.totalorder %s41, 0
      %p199 = por %p197, %p198
      %s200 = ssub.s32 %s35, %s42
      %p201 = scmp.eq.s32.totalorder %s200, 0
      %s203 = sadd.s32 %s202, 1
      %s204 = scalar_select %p201, %s202, %s203
      %p207 = pneg %p201
      %p208 = scmp.eq.s32.totalorder %s35, 1
      %p209 = por %p207, %p208
      %p210 = scmp.ne.s32.totalorder %s202, %s205
      %p211 = scmp.eq.s32.totalorder %s35, 0
      %p212 = por %p210, %p211
      %p213 = scmp.ne.s32.totalorder %s202, %s205
      %p214 = scmp.eq.s32.totalorder %s40, 1
      %p215 = por %p213, %p214
      %p216 = scmp.ne.s32.totalorder %s205, %s206
      %p217 = scmp.eq.s32.totalorder %s40, 0
      %p218 = por %p216, %p217
      %p219 = scmp.ne.s32.totalorder %s205, %s206
      %p220 = scmp.eq.s32.totalorder %s41, 1
      %p221 = por %p219, %p220
      %p223 = scmp.ne.s32.totalorder %s206, %s222
      %p224 = scmp.eq.s32.totalorder %s41, 0
      %p225 = por %p223, %p224
      %s226 = ssub.s32 %s35, %s42
      %p227 = scmp.eq.s32.totalorder %s226, 0
      %s229 = sadd.s32 %s228, 1
      %s230 = scalar_select %p227, %s228, %s229
      %p233 = pneg %p227
      %p234 = scmp.eq.s32.totalorder %s35, 1
      %p235 = por %p233, %p234
      %p236 = scmp.ne.s32.totalorder %s228, %s231
      %p237 = scmp.eq.s32.totalorder %s35, 0
      %p238 = por %p236, %p237
      %p239 = scmp.ne.s32.totalorder %s228, %s231
      %p240 = scmp.eq.s32.totalorder %s40, 1
      %p241 = por %p239, %p240
      %p242 = scmp.ne.s32.totalorder %s231, %s232
      %p243 = scmp.eq.s32.totalorder %s40, 0
      %p244 = por %p242, %p243
      %p245 = scmp.ne.s32.totalorder %s231, %s232
      %p246 = scmp.eq.s32.totalorder %s41, 1
      %p247 = por %p245, %p246
      %p249 = scmp.ne.s32.totalorder %s232, %s248
      %p250 = scmp.eq.s32.totalorder %s41, 0
      %p251 = por %p249, %p250
      %s252 = ssub.s32 %s35, %s42
      %p253 = scmp.eq.s32.totalorder %s252, 0
      %s255 = sadd.s32 %s254, 1
      %s256 = scalar_select %p253, %s254, %s255
      %p259 = pneg %p253
      %p260 = scmp.eq.s32.totalorder %s35, 1
      %p261 = por %p259, %p260
      %p262 = scmp.ne.s32.totalorder %s254, %s257
      %p263 = scmp.eq.s32.totalorder %s35, 0
      %p264 = por %p262, %p263
      %p265 = scmp.ne.s32.totalorder %s254, %s257
      %p266 = scmp.eq.s32.totalorder %s40, 1
      %p267 = por %p265, %p266
      %p268 = scmp.ne.s32.totalorder %s257, %s258
      %p269 = scmp.eq.s32.totalorder %s40, 0
      %p270 = por %p268, %p269
      %p271 = scmp.ne.s32.totalorder %s257, %s258
      %p272 = scmp.eq.s32.totalorder %s41, 1
      %p273 = por %p271, %p272
      %p275 = scmp.ne.s32.totalorder %s258, %s274
      %p276 = scmp.eq.s32.totalorder %s41, 0
      %p277 = por %p275, %p276
      %s278 = ssub.s32 %s35, %s42
      %p279 = scmp.eq.s32.totalorder %s278, 0
      %s281 = sadd.s32 %s280, 1
      %s282 = scalar_select %p279, %s280, %s281
      %p285 = pneg %p279
      %p286 = scmp.eq.s32.totalorder %s35, 1
      %p287 = por %p285, %p286
      %p288 = scmp.ne.s32.totalorder %s280, %s283
      %p289 = scmp.eq.s32.totalorder %s35, 0
      %p290 = por %p288, %p289
      %p291 = scmp.ne.s32.totalorder %s280, %s283
      %p292 = scmp.eq.s32.totalorder %s40, 1
      %p293 = por %p291, %p292
      %p294 = scmp.ne.s32.totalorder %s283, %s284
      %p295 = scmp.eq.s32.totalorder %s40, 0
      %p296 = por %p294, %p295
      %p297 = scmp.ne.s32.totalorder %s283, %s284
      %p298 = scmp.eq.s32.totalorder %s41, 1
      %p299 = por %p297, %p298
      %p301 = scmp.ne.s32.totalorder %s284, %s300
      %p302 = scmp.eq.s32.totalorder %s41, 0
      %p303 = por %p301, %p302
      %s304 = ssub.s32 %s35, %s42
      %p305 = scmp.eq.s32.totalorder %s304, 0
      %s307 = sadd.s32 %s306, 1
      %s308 = scalar_select %p305, %s306, %s307
      %p311 = pneg %p305
      %p312 = scmp.eq.s32.totalorder %s35, 1
      %p313 = por %p311, %p312
      %p314 = scmp.ne.s32.totalorder %s306, %s309
      %p315 = scmp.eq.s32.totalorder %s35, 0
      %p316 = por %p314, %p315
      %p317 = scmp.ne.s32.totalorder %s306, %s309
      %p318 = scmp.eq.s32.totalorder %s40, 1
      %p319 = por %p317, %p318
      %p320 = scmp.ne.s32.totalorder %s309, %s310
      %p321 = scmp.eq.s32.totalorder %s40, 0
      %p322 = por %p320, %p321
      %p323 = scmp.ne.s32.totalorder %s309, %s310
      %p324 = scmp.eq.s32.totalorder %s41, 1
      %p325 = por %p323, %p324
      %p327 = scmp.ne.s32.totalorder %s310, %s326
      %p328 = scmp.eq.s32.totalorder %s41, 0
      %p329 = por %p327, %p328
      %s330 = ssub.s32 %s35, %s42
      %p331 = scmp.eq.s32.totalorder %s330, 0
      %s333 = sadd.s32 %s332, 1
      %s334 = scalar_select %p331, %s332, %s333
      %p337 = pneg %p331
      %p338 = scmp.eq.s32.totalorder %s35, 1
      %p339 = por %p337, %p338
      %p340 = scmp.ne.s32.totalorder %s332, %s335
      %p341 = scmp.eq.s32.totalorder %s35, 0
      %p342 = por %p340, %p341
      %p343 = scmp.ne.s32.totalorder %s332, %s335
      %p344 = scmp.eq.s32.totalorder %s40, 1
      %p345 = por %p343, %p344
      %p346 = scmp.ne.s32.totalorder %s335, %s336
      %p347 = scmp.eq.s32.totalorder %s40, 0
      %p348 = por %p346, %p347
      %p349 = scmp.ne.s32.totalorder %s335, %s336
      %p350 = scmp.eq.s32.totalorder %s41, 1
      %p351 = por %p349, %p350
      %p353 = scmp.ne.s32.totalorder %s336, %s352
      %p354 = scmp.eq.s32.totalorder %s41, 0
      %p355 = por %p353, %p354
      %s356 = ssub.s32 %s35, %s42
      %p357 = scmp.eq.s32.totalorder %s356, 0
      %s359 = sadd.s32 %s358, 1
      %s360 = scalar_select %p357, %s358, %s359
      %p363 = pneg %p357
      %p364 = scmp.eq.s32.totalorder %s35, 1
      %p365 = por %p363, %p364
      %p366 = scmp.ne.s32.totalorder %s358, %s361
      %p367 = scmp.eq.s32.totalorder %s35, 0
      %p368 = por %p366, %p367
      %p369 = scmp.ne.s32.totalorder %s358, %s361
      %p370 = scmp.eq.s32.totalorder %s40, 1
      %p371 = por %p369, %p370
      %p372 = scmp.ne.s32.totalorder %s361, %s362
      %p373 = scmp.eq.s32.totalorder %s40, 0
      %p374 = por %p372, %p373
      %p375 = scmp.ne.s32.totalorder %s361, %s362
      %p376 = scmp.eq.s32.totalorder %s41, 1
      %p377 = por %p375, %p376
      %p379 = scmp.ne.s32.totalorder %s362, %s378
      %p380 = scmp.eq.s32.totalorder %s41, 0
      %p381 = por %p379, %p380
      %s382 = ssub.s32 %s35, %s42
      %p383 = scmp.eq.s32.totalorder %s382, 0
      %s385 = sadd.s32 %s384, 1
      %s386 = scalar_select %p383, %s384, %s385
      %p389 = pneg %p383
      %p390 = scmp.eq.s32.totalorder %s35, 1
      %p391 = por %p389, %p390
      %p392 = scmp.ne.s32.totalorder %s384, %s387
      %p393 = scmp.eq.s32.totalorder %s35, 0
      %p394 = por %p392, %p393
      %p395 = scmp.ne.s32.totalorder %s384, %s387
      %p396 = scmp.eq.s32.totalorder %s40, 1
      %p397 = por %p395, %p396
      %p398 = scmp.ne.s32.totalorder %s387, %s388
      %p399 = scmp.eq.s32.totalorder %s40, 0
      %p400 = por %p398, %p399
      %p401 = scmp.ne.s32.totalorder %s387, %s388
      %p402 = scmp.eq.s32.totalorder %s41, 1
      %p403 = por %p401, %p402
      %p405 = scmp.ne.s32.totalorder %s388, %s404
      %p406 = scmp.eq.s32.totalorder %s41, 0
      %p407 = por %p405, %p406
      %s408 = ssub.s32 %s35, %s42
      %p409 = scmp.eq.s32.totalorder %s408, 0
      %s411 = sadd.s32 %s410, 1
      %s412 = scalar_select %p409, %s410, %s411
      %p415 = pneg %p409
      %p416 = scmp.eq.s32.totalorder %s35, 1
      %p417 = por %p415, %p416
      %p418 = scmp.ne.s32.totalorder %s410, %s413
      %p419 = scmp.eq.s32.totalorder %s35, 0
      %p420 = por %p418, %p419
      %p421 = scmp.ne.s32.totalorder %s410, %s413
      %p422 = scmp.eq.s32.totalorder %s40, 1
      %p423 = por %p421, %p422
      %p424 = scmp.ne.s32.totalorder %s413, %s414
      %p425 = scmp.eq.s32.totalorder %s40, 0
      %p426 = por %p424, %p425
      %p427 = scmp.ne.s32.totalorder %s413, %s414
      %p428 = scmp.eq.s32.totalorder %s41, 1
      %p429 = por %p427, %p428
      %p431 = scmp.ne.s32.totalorder %s414, %s430
      %p432 = scmp.eq.s32.totalorder %s41, 0
      %p433 = por %p431, %p432
      %s434 = ssub.s32 %s35, %s42
      %p435 = scmp.eq.s32.totalorder %s434, 0
      %s437 = sadd.s32 %s436, 1
      %s438 = scalar_select %p435, %s436, %s437
      %p441 = pneg %p435
      %p442 = scmp.eq.s32.totalorder %s35, 1
      %p443 = por %p441, %p442
      %p444 = scmp.ne.s32.totalorder %s436, %s439
      %p445 = scmp.eq.s32.totalorder %s35, 0
      %p446 = por %p444, %p445
      %p447 = scmp.ne.s32.totalorder %s436, %s439
      %p448 = scmp.eq.s32.totalorder %s40, 1
      %p449 = por %p447, %p448
      %p450 = scmp.ne.s32.totalorder %s439, %s440
      %p451 = scmp.eq.s32.totalorder %s40, 0
      %p452 = por %p450, %p451
      %p453 = scmp.ne.s32.totalorder %s439, %s440
      %p454 = scmp.eq.s32.totalorder %s41, 1
      %p455 = por %p453, %p454
      %p457 = scmp.ne.s32.totalorder %s440, %s456
      %p458 = scmp.eq.s32.totalorder %s41, 0
      %p459 = por %p457, %p458
      %s460 = ssub.s32 %s35, %s42
      %p461 = scmp.eq.s32.totalorder %s460, 0
      %s463 = sadd.s32 %s462, 1
      %s464 = scalar_select %p461, %s462, %s463
      %p467 = pneg %p461
      %p468 = scmp.eq.s32.totalorder %s35, 1
      %p469 = por %p467, %p468
      %p470 = scmp.ne.s32.totalorder %s462, %s465
      %p471 = scmp.eq.s32.totalorder %s35, 0
      %p472 = por %p470, %p471
      %p473 = scmp.ne.s32.totalorder %s462, %s465
      %p474 = scmp.eq.s32.totalorder %s40, 1
      %p475 = por %p473, %p474
      %p476 = scmp.ne.s32.totalorder %s465, %s466
      %p477 = scmp.eq.s32.totalorder %s40, 0
      %p478 = por %p476, %p477
      %p479 = scmp.ne.s32.totalorder %s465, %s466
      %p480 = scmp.eq.s32.totalorder %s41, 1
      %p481 = por %p479, %p480
      %p483 = scmp.ne.s32.totalorder %s466, %s482
      %p484 = scmp.eq.s32.totalorder %s41, 0
      %p485 = por %p483, %p484
      %s486 = ssub.s32 %s35, %s42
      %p487 = scmp.eq.s32.totalorder %s486, 0
      %s489 = sadd.s32 %s488, 1
      %s490 = scalar_select %p487, %s488, %s489
      %p493 = pneg %p487
      %p494 = scmp.eq.s32.totalorder %s35, 1
      %p495 = por %p493, %p494
      %p496 = scmp.ne.s32.totalorder %s488, %s491
      %p497 = scmp.eq.s32.totalorder %s35, 0
      %p498 = por %p496, %p497
      %p499 = scmp.ne.s32.totalorder %s488, %s491
      %p500 = scmp.eq.s32.totalorder %s40, 1
      %p501 = por %p499, %p500
      %p502 = scmp.ne.s32.totalorder %s491, %s492
      %p503 = scmp.eq.s32.totalorder %s40, 0
      %p504 = por %p502, %p503
      %p505 = scmp.ne.s32.totalorder %s491, %s492
      %p506 = scmp.eq.s32.totalorder %s41, 1
      %p507 = por %p505, %p506
      %p509 = scmp.ne.s32.totalorder %s492, %s508
      %p510 = scmp.eq.s32.totalorder %s41, 0
      %p511 = por %p509, %p510
      %s512 = ssub.s32 %s35, %s42
      %p513 = scmp.eq.s32.totalorder %s512, 0
      %s515 = sadd.s32 %s514, 1
      %s516 = scalar_select %p513, %s514, %s515
      %p519 = pneg %p513
      %p520 = scmp.eq.s32.totalorder %s35, 1
      %p521 = por %p519, %p520
      %p522 = scmp.ne.s32.totalorder %s514, %s517
      %p523 = scmp.eq.s32.totalorder %s35, 0
      %p524 = por %p522, %p523
      %p525 = scmp.ne.s32.totalorder %s514, %s517
      %p526 = scmp.eq.s32.totalorder %s40, 1
      %p527 = por %p525, %p526
      %p528 = scmp.ne.s32.totalorder %s517, %s518
      %p529 = scmp.eq.s32.totalorder %s40, 0
      %p530 = por %p528, %p529
      %p531 = scmp.ne.s32.totalorder %s517, %s518
      %p532 = scmp.eq.s32.totalorder %s41, 1
      %p533 = por %p531, %p532
      %p535 = scmp.ne.s32.totalorder %s518, %s534
      %p536 = scmp.eq.s32.totalorder %s41, 0
      %p537 = por %p535, %p536
      %s538 = ssub.s32 %s35, %s42
      %p539 = scmp.eq.s32.totalorder %s538, 0
      %s541 = sadd.s32 %s540, 1
      %s542 = scalar_select %p539, %s540, %s541
      %p545 = pneg %p539
      %p546 = scmp.eq.s32.totalorder %s35, 1
      %p547 = por %p545, %p546
      %p548 = scmp.ne.s32.totalorder %s540, %s543
      %p549 = scmp.eq.s32.totalorder %s35, 0
      %p550 = por %p548, %p549
      %p551 = scmp.ne.s32.totalorder %s540, %s543
      %p552 = scmp.eq.s32.totalorder %s40, 1
      %p553 = por %p551, %p552
      %p554 = scmp.ne.s32.totalorder %s543, %s544
      %p555 = scmp.eq.s32.totalorder %s40, 0
      %p556 = por %p554, %p555
      %p557 = scmp.ne.s32.totalorder %s543, %s544
      %p558 = scmp.eq.s32.totalorder %s41, 1
      %p559 = por %p557, %p558
      %p561 = scmp.ne.s32.totalorder %s544, %s560
      %p562 = scmp.eq.s32.totalorder %s41, 0
      %p563 = por %p561, %p562
      %s564 = ssub.s32 %s35, %s42
      %p565 = scmp.eq.s32.totalorder %s564, 0
      %s567 = sadd.s32 %s566, 1
      %s568 = scalar_select %p565, %s566, %s567
      %p571 = pneg %p565
      %p572 = scmp.eq.s32.totalorder %s35, 1
      %p573 = por %p571, %p572
      %p574 = scmp.ne.s32.totalorder %s566, %s569
      %p575 = scmp.eq.s32.totalorder %s35, 0
      %p576 = por %p574, %p575
      %p577 = scmp.ne.s32.totalorder %s566, %s569
      %p578 = scmp.eq.s32.totalorder %s40, 1
      %p579 = por %p577, %p578
      %p580 = scmp.ne.s32.totalorder %s569, %s570
      %p581 = scmp.eq.s32.totalorder %s40, 0
      %p582 = por %p580, %p581
      %p583 = scmp.ne.s32.totalorder %s569, %s570
      %p584 = scmp.eq.s32.totalorder %s41, 1
      %p585 = por %p583, %p584
      %p587 = scmp.ne.s32.totalorder %s570, %s586
      %p588 = scmp.eq.s32.totalorder %s41, 0
      %p589 = por %p587, %p588
      %s590 = ssub.s32 %s35, %s42
      %p591 = scmp.eq.s32.totalorder %s590, 0
      %s593 = sadd.s32 %s592, 1
      %s594 = scalar_select %p591, %s592, %s593
      %p597 = pneg %p591
      %p598 = scmp.eq.s32.totalorder %s35, 1
      %p599 = por %p597, %p598
      %p600 = scmp.ne.s32.totalorder %s592, %s595
      %p601 = scmp.eq.s32.totalorder %s35, 0
      %p602 = por %p600, %p601
      %p603 = scmp.ne.s32.totalorder %s592, %s595
      %p604 = scmp.eq.s32.totalorder %s40, 1
      %p605 = por %p603, %p604
      %p606 = scmp.ne.s32.totalorder %s595, %s596
      %p607 = scmp.eq.s32.totalorder %s40, 0
      %p608 = por %p606, %p607
      %p609 = scmp.ne.s32.totalorder %s595, %s596
      %p610 = scmp.eq.s32.totalorder %s41, 1
      %p611 = por %p609, %p610
      %p613 = scmp.ne.s32.totalorder %s596, %s612
      %p614 = scmp.eq.s32.totalorder %s41, 0
      %p615 = por %p613, %p614
      %s616 = ssub.s32 %s35, %s42
      %p617 = scmp.eq.s32.totalorder %s616, 0
      %s619 = sadd.s32 %s618, 1
      %s620 = scalar_select %p617, %s618, %s619
      %p623 = pneg %p617
      %p624 = scmp.eq.s32.totalorder %s35, 1
      %p625 = por %p623, %p624
      %p626 = scmp.ne.s32.totalorder %s618, %s621
      %p627 = scmp.eq.s32.totalorder %s35, 0
      %p628 = por %p626, %p627
      %p629 = scmp.ne.s32.totalorder %s618, %s621
      %p630 = scmp.eq.s32.totalorder %s40, 1
      %p631 = por %p629, %p630
      %p632 = scmp.ne.s32.totalorder %s621, %s622
      %p633 = scmp.eq.s32.totalorder %s40, 0
      %p634 = por %p632, %p633
      %p635 = scmp.ne.s32.totalorder %s621, %s622
      %p636 = scmp.eq.s32.totalorder %s41, 1
      %p637 = por %p635, %p636
      %p639 = scmp.ne.s32.totalorder %s622, %s638
      %p640 = scmp.eq.s32.totalorder %s41, 0
      %p641 = por %p639, %p640
      %s642 = ssub.s32 %s35, %s42
      %p643 = scmp.eq.s32.totalorder %s642, 0
      %s645 = sadd.s32 %s644, 1
      %s646 = scalar_select %p643, %s644, %s645
      %p649 = pneg %p643
      %p650 = scmp.eq.s32.totalorder %s35, 1
      %p651 = por %p649, %p650
      %p652 = scmp.ne.s32.totalorder %s644, %s647
      %p653 = scmp.eq.s32.totalorder %s35, 0
      %p654 = por %p652, %p653
      %p655 = scmp.ne.s32.totalorder %s644, %s647
      %p656 = scmp.eq.s32.totalorder %s40, 1
      %p657 = por %p655, %p656
      %p658 = scmp.ne.s32.totalorder %s647, %s648
      %p659 = scmp.eq.s32.totalorder %s40, 0
      %p660 = por %p658, %p659
      %p661 = scmp.ne.s32.totalorder %s647, %s648
      %p662 = scmp.eq.s32.totalorder %s41, 1
      %p663 = por %p661, %p662
      %p665 = scmp.ne.s32.totalorder %s648, %s664
      %p666 = scmp.eq.s32.totalorder %s41, 0
      %p667 = por %p665, %p666
      %s668 = ssub.s32 %s35, %s42
      %p669 = scmp.eq.s32.totalorder %s668, 0
      %s671 = sadd.s32 %s670, 1
      %s672 = scalar_select %p669, %s670, %s671
      %p675 = pneg %p669
      %p676 = scmp.eq.s32.totalorder %s35, 1
      %p677 = por %p675, %p676
      %p678 = scmp.ne.s32.totalorder %s670, %s673
      %p679 = scmp.eq.s32.totalorder %s35, 0
      %p680 = por %p678, %p679
      %p681 = scmp.ne.s32.totalorder %s670, %s673
      %p682 = scmp.eq.s32.totalorder %s40, 1
      %p683 = por %p681, %p682
      %p684 = scmp.ne.s32.totalorder %s673, %s674
      %p685 = scmp.eq.s32.totalorder %s40, 0
      %p686 = por %p684, %p685
      %p687 = scmp.ne.s32.totalorder %s673, %s674
      %p688 = scmp.eq.s32.totalorder %s41, 1
      %p689 = por %p687, %p688
      %p691 = scmp.ne.s32.totalorder %s674, %s690
      %p692 = scmp.eq.s32.totalorder %s41, 0
      %p693 = por %p691, %p692
      %s694 = ssub.s32 %s35, %s42
      %p695 = scmp.eq.s32.totalorder %s694, 0
      %s697 = sadd.s32 %s696, 1
      %s698 = scalar_select %p695, %s696, %s697
      %p701 = pneg %p695
      %p702 = scmp.eq.s32.totalorder %s35, 1
      %p703 = por %p701, %p702
      %p704 = scmp.ne.s32.totalorder %s696, %s699
      %p705 = scmp.eq.s32.totalorder %s35, 0
      %p706 = por %p704, %p705
      %p707 = scmp.ne.s32.totalorder %s696, %s699
      %p708 = scmp.eq.s32.totalorder %s40, 1
      %p709 = por %p707, %p708
      %p710 = scmp.ne.s32.totalorder %s699, %s700
      %p711 = scmp.eq.s32.totalorder %s40, 0
      %p712 = por %p710, %p711
      %p713 = scmp.ne.s32.totalorder %s699, %s700
      %p714 = scmp.eq.s32.totalorder %s41, 1
      %p715 = por %p713, %p714
      %p717 = scmp.ne.s32.totalorder %s700, %s716
      %p718 = scmp.eq.s32.totalorder %s41, 0
      %p719 = por %p717, %p718
      %s720 = ssub.s32 %s35, %s42
      %p721 = scmp.eq.s32.totalorder %s720, 0
      %s723 = sadd.s32 %s722, 1
      %s724 = scalar_select %p721, %s722, %s723
      %p727 = pneg %p721
      %p728 = scmp.eq.s32.totalorder %s35, 1
      %p729 = por %p727, %p728
      %p730 = scmp.ne.s32.totalorder %s722, %s725
      %p731 = scmp.eq.s32.totalorder %s35, 0
      %p732 = por %p730, %p731
      %p733 = scmp.ne.s32.totalorder %s722, %s725
      %p734 = scmp.eq.s32.totalorder %s40, 1
      %p735 = por %p733, %p734
      %p736 = scmp.ne.s32.totalorder %s725, %s726
      %p737 = scmp.eq.s32.totalorder %s40, 0
      %p738 = por %p736, %p737
      %p739 = scmp.ne.s32.totalorder %s725, %s726
      %p740 = scmp.eq.s32.totalorder %s41, 1
      %p741 = por %p739, %p740
      %p743 = scmp.ne.s32.totalorder %s726, %s742
      %p744 = scmp.eq.s32.totalorder %s41, 0
      %p745 = por %p743, %p744
      %p746 = scmp.le.s32.totalorder 1, %s35
      %p747 = scmp.lt.s32.totalorder %s35, 3
      %p748 = pnand %p746, %p747
      %p749 = pneg %p748
      // Predicated region
      $region9: #{run_diffusion_forward.1} parent=5 // pred_check
        _
      $region10: #{run_diffusion_forward.1} parent=5 // pred_check_branch
        %751 = sbr.rel (%p748) target = $region12
      $region11: #{run_diffusion_forward.1} parent=5 // pred_region
        %s752 = ssub.s32 %s35, 1
        // Predicated region
        $region13: #{run_diffusion_forward.1} parent=11 // pred_check
          %p753 = pneg %p56
        $region14: #{run_diffusion_forward.1} parent=11 // pred_check_branch
          %755 = sbr.rel (%p753) target = $region16
        $region15: #{run_diffusion_forward.1} parent=11 // pred_region
          _
        $region16: #{run_diffusion_forward.1} parent=11 // pred_fallthru
          _
        // Predicated region
        $region17: #{run_diffusion_forward.1} parent=11 // pred_check
          %p756 = pneg %p77
        $region18: #{run_diffusion_forward.1} parent=11 // pred_check_branch
          %758 = sbr.rel (%p756) target = $region20
        $region19: #{run_diffusion_forward.1} parent=11 // pred_region
          _
        $region20: #{run_diffusion_forward.1} parent=11 // pred_fallthru
          _
        // Predicated region
        $region21: #{run_diffusion_forward.1} parent=11 // pred_check
          %p759 = pneg %p98
        $region22: #{run_diffusion_forward.1} parent=11 // pred_check_branch
          %761 = sbr.rel (%p759) target = $region24
        $region23: #{run_diffusion_forward.1} parent=11 // pred_region
          %s763 = ssub.s32 16, 16
          %764 = vsyncadd [#allocation3], %s763
          %s766 = sshll.u32 %s2, 4
          %s767 = int_to_ptr.vmem [resolvable:$true] %s766
          %769 = dma.vmem_to_smem %s767, 16, [#allocation2], [#allocation3]
        $region24: #{run_diffusion_forward.1} parent=11 // pred_fallthru
          _
        // Predicated region
        $region25: #{run_diffusion_forward.1} parent=11 // pred_check
          %p770 = pneg %p119
        $region26: #{run_diffusion_forward.1} parent=11 // pred_check_branch
          %772 = sbr.rel (%p770) target = $region28
        $region27: #{run_diffusion_forward.1} parent=11 // pred_region
          %s774 = ssub.s32 16, 16
          %775 = vsyncadd [#allocation5], %s774
          %s777 = sshll.u32 %s3, 4
          %s778 = int_to_ptr.vmem [resolvable:$true] %s777
          %780 = dma.vmem_to_smem %s778, 16, [#allocation4], [#allocation5]
        $region28: #{run_diffusion_forward.1} parent=11 // pred_fallthru
          _
        // Predicated region
        $region29: #{run_diffusion_forward.1} parent=11 // pred_check
          %p781 = pneg %p140
        $region30: #{run_diffusion_forward.1} parent=11 // pred_check_branch
          %783 = sbr.rel (%p781) target = $region32
        $region31: #{run_diffusion_forward.1} parent=11 // pred_region
          _
        $region32: #{run_diffusion_forward.1} parent=11 // pred_fallthru
          _
      $region12: #{run_diffusion_forward.1} parent=5 // pred_fallthru
        _
      %p784 = scmp.lt.s32.totalorder %s35, 2
      // Predicated region
      $region33: #{run_diffusion_forward.1} parent=5 // pred_check
        %p785 = pneg %p784
      $region34: #{run_diffusion_forward.1} parent=5 // pred_check_branch
        %787 = sbr.rel (%p785) target = $region36
      $region35: #{run_diffusion_forward.1} parent=5 // pred_region
        // Predicated region
        $region37: #{run_diffusion_forward.1} parent=35 // pred_check
          %p788 = pneg %p160
        $region38: #{run_diffusion_forward.1} parent=35 // pred_check_branch
          %790 = sbr.rel (%p788) target = $region40
        $region39: #{run_diffusion_forward.1} parent=35 // pred_region
          %p791 = scmp.lt.s32.totalorder %s35, 1
          %s792 = scalar_select %p791, %s35, 1
          %s793 = smul.addr %s792, 64
          %s794 = smul.addr %s793, 4
          %s795 = scalar_lea.vmem %s5, %s794
        $region40: #{run_diffusion_forward.1} parent=35 // pred_fallthru
          _
        // Predicated region
        $region41: #{run_diffusion_forward.1} parent=35 // pred_check
          %p796 = pneg %p186
        $region42: #{run_diffusion_forward.1} parent=35 // pred_check_branch
          %798 = sbr.rel (%p796) target = $region44
        $region43: #{run_diffusion_forward.1} parent=35 // pred_region
          %p799 = scmp.lt.s32.totalorder %s35, 1
          %s800 = scalar_select %p799, %s35, 1
          %s801 = smul.addr %s800, 4
          %s802 = scalar_lea.vmem %s6, %s801
        $region44: #{run_diffusion_forward.1} parent=35 // pred_fallthru
          _
        // Predicated region
        $region45: #{run_diffusion_forward.1} parent=35 // pred_check
          %p803 = pneg %p212
        $region46: #{run_diffusion_forward.1} parent=35 // pred_check_branch
          %805 = sbr.rel (%p803) target = $region48
        $region47: #{run_diffusion_forward.1} parent=35 // pred_region
          %p806 = scmp.lt.s32.totalorder %s35, 1
          %s807 = scalar_select %p806, %s35, 1
          %s808 = smul.addr %s807, 64
          %s809 = smul.addr %s808, 4
          %s810 = scalar_lea.vmem %s7, %s809
        $region48: #{run_diffusion_forward.1} parent=35 // pred_fallthru
          _
        // Predicated region
        $region49: #{run_diffusion_forward.1} parent=35 // pred_check
          %p811 = pneg %p238
        $region50: #{run_diffusion_forward.1} parent=35 // pred_check_branch
          %813 = sbr.rel (%p811) target = $region52
        $region51: #{run_diffusion_forward.1} parent=35 // pred_region
          %p814 = scmp.lt.s32.totalorder %s35, 1
          %s815 = scalar_select %p814, %s35, 1
          %s816 = scalar_lea.vmem %s8, %s815
        $region52: #{run_diffusion_forward.1} parent=35 // pred_fallthru
          _
        // Predicated region
        $region53: #{run_diffusion_forward.1} parent=35 // pred_check
          %p817 = pneg %p264
        $region54: #{run_diffusion_forward.1} parent=35 // pred_check_branch
          %819 = sbr.rel (%p817) target = $region56
        $region55: #{run_diffusion_forward.1} parent=35 // pred_region
          %p820 = scmp.lt.s32.totalorder %s35, 1
          %s821 = scalar_select %p820, %s35, 1
          %s822 = smul.addr %s821, 2
          %s823 = smul.addr %s822, 4
          %s824 = scalar_lea.vmem %s9, %s823
        $region56: #{run_diffusion_forward.1} parent=35 // pred_fallthru
          _
        // Predicated region
        $region57: #{run_diffusion_forward.1} parent=35 // pred_check
          %p825 = pneg %p290
        $region58: #{run_diffusion_forward.1} parent=35 // pred_check_branch
          %827 = sbr.rel (%p825) target = $region60
        $region59: #{run_diffusion_forward.1} parent=35 // pred_region
          %p828 = scmp.lt.s32.totalorder %s35, 1
          %s829 = scalar_select %p828, %s35, 1
          %s830 = scalar_lea.vmem %s10, %s829
        $region60: #{run_diffusion_forward.1} parent=35 // pred_fallthru
          _
        // Predicated region
        $region61: #{run_diffusion_forward.1} parent=35 // pred_check
          %p831 = pneg %p316
        $region62: #{run_diffusion_forward.1} parent=35 // pred_check_branch
          %833 = sbr.rel (%p831) target = $region64
        $region63: #{run_diffusion_forward.1} parent=35 // pred_region
          %p834 = scmp.lt.s32.totalorder %s35, 1
          %s835 = scalar_select %p834, %s35, 1
          %s836 = scalar_lea.vmem %s11, %s835
        $region64: #{run_diffusion_forward.1} parent=35 // pred_fallthru
          _
        // Predicated region
        $region65: #{run_diffusion_forward.1} parent=35 // pred_check
          %p837 = pneg %p342
        $region66: #{run_diffusion_forward.1} parent=35 // pred_check_branch
          %839 = sbr.rel (%p837) target = $region68
        $region67: #{run_diffusion_forward.1} parent=35 // pred_region
          %p840 = scmp.lt.s32.totalorder %s35, 1
          %s841 = scalar_select %p840, %s35, 1
          %s842 = scalar_lea.vmem %s12, %s841
        $region68: #{run_diffusion_forward.1} parent=35 // pred_fallthru
          _
        // Predicated region
        $region69: #{run_diffusion_forward.1} parent=35 // pred_check
          %p843 = pneg %p368
        $region70: #{run_diffusion_forward.1} parent=35 // pred_check_branch
          %845 = sbr.rel (%p843) target = $region72
        $region71: #{run_diffusion_forward.1} parent=35 // pred_region
          %p846 = scmp.lt.s32.totalorder %s35, 1
          %s847 = scalar_select %p846, %s35, 1
          %s848 = smul.addr %s847, 48
          %s849 = smul.addr %s848, 4
          %s850 = scalar_lea.vmem %s13, %s849
        $region72: #{run_diffusion_forward.1} parent=35 // pred_fallthru
          _
        // Predicated region
        $region73: #{run_diffusion_forward.1} parent=35 // pred_check
          %p851 = pneg %p394
        $region74: #{run_diffusion_forward.1} parent=35 // pred_check_branch
          %853 = sbr.rel (%p851) target = $region76
        $region75: #{run_diffusion_forward.1} parent=35 // pred_region
          %p854 = scmp.lt.s32.totalorder %s35, 1
          %s855 = scalar_select %p854, %s35, 1
          %s856 = smul.addr %s855, 3
          %s857 = scalar_lea.vmem %s14, %s856
        $region76: #{run_diffusion_forward.1} parent=35 // pred_fallthru
          _
        // Predicated region
        $region77: #{run_diffusion_forward.1} parent=35 // pred_check
          %p858 = pneg %p420
        $region78: #{run_diffusion_forward.1} parent=35 // pred_check_branch
          %860 = sbr.rel (%p858) target = $region80
        $region79: #{run_diffusion_forward.1} parent=35 // pred_region
          %p861 = scmp.lt.s32.totalorder %s35, 1
          %s862 = scalar_select %p861, %s35, 1
          %s863 = smul.addr %s862, 16
          %s864 = smul.addr %s863, 4
          %s865 = scalar_lea.vmem %s15, %s864
        $region80: #{run_diffusion_forward.1} parent=35 // pred_fallthru
          _
        // Predicated region
        $region81: #{run_diffusion_forward.1} parent=35 // pred_check
          %p866 = pneg %p446
        $region82: #{run_diffusion_forward.1} parent=35 // pred_check_branch
          %868 = sbr.rel (%p866) target = $region84
        $region83: #{run_diffusion_forward.1} parent=35 // pred_region
          %p869 = scmp.lt.s32.totalorder %s35, 1
          %s870 = scalar_select %p869, %s35, 1
          %s871 = scalar_lea.vmem %s16, %s870
        $region84: #{run_diffusion_forward.1} parent=35 // pred_fallthru
          _
        // Predicated region
        $region85: #{run_diffusion_forward.1} parent=35 // pred_check
          %p872 = pneg %p472
        $region86: #{run_diffusion_forward.1} parent=35 // pred_check_branch
          %874 = sbr.rel (%p872) target = $region88
        $region87: #{run_diffusion_forward.1} parent=35 // pred_region
          %p875 = scmp.lt.s32.totalorder %s35, 1
          %s876 = scalar_select %p875, %s35, 1
          %s877 = scalar_lea.vmem %s17, %s876
        $region88: #{run_diffusion_forward.1} parent=35 // pred_fallthru
          _
        // Predicated region
        $region89: #{run_diffusion_forward.1} parent=35 // pred_check
          %p878 = pneg %p498
        $region90: #{run_diffusion_forward.1} parent=35 // pred_check_branch
          %880 = sbr.rel (%p878) target = $region92
        $region91: #{run_diffusion_forward.1} parent=35 // pred_region
          %p881 = scmp.lt.s32.totalorder %s35, 1
          %s882 = scalar_select %p881, %s35, 1
          %s883 = scalar_lea.vmem %s18, %s882
        $region92: #{run_diffusion_forward.1} parent=35 // pred_fallthru
          _
        // Predicated region
        $region93: #{run_diffusion_forward.1} parent=35 // pred_check
          %p884 = pneg %p524
        $region94: #{run_diffusion_forward.1} parent=35 // pred_check_branch
          %886 = sbr.rel (%p884) target = $region96
        $region95: #{run_diffusion_forward.1} parent=35 // pred_region
          %p887 = scmp.lt.s32.totalorder %s35, 1
          %s888 = scalar_select %p887, %s35, 1
          %s889 = smul.addr %s888, 64
          %s890 = smul.addr %s889, 4
          %s891 = scalar_lea.vmem %s19, %s890
        $region96: #{run_diffusion_forward.1} parent=35 // pred_fallthru
          _
        // Predicated region
        $region97: #{run_diffusion_forward.1} parent=35 // pred_check
          %p892 = pneg %p550
        $region98: #{run_diffusion_forward.1} parent=35 // pred_check_branch
          %894 = sbr.rel (%p892) target = $region100
        $region99: #{run_diffusion_forward.1} parent=35 // pred_region
          %p895 = scmp.lt.s32.totalorder %s35, 1
          %s896 = scalar_select %p895, %s35, 1
          %s897 = smul.addr %s896, 4
          %s898 = scalar_lea.vmem %s20, %s897
        $region100: #{run_diffusion_forward.1} parent=35 // pred_fallthru
          _
        // Predicated region
        $region101: #{run_diffusion_forward.1} parent=35 // pred_check
          %p899 = pneg %p576
        $region102: #{run_diffusion_forward.1} parent=35 // pred_check_branch
          %901 = sbr.rel (%p899) target = $region104
        $region103: #{run_diffusion_forward.1} parent=35 // pred_region
          %p902 = scmp.lt.s32.totalorder %s35, 1
          %s903 = scalar_select %p902, %s35, 1
          %s904 = smul.addr %s903, 64
          %s905 = smul.addr %s904, 4
          %s906 = scalar_lea.vmem %s21, %s905
        $region104: #{run_diffusion_forward.1} parent=35 // pred_fallthru
          _
        // Predicated region
        $region105: #{run_diffusion_forward.1} parent=35 // pred_check
          %p907 = pneg %p602
        $region106: #{run_diffusion_forward.1} parent=35 // pred_check_branch
          %909 = sbr.rel (%p907) target = $region108
        $region107: #{run_diffusion_forward.1} parent=35 // pred_region
          %p910 = scmp.lt.s32.totalorder %s35, 1
          %s911 = scalar_select %p910, %s35, 1
          %s912 = scalar_lea.vmem %s22, %s911
        $region108: #{run_diffusion_forward.1} parent=35 // pred_fallthru
          _
        // Predicated region
        $region109: #{run_diffusion_forward.1} parent=35 // pred_check
          %p913 = pneg %p628
        $region110: #{run_diffusion_forward.1} parent=35 // pred_check_branch
          %915 = sbr.rel (%p913) target = $region112
        $region111: #{run_diffusion_forward.1} parent=35 // pred_region
          %p916 = scmp.lt.s32.totalorder %s35, 1
          %s917 = scalar_select %p916, %s35, 1
          %s918 = scalar_lea.vmem %s23, %s917
        $region112: #{run_diffusion_forward.1} parent=35 // pred_fallthru
          _
        // Predicated region
        $region113: #{run_diffusion_forward.1} parent=35 // pred_check
          %p919 = pneg %p654
        $region114: #{run_diffusion_forward.1} parent=35 // pred_check_branch
          %921 = sbr.rel (%p919) target = $region116
        $region115: #{run_diffusion_forward.1} parent=35 // pred_region
          %p922 = scmp.lt.s32.totalorder %s35, 1
          %s923 = scalar_select %p922, %s35, 1
          %s924 = scalar_lea.vmem %s24, %s923
        $region116: #{run_diffusion_forward.1} parent=35 // pred_fallthru
          _
        // Predicated region
        $region117: #{run_diffusion_forward.1} parent=35 // pred_check
          %p925 = pneg %p680
        $region118: #{run_diffusion_forward.1} parent=35 // pred_check_branch
          %927 = sbr.rel (%p925) target = $region120
        $region119: #{run_diffusion_forward.1} parent=35 // pred_region
          %p928 = scmp.lt.s32.totalorder %s35, 1
          %s929 = scalar_select %p928, %s35, 1
          %s930 = smul.addr %s929, 16
          %s931 = smul.addr %s930, 4
          %s932 = scalar_lea.vmem %s25, %s931
        $region120: #{run_diffusion_forward.1} parent=35 // pred_fallthru
          _
        // Predicated region
        $region121: #{run_diffusion_forward.1} parent=35 // pred_check
          %p933 = pneg %p706
        $region122: #{run_diffusion_forward.1} parent=35 // pred_check_branch
          %935 = sbr.rel (%p933) target = $region124
        $region123: #{run_diffusion_forward.1} parent=35 // pred_region
          %p936 = scmp.lt.s32.totalorder %s35, 1
          %s937 = scalar_select %p936, %s35, 1
          %s938 = scalar_lea.vmem %s26, %s937
        $region124: #{run_diffusion_forward.1} parent=35 // pred_fallthru
          _
      $region36: #{run_diffusion_forward.1} parent=5 // pred_fallthru
        _
      %p939 = scmp.le.s32.totalorder 1, %s35
      %p940 = scmp.lt.s32.totalorder %s35, 3
      %p941 = pnand %p939, %p940
      %p942 = pneg %p941
      // Predicated region
      $region125: #{run_diffusion_forward.1} parent=5 // pred_check
        _
      $region126: #{run_diffusion_forward.1} parent=5 // pred_check_branch
        %944 = sbr.rel (%p941) target = $region128
      $region127: #{run_diffusion_forward.1} parent=5 // pred_region
        %s945 = ssub.s32 %s35, 1
        // Predicated region
        $region129: #{run_diffusion_forward.1} parent=127 // pred_check
          %p946 = pneg %p98
        $region130: #{run_diffusion_forward.1} parent=127 // pred_check_branch
          %948 = sbr.rel (%p946) target = $region132
        $region131: #{run_diffusion_forward.1} parent=127 // pred_region
          %949 = dma.done [#allocation3], 16
        $region132: #{run_diffusion_forward.1} parent=127 // pred_fallthru
          _
        // Predicated region
        $region133: #{run_diffusion_forward.1} parent=127 // pred_check
          %p950 = pneg %p119
        $region134: #{run_diffusion_forward.1} parent=127 // pred_check_branch
          %952 = sbr.rel (%p950) target = $region136
        $region135: #{run_diffusion_forward.1} parent=127 // pred_region
          %953 = dma.done [#allocation5], 16
        $region136: #{run_diffusion_forward.1} parent=127 // pred_fallthru
          _
        %954 = sfence
        %p955 = pneg %p56
        %p956 = pneg %p53
        %p957 = pneg %p77
        %p958 = pneg %p74
        %p959 = pneg %p98
        %p960 = pneg %p95
        %p961 = pneg %p119
        %p962 = pneg %p116
        %p963 = pneg %p140
        %p964 = pneg %p137
        %p965 = scmp.lt.s32.totalorder %s40, 1
        %s966 = scalar_select %p965, %s40, 1
        %s967 = smul.addr %s966, 64
        %s968 = smul.addr %s967, 4
        %s969 = scalar_lea.vmem %s5, %s968
        %p970 = pneg %p166
        %p971 = pneg %p163
        %p972 = scmp.lt.s32.totalorder %s40, 1
        %s973 = scalar_select %p972, %s40, 1
        %s974 = smul.addr %s973, 4
        %s975 = scalar_lea.vmem %s6, %s974
        %p976 = pneg %p192
        %p977 = pneg %p189
        %p978 = scmp.lt.s32.totalorder %s40, 1
        %s979 = scalar_select %p978, %s40, 1
        %s980 = smul.addr %s979, 64
        %s981 = smul.addr %s980, 4
        %s982 = scalar_lea.vmem %s7, %s981
        %p983 = pneg %p218
        %p984 = pneg %p215
        %p985 = scmp.lt.s32.totalorder %s40, 1
        %s986 = scalar_select %p985, %s40, 1
        %s987 = scalar_lea.vmem %s8, %s986
        %p988 = pneg %p244
        %p989 = pneg %p241
        %p990 = scmp.lt.s32.totalorder %s40, 1
        %s991 = scalar_select %p990, %s40, 1
        %s992 = smul.addr %s991, 2
        %s993 = smul.addr %s992, 4
        %s994 = scalar_lea.vmem %s9, %s993
        %p995 = pneg %p270
        %p996 = pneg %p267
        %p997 = scmp.lt.s32.totalorder %s40, 1
        %s998 = scalar_select %p997, %s40, 1
        %s999 = scalar_lea.vmem %s10, %s998
        %p1000 = pneg %p296
        %p1001 = pneg %p293
        %p1002 = scmp.lt.s32.totalorder %s40, 1
        %s1003 = scalar_select %p1002, %s40, 1
        %s1004 = scalar_lea.vmem %s11, %s1003
        %p1005 = pneg %p322
        %p1006 = pneg %p319
        %p1007 = scmp.lt.s32.totalorder %s40, 1
        %s1008 = scalar_select %p1007, %s40, 1
        %s1009 = scalar_lea.vmem %s12, %s1008
        %p1010 = pneg %p348
        %p1011 = pneg %p345
        %p1012 = scmp.lt.s32.totalorder %s40, 1
        %s1013 = scalar_select %p1012, %s40, 1
        %s1014 = smul.addr %s1013, 48
        %s1015 = smul.addr %s1014, 4
        %s1016 = scalar_lea.vmem %s13, %s1015
        %p1017 = pneg %p374
        %p1018 = pneg %p371
        %p1019 = scmp.lt.s32.totalorder %s40, 1
        %s1020 = scalar_select %p1019, %s40, 1
        %s1021 = smul.addr %s1020, 3
        %s1022 = scalar_lea.vmem %s14, %s1021
        %p1023 = pneg %p400
        %p1024 = pneg %p397
        %p1025 = scmp.lt.s32.totalorder %s40, 1
        %s1026 = scalar_select %p1025, %s40, 1
        %s1027 = smul.addr %s1026, 16
        %s1028 = smul.addr %s1027, 4
        %s1029 = scalar_lea.vmem %s15, %s1028
        %p1030 = pneg %p426
        %p1031 = pneg %p423
        %p1032 = scmp.lt.s32.totalorder %s40, 1
        %s1033 = scalar_select %p1032, %s40, 1
        %s1034 = scalar_lea.vmem %s16, %s1033
        %p1035 = pneg %p452
        %p1036 = pneg %p449
        %p1037 = scmp.lt.s32.totalorder %s40, 1
        %s1038 = scalar_select %p1037, %s40, 1
        %s1039 = scalar_lea.vmem %s17, %s1038
        %p1040 = pneg %p478
        %p1041 = pneg %p475
        %p1042 = scmp.lt.s32.totalorder %s40, 1
        %s1043 = scalar_select %p1042, %s40, 1
        %s1044 = scalar_lea.vmem %s18, %s1043
        %p1045 = pneg %p504
        %p1046 = pneg %p501
        %p1047 = scmp.lt.s32.totalorder %s40, 1
        %s1048 = scalar_select %p1047, %s40, 1
        %s1049 = smul.addr %s1048, 64
        %s1050 = smul.addr %s1049, 4
        %s1051 = scalar_lea.vmem %s19, %s1050
        %p1052 = pneg %p530
        %p1053 = pneg %p527
        %p1054 = scmp.lt.s32.totalorder %s40, 1
        %s1055 = scalar_select %p1054, %s40, 1
        %s1056 = smul.addr %s1055, 4
        %s1057 = scalar_lea.vmem %s20, %s1056
        %p1058 = pneg %p556
        %p1059 = pneg %p553
        %p1060 = scmp.lt.s32.totalorder %s40, 1
        %s1061 = scalar_select %p1060, %s40, 1
        %s1062 = smul.addr %s1061, 64
        %s1063 = smul.addr %s1062, 4
        %s1064 = scalar_lea.vmem %s21, %s1063
        %p1065 = pneg %p582
        %p1066 = pneg %p579
        %p1067 = scmp.lt.s32.totalorder %s40, 1
        %s1068 = scalar_select %p1067, %s40, 1
        %s1069 = scalar_lea.vmem %s22, %s1068
        %p1070 = pneg %p608
        %p1071 = pneg %p605
        %p1072 = scmp.lt.s32.totalorder %s40, 1
        %s1073 = scalar_select %p1072, %s40, 1
        %s1074 = scalar_lea.vmem %s23, %s1073
        %p1075 = pneg %p634
        %p1076 = pneg %p631
        %p1077 = scmp.lt.s32.totalorder %s40, 1
        %s1078 = scalar_select %p1077, %s40, 1
        %s1079 = scalar_lea.vmem %s24, %s1078
        %p1080 = pneg %p660
        %p1081 = pneg %p657
        %p1082 = scmp.lt.s32.totalorder %s40, 1
        %s1083 = scalar_select %p1082, %s40, 1
        %s1084 = smul.addr %s1083, 16
        %s1085 = smul.addr %s1084, 4
        %s1086 = scalar_lea.vmem %s25, %s1085
        %p1087 = pneg %p686
        %p1088 = pneg %p683
        %p1089 = scmp.lt.s32.totalorder %s40, 1
        %s1090 = scalar_select %p1089, %s40, 1
        %s1091 = scalar_lea.vmem %s26, %s1090
        %p1092 = pneg %p712
        %p1093 = pneg %p709
        %p1094 = pneg %p738
        %p1095 = pneg %p735
        %p1096 = scmp.lt.s32.totalorder %s40, 1
        %s1097 = scalar_select %p1096, %s40, 1
        %s1098 = smul.addr %s1097, 16
        %s1099 = smul.addr %s1098, 8
        %s1100 = scalar_lea.vmem %s27, %s1099
        %p1101 = scmp.lt.s32.totalorder %s40, 1
        %s1102 = scalar_select %p1101, %s40, 1
        %s1103 = smul.addr %s1102, 64
        %s1104 = smul.addr %s1103, 4
        %s1105 = scalar_lea.vmem %s5, %s1104
        %p1106 = scmp.lt.s32.totalorder %s40, 1
        %s1107 = scalar_select %p1106, %s40, 1
        %s1108 = smul.addr %s1107, 4
        %s1109 = scalar_lea.vmem %s6, %s1108
        %p1110 = scmp.lt.s32.totalorder %s40, 1
        %s1111 = scalar_select %p1110, %s40, 1
        %s1112 = smul.addr %s1111, 64
        %s1113 = smul.addr %s1112, 4
        %s1114 = scalar_lea.vmem %s7, %s1113
        %p1115 = scmp.lt.s32.totalorder %s40, 1
        %s1116 = scalar_select %p1115, %s40, 1
        %s1117 = scalar_lea.vmem %s8, %s1116
        %p1118 = scmp.lt.s32.totalorder %s40, 1
        %s1119 = scalar_select %p1118, %s40, 1
        %s1120 = smul.addr %s1119, 2
        %s1121 = smul.addr %s1120, 4
        %s1122 = scalar_lea.vmem %s9, %s1121
        %p1123 = scmp.lt.s32.totalorder %s40, 1
        %s1124 = scalar_select %p1123, %s40, 1
        %s1125 = scalar_lea.vmem %s10, %s1124
        %p1126 = scmp.lt.s32.totalorder %s40, 1
        %s1127 = scalar_select %p1126, %s40, 1
        %s1128 = scalar_lea.vmem %s11, %s1127
        %p1129 = scmp.lt.s32.totalorder %s40, 1
        %s1130 = scalar_select %p1129, %s40, 1
        %s1131 = scalar_lea.vmem %s12, %s1130
        %p1132 = scmp.lt.s32.totalorder %s40, 1
        %s1133 = scalar_select %p1132, %s40, 1
        %s1134 = smul.addr %s1133, 48
        %s1135 = smul.addr %s1134, 4
        %s1136 = scalar_lea.vmem %s13, %s1135
        %p1137 = scmp.lt.s32.totalorder %s40, 1
        %s1138 = scalar_select %p1137, %s40, 1
        %s1139 = smul.addr %s1138, 3
        %s1140 = scalar_lea.vmem %s14, %s1139
        %p1141 = scmp.lt.s32.totalorder %s40, 1
        %s1142 = scalar_select %p1141, %s40, 1
        %s1143 = smul.addr %s1142, 16
        %s1144 = smul.addr %s1143, 4
        %s1145 = scalar_lea.vmem %s15, %s1144
        %p1146 = scmp.lt.s32.totalorder %s40, 1
        %s1147 = scalar_select %p1146, %s40, 1
        %s1148 = scalar_lea.vmem %s16, %s1147
        %p1149 = scmp.lt.s32.totalorder %s40, 1
        %s1150 = scalar_select %p1149, %s40, 1
        %s1151 = scalar_lea.vmem %s17, %s1150
        %p1152 = scmp.lt.s32.totalorder %s40, 1
        %s1153 = scalar_select %p1152, %s40, 1
        %s1154 = scalar_lea.vmem %s18, %s1153
        %p1155 = scmp.lt.s32.totalorder %s40, 1
        %s1156 = scalar_select %p1155, %s40, 1
        %s1157 = smul.addr %s1156, 64
        %s1158 = smul.addr %s1157, 4
        %s1159 = scalar_lea.vmem %s19, %s1158
        %p1160 = scmp.lt.s32.totalorder %s40, 1
        %s1161 = scalar_select %p1160, %s40, 1
        %s1162 = smul.addr %s1161, 4
        %s1163 = scalar_lea.vmem %s20, %s1162
        %p1164 = scmp.lt.s32.totalorder %s40, 1
        %s1165 = scalar_select %p1164, %s40, 1
        %s1166 = smul.addr %s1165, 64
        %s1167 = smul.addr %s1166, 4
        %s1168 = scalar_lea.vmem %s21, %s1167
        %p1169 = scmp.lt.s32.totalorder %s40, 1
        %s1170 = scalar_select %p1169, %s40, 1
        %s1171 = scalar_lea.vmem %s22, %s1170
        %p1172 = scmp.lt.s32.totalorder %s40, 1
        %s1173 = scalar_select %p1172, %s40, 1
        %s1174 = scalar_lea.vmem %s23, %s1173
        %p1175 = scmp.lt.s32.totalorder %s40, 1
        %s1176 = scalar_select %p1175, %s40, 1
        %s1177 = scalar_lea.vmem %s24, %s1176
        %p1178 = scmp.lt.s32.totalorder %s40, 1
        %s1179 = scalar_select %p1178, %s40, 1
        %s1180 = smul.addr %s1179, 16
        %s1181 = smul.addr %s1180, 4
        %s1182 = scalar_lea.vmem %s25, %s1181
        %p1183 = scmp.lt.s32.totalorder %s40, 1
        %s1184 = scalar_select %p1183, %s40, 1
        %s1185 = scalar_lea.vmem %s26, %s1184
        %p1186 = scmp.lt.s32.totalorder %s40, 1
        %s1187 = scalar_select %p1186, %s40, 1
        %s1188 = smul.addr %s1187, 16
        %s1189 = smul.addr %s1188, 8
        %s1190 = scalar_lea.vmem %s27, %s1189
        %v1192 = vld [vmem:[%s0] sm:$0xff]
        %v1193 = vld [vmem:[%s0 + $0x8] sm:$0xff]
        %v1194 = vld [vmem:[%s0 + $0x10] sm:$0xff]
        %v1195 = vld [vmem:[%s0 + $0x18] sm:$0xff]
        %v1196 = vld [vmem:[%s0 + $0x20] sm:$0xff]
        %v1197 = vld [vmem:[%s0 + $0x28] sm:$0xff]
        %v1198 = vld [vmem:[%s0 + $0x30] sm:$0xff]
        %v1199 = vld [vmem:[%s0 + $0x38] sm:$0xff]
        %v1200 = vld [vmem:[%s0 + $0x40] sm:$0xff]
        %v1201 = vld [vmem:[%s0 + $0x48] sm:$0xff]
        %v1202 = vld [vmem:[%s0 + $0x50] sm:$0xff]
        %v1203 = vld [vmem:[%s0 + $0x58] sm:$0xff]
        %v1204 = vld [vmem:[%s0 + $0x60] sm:$0xff]
        %v1205 = vld [vmem:[%s0 + $0x68] sm:$0xff]
        %v1206 = vld [vmem:[%s0 + $0x70] sm:$0xff]
        %v1207 = vld [vmem:[%s0 + $0x78] sm:$0xff]
        %v1208 = vld [vmem:[%s1] sm:$0xff]
        %v1209 = vld [vmem:[%s1 + $0x8] sm:$0xff]
        %v1210 = vld [vmem:[%s1 + $0x10] sm:$0xff]
        %v1211 = vld [vmem:[%s1 + $0x18] sm:$0xff]
        %v1212 = vld [vmem:[%s1 + $0x20] sm:$0xff]
        %v1213 = vld [vmem:[%s1 + $0x28] sm:$0xff]
        %v1214 = vld [vmem:[%s1 + $0x30] sm:$0xff]
        %v1215 = vld [vmem:[%s1 + $0x38] sm:$0xff]
        %v1216 = vld [vmem:[%s1 + $0x40] sm:$0xff]
        %v1217 = vld [vmem:[%s1 + $0x48] sm:$0xff]
        %v1218 = vld [vmem:[%s1 + $0x50] sm:$0xff]
        %v1219 = vld [vmem:[%s1 + $0x58] sm:$0xff]
        %v1220 = vld [vmem:[%s1 + $0x60] sm:$0xff]
        %v1221 = vld [vmem:[%s1 + $0x68] sm:$0xff]
        %v1222 = vld [vmem:[%s1 + $0x70] sm:$0xff]
        %v1223 = vld [vmem:[%s1 + $0x78] sm:$0xff]
        %s1224 = sld [smem:[#allocation2]]
        %v1225 = vstv %s1224
        %v1226 = vmul.f32 %v1225, %v1192
        %v1227 = vmul.f32 %v1225, %v1193
        %v1228 = vmul.f32 %v1225, %v1194
        %v1229 = vmul.f32 %v1225, %v1195
        %v1230 = vmul.f32 %v1225, %v1196
        %v1231 = vmul.f32 %v1225, %v1197
        %v1232 = vmul.f32 %v1225, %v1198
        %v1233 = vmul.f32 %v1225, %v1199
        %s1234 = sld [smem:[#allocation4]]
        %v1235 = vstv %s1234
        %v1236 = vmul.f32 %v1235, %v1208
        %v1237 = vmul.f32 %v1235, %v1209
        %v1238 = vmul.f32 %v1235, %v1210
        %v1239 = vmul.f32 %v1235, %v1211
        %v1240 = vmul.f32 %v1235, %v1212
        %v1241 = vmul.f32 %v1235, %v1213
        %v1242 = vmul.f32 %v1235, %v1214
        %v1243 = vmul.f32 %v1235, %v1215
        %v1244 = vadd.f32 %v1226, %v1236
        %v1245 = vadd.f32 %v1227, %v1237
        %v1246 = vadd.f32 %v1228, %v1238
        %v1247 = vadd.f32 %v1229, %v1239
        %v1248 = vadd.f32 %v1230, %v1240
        %v1249 = vadd.f32 %v1231, %v1241
        %v1250 = vadd.f32 %v1232, %v1242
        %v1251 = vadd.f32 %v1233, %v1243
        %s1252 = sld [smem:[#allocation2 + $0x1]]
        %v1253 = vstv %s1252
        %v1254 = vmul.f32 %v1253, %v1200
        %v1255 = vmul.f32 %v1253, %v1201
        %v1256 = vmul.f32 %v1253, %v1202
        %v1257 = vmul.f32 %v1253, %v1203
        %v1258 = vmul.f32 %v1253, %v1204
        %v1259 = vmul.f32 %v1253, %v1205
        %v1260 = vmul.f32 %v1253, %v1206
        %v1261 = vmul.f32 %v1253, %v1207
        %s1262 = sld [smem:[#allocation4 + $0x1]]
        %v1263 = vstv %s1262
        %v1264 = vmul.f32 %v1263, %v1216
        %v1265 = vmul.f32 %v1263, %v1217
        %v1266 = vmul.f32 %v1263, %v1218
        %v1267 = vmul.f32 %v1263, %v1219
        %v1268 = vmul.f32 %v1263, %v1220
        %v1269 = vmul.f32 %v1263, %v1221
        %v1270 = vmul.f32 %v1263, %v1222
        %v1271 = vmul.f32 %v1263, %v1223
        %v1272 = vadd.f32 %v1254, %v1264
        %v1273 = vadd.f32 %v1255, %v1265
        %v1274 = vadd.f32 %v1256, %v1266
        %v1275 = vadd.f32 %v1257, %v1267
        %v1276 = vadd.f32 %v1258, %v1268
        %v1277 = vadd.f32 %v1259, %v1269
        %v1278 = vadd.f32 %v1260, %v1270
        %v1279 = vadd.f32 %v1261, %v1271
        %v1280 = vld [vmem:[%s4] sm:$0x3]
        %v1281 = vpack.c.bf16 %v1280, %v1280
        %v1282 = vld [vmem:[%s1105] sm:$0xff]
        %v1283 = vld [vmem:[%s1105 + $0x8] sm:$0xff]
        %v1284 = vld [vmem:[%s1105 + $0x10] sm:$0xff]
        %v1285 = vld [vmem:[%s1105 + $0x18] sm:$0xff]
        %v1286 = vld [vmem:[%s1105 + $0x20] sm:$0xff]
        %v1287 = vld [vmem:[%s1105 + $0x28] sm:$0xff]
        %v1288 = vld [vmem:[%s1105 + $0x30] sm:$0xff]
        %v1289 = vld [vmem:[%s1105 + $0x38] sm:$0xff]
        %v1290 = vld [vmem:[%s1105 + $0x40] sm:$0xff]
        %v1291 = vld [vmem:[%s1105 + $0x48] sm:$0xff]
        %v1292 = vld [vmem:[%s1105 + $0x50] sm:$0xff]
        %v1293 = vld [vmem:[%s1105 + $0x58] sm:$0xff]
        %v1294 = vld [vmem:[%s1105 + $0x60] sm:$0xff]
        %v1295 = vld [vmem:[%s1105 + $0x68] sm:$0xff]
        %v1296 = vld [vmem:[%s1105 + $0x70] sm:$0xff]
        %v1297 = vld [vmem:[%s1105 + $0x78] sm:$0xff]
        %v1298 = vld [vmem:[%s1105 + $0x80] sm:$0xff]
        %v1299 = vld [vmem:[%s1105 + $0x88] sm:$0xff]
        %v1300 = vld [vmem:[%s1105 + $0x90] sm:$0xff]
        %v1301 = vld [vmem:[%s1105 + $0x98] sm:$0xff]
        %v1302 = vld [vmem:[%s1105 + $0xa0] sm:$0xff]
        %v1303 = vld [vmem:[%s1105 + $0xa8] sm:$0xff]
        %v1304 = vld [vmem:[%s1105 + $0xb0] sm:$0xff]
        %v1305 = vld [vmem:[%s1105 + $0xb8] sm:$0xff]
        %v1306 = vld [vmem:[%s1105 + $0xc0] sm:$0xff]
        %v1307 = vld [vmem:[%s1105 + $0xc8] sm:$0xff]
        %v1308 = vld [vmem:[%s1105 + $0xd0] sm:$0xff]
        %v1309 = vld [vmem:[%s1105 + $0xd8] sm:$0xff]
        %v1310 = vld [vmem:[%s1105 + $0xe0] sm:$0xff]
        %v1311 = vld [vmem:[%s1105 + $0xe8] sm:$0xff]
        %v1312 = vld [vmem:[%s1105 + $0xf0] sm:$0xff]
        %v1313 = vld [vmem:[%s1105 + $0xf8] sm:$0xff]
        %v1314 = vld [vmem:[%s1109] sm:$0xf]
        %v1316 = vlaneseq
        %v1317 = vshrl.u32 %v1316, 7
        %v1318 = vsub.s32 0, %v1317
        %v1319 = vrot.slane %v1314, %v1318
        %v1320 = vlaneseq
        %v1321 = vshrl.u32 %v1320, 7
        %v1322 = vsub.s32 1, %v1321
        %v1323 = vrot.slane %v1314, %v1322
        %v1324 = vlaneseq
        %v1325 = vshrl.u32 %v1324, 7
        %v1326 = vsub.s32 2, %v1325
        %v1327 = vrot.slane %v1314, %v1326
        %v1328 = vlaneseq
        %v1329 = vshrl.u32 %v1328, 7
        %v1330 = vsub.s32 3, %v1329
        %v1331 = vrot.slane %v1314, %v1330
        %v1368 = vunpack.c.l.b16 %v1282
        %v1369 = vunpack.c.h.b16 %v1282
        %v1370 = vunpack.c.l.b16 %v1283
        %v1371 = vunpack.c.h.b16 %v1283
        %v1372 = vunpack.c.l.b16 %v1284
        %v1373 = vunpack.c.h.b16 %v1284
        %v1374 = vunpack.c.l.b16 %v1285
        %v1375 = vunpack.c.h.b16 %v1285
        %v1376 = vunpack.c.l.b16 %v1286
        %v1377 = vunpack.c.h.b16 %v1286
        %v1378 = vunpack.c.l.b16 %v1287
        %v1379 = vunpack.c.h.b16 %v1287
        %v1380 = vunpack.c.l.b16 %v1288
        %v1381 = vunpack.c.h.b16 %v1288
        %v1382 = vunpack.c.l.b16 %v1289
        %v1383 = vunpack.c.h.b16 %v1289
        %v1384 = vunpack.c.l.b16 %v1290
        %v1385 = vunpack.c.h.b16 %v1290
        %v1386 = vunpack.c.l.b16 %v1291
        %v1387 = vunpack.c.h.b16 %v1291
        %v1388 = vunpack.c.l.b16 %v1292
        %v1389 = vunpack.c.h.b16 %v1292
        %v1390 = vunpack.c.l.b16 %v1293
        %v1391 = vunpack.c.h.b16 %v1293
        %v1392 = vunpack.c.l.b16 %v1294
        %v1393 = vunpack.c.h.b16 %v1294
        %v1394 = vunpack.c.l.b16 %v1295
        %v1395 = vunpack.c.h.b16 %v1295
        %v1396 = vunpack.c.l.b16 %v1296
        %v1397 = vunpack.c.h.b16 %v1296
        %v1398 = vunpack.c.l.b16 %v1297
        %v1399 = vunpack.c.h.b16 %v1297
        %v1400 = vunpack.c.l.b16 %v1298
        %v1401 = vunpack.c.h.b16 %v1298
        %v1402 = vunpack.c.l.b16 %v1299
        %v1403 = vunpack.c.h.b16 %v1299
        %v1404 = vunpack.c.l.b16 %v1300
        %v1405 = vunpack.c.h.b16 %v1300
        %v1406 = vunpack.c.l.b16 %v1301
        %v1407 = vunpack.c.h.b16 %v1301
        %v1408 = vunpack.c.l.b16 %v1302
        %v1409 = vunpack.c.h.b16 %v1302
        %v1410 = vunpack.c.l.b16 %v1303
        %v1411 = vunpack.c.h.b16 %v1303
        %v1412 = vunpack.c.l.b16 %v1304
        %v1413 = vunpack.c.h.b16 %v1304
        %v1414 = vunpack.c.l.b16 %v1305
        %v1415 = vunpack.c.h.b16 %v1305
        %v1416 = vunpack.c.l.b16 %v1306
        %v1417 = vunpack.c.h.b16 %v1306
        %v1418 = vunpack.c.l.b16 %v1307
        %v1419 = vunpack.c.h.b16 %v1307
        %v1420 = vunpack.c.l.b16 %v1308
        %v1421 = vunpack.c.h.b16 %v1308
        %v1422 = vunpack.c.l.b16 %v1309
        %v1423 = vunpack.c.h.b16 %v1309
        %v1424 = vunpack.c.l.b16 %v1310
        %v1425 = vunpack.c.h.b16 %v1310
        %v1426 = vunpack.c.l.b16 %v1311
        %v1427 = vunpack.c.h.b16 %v1311
        %v1428 = vunpack.c.l.b16 %v1312
        %v1429 = vunpack.c.h.b16 %v1312
        %v1430 = vunpack.c.l.b16 %v1313
        %v1431 = vunpack.c.h.b16 %v1313
        %v1432 = vpack.c.b16 %v1372, %v1368
        %v1433 = vpack.c.b16 %v1373, %v1369
        %v1434 = vpack.c.b16 %v1374, %v1370
        %v1435 = vpack.c.b16 %v1375, %v1371
        %v1436 = vpack.c.b16 %v1380, %v1376
        %v1437 = vpack.c.b16 %v1381, %v1377
        %v1438 = vpack.c.b16 %v1382, %v1378
        %v1439 = vpack.c.b16 %v1383, %v1379
        %v1440 = vpack.c.b16 %v1388, %v1384
        %v1441 = vpack.c.b16 %v1389, %v1385
        %v1442 = vpack.c.b16 %v1390, %v1386
        %v1443 = vpack.c.b16 %v1391, %v1387
        %v1444 = vpack.c.b16 %v1396, %v1392
        %v1445 = vpack.c.b16 %v1397, %v1393
        %v1446 = vpack.c.b16 %v1398, %v1394
        %v1447 = vpack.c.b16 %v1399, %v1395
        %v1448 = vpack.c.b16 %v1404, %v1400
        %v1449 = vpack.c.b16 %v1405, %v1401
        %v1450 = vpack.c.b16 %v1406, %v1402
        %v1451 = vpack.c.b16 %v1407, %v1403
        %v1452 = vpack.c.b16 %v1412, %v1408
        %v1453 = vpack.c.b16 %v1413, %v1409
        %v1454 = vpack.c.b16 %v1414, %v1410
        %v1455 = vpack.c.b16 %v1415, %v1411
        %v1456 = vpack.c.b16 %v1420, %v1416
        %v1457 = vpack.c.b16 %v1421, %v1417
        %v1458 = vpack.c.b16 %v1422, %v1418
        %v1459 = vpack.c.b16 %v1423, %v1419
        %v1460 = vpack.c.b16 %v1428, %v1424
        %v1461 = vpack.c.b16 %v1429, %v1425
        %v1462 = vpack.c.b16 %v1430, %v1426
        %v1463 = vpack.c.b16 %v1431, %v1427
        %1496 = vmatprep.subr.bf16.mxu0 %v1433
        %1497 = vmatpush1.bf16.msra.mxu0 %v1432
        %1498 = vmatprep.subr.bf16.mxu0 %v1437
        %1499 = vmatpush1.bf16.msra.mxu0 %v1436
        %1500 = vmatprep.subr.bf16.mxu0 %v1441
        %1501 = vmatpush1.bf16.msra.mxu0 %v1440
        %1502 = vmatprep.subr.bf16.mxu0 %v1445
        %1503 = vmatpush1.bf16.msra.mxu0 %v1444
        %1504 = vmatprep.subr.bf16.mxu0 %v1449
        %1505 = vmatpush1.bf16.msra.mxu0 %v1448
        %1506 = vmatprep.subr.bf16.mxu0 %v1453
        %1507 = vmatpush1.bf16.msra.mxu0 %v1452
        %1508 = vmatprep.subr.bf16.mxu0 %v1457
        %1509 = vmatpush1.bf16.msra.mxu0 %v1456
        %1510 = vmatprep.subr.bf16.mxu0 %v1461
        %1511 = vmatpush1.bf16.msra.mxu0 %v1460
        %1512 = vmatprep.subr.bf16.mxu0 0
        %1513 = vmatpush1.bf16.msra.mxu0 0
        %1514 = vmatprep.subr.bf16.mxu0 0
        %1515 = vmatpush1.bf16.msra.mxu0 0
        %1516 = vmatprep.subr.bf16.mxu0 0
        %1517 = vmatpush1.bf16.msra.mxu0 0
        %1518 = vmatprep.subr.bf16.mxu0 0
        %1519 = vmatpush1.bf16.msra.mxu0 0
        %1520 = vmatprep.subr.bf16.mxu0 0
        %1521 = vmatpush1.bf16.msra.mxu0 0
        %1522 = vmatprep.subr.bf16.mxu0 0
        %1523 = vmatpush1.bf16.msra.mxu0 0
        %1524 = vmatprep.subr.bf16.mxu0 0
        %1525 = vmatpush1.bf16.msra.mxu0 0
        %1526 = vmatprep.subr.bf16.mxu0 0
        %1527 = vmatpush1.bf16.msra.mxu0 0
        %1528 = vmatprep.mubr.bf16.mxu0 0
        %1529 = vmatmul.mubr.bf16.gmra.mrb[0].mxu0 %v1281
        %v1530 = vpop.f32.mrb[0].mxu0
        %v1531 = vadd.f32 %v1319, %v1530
        %v1532 = vpop.f32.mrb[0].mxu0
        %v1533 = vadd.f32 %v1323, %v1532
        %v1534 = vpop.f32.mrb[0].mxu0
        %v1535 = vpop.f32.mrb[0].mxu0
        %1536 = vdwg.mxu0
        %1537 = vmatprep.subr.bf16.mxu0 %v1435
        %1538 = vmatpush1.bf16.msra.mxu0 %v1434
        %1539 = vmatprep.subr.bf16.mxu0 %v1439
        %1540 = vmatpush1.bf16.msra.mxu0 %v1438
        %1541 = vmatprep.subr.bf16.mxu0 %v1443
        %1542 = vmatpush1.bf16.msra.mxu0 %v1442
        %1543 = vmatprep.subr.bf16.mxu0 %v1447
        %1544 = vmatpush1.bf16.msra.mxu0 %v1446
        %1545 = vmatprep.subr.bf16.mxu0 %v1451
        %1546 = vmatpush1.bf16.msra.mxu0 %v1450
        %1547 = vmatprep.subr.bf16.mxu0 %v1455
        %1548 = vmatpush1.bf16.msra.mxu0 %v1454
        %1549 = vmatprep.subr.bf16.mxu0 %v1459
        %1550 = vmatpush1.bf16.msra.mxu0 %v1458
        %1551 = vmatprep.subr.bf16.mxu0 %v1463
        %1552 = vmatpush1.bf16.msra.mxu0 %v1462
        %1553 = vmatprep.subr.bf16.mxu0 0
        %1554 = vmatpush1.bf16.msra.mxu0 0
        %1555 = vmatprep.subr.bf16.mxu0 0
        %1556 = vmatpush1.bf16.msra.mxu0 0
        %1557 = vmatprep.subr.bf16.mxu0 0
        %1558 = vmatpush1.bf16.msra.mxu0 0
        %1559 = vmatprep.subr.bf16.mxu0 0
        %1560 = vmatpush1.bf16.msra.mxu0 0
        %1561 = vmatprep.subr.bf16.mxu0 0
        %1562 = vmatpush1.bf16.msra.mxu0 0
        %1563 = vmatprep.subr.bf16.mxu0 0
        %1564 = vmatpush1.bf16.msra.mxu0 0
        %1565 = vmatprep.subr.bf16.mxu0 0
        %1566 = vmatpush1.bf16.msra.mxu0 0
        %1567 = vmatprep.subr.bf16.mxu0 0
        %1568 = vmatpush1.bf16.msra.mxu0 0
        %1569 = vmatprep.mubr.bf16.mxu0 0
        %1570 = vmatmul.mubr.bf16.gmra.mrb[0].mxu0 %v1281
        %v1571 = vpop.f32.mrb[0].mxu0
        %v1572 = vadd.f32 %v1327, %v1571
        %v1573 = vpop.f32.mrb[0].mxu0
        %v1574 = vadd.f32 %v1331, %v1573
        %v1575 = vpop.f32.mrb[0].mxu0
        %v1576 = vpop.f32.mrb[0].mxu0
        %1577 = vdwg.mxu0
        %v1578 = vxor.u32 %v1531, 2147483648
        %v1579 = vxor.u32 %v1533, 2147483648
        %v1580 = vxor.u32 %v1572, 2147483648
        %v1581 = vxor.u32 %v1574, 2147483648
        %v1582 = vmul.f32 %v1578, 1.442695
        %v1583 = vpow.pop %v1582
        %v1584 = vmul.f32 %v1579, 1.442695
        %v1585 = vpow.pop %v1584
        %v1586 = vmul.f32 %v1580, 1.442695
        %v1587 = vpow.pop %v1586
        %v1588 = vmul.f32 %v1581, 1.442695
        %v1589 = vpow.pop %v1588
        %v1590 = vadd.f32 %v1583, 1.0
        %v1591 = vadd.f32 %v1585, 1.0
        %v1592 = vadd.f32 %v1587, 1.0
        %v1593 = vadd.f32 %v1589, 1.0
        %v1594 = vrcp.pop %v1590
        %v1595 = vmul.f32 1.0, %v1594
        %v1596 = vrcp.pop %v1591
        %v1597 = vmul.f32 1.0, %v1596
        %v1598 = vrcp.pop %v1592
        %v1599 = vmul.f32 1.0, %v1598
        %v1600 = vrcp.pop %v1593
        %v1601 = vmul.f32 1.0, %v1600
        %v1602 = vmul.f32 %v1531, %v1595
        %v1603 = vmul.f32 %v1533, %v1597
        %v1604 = vmul.f32 %v1572, %v1599
        %v1605 = vmul.f32 %v1574, %v1601
        %v1606 = vpack.c.bf16 %v1602, %v1602
        %v1607 = vpack.c.bf16 %v1603, %v1603
        %v1608 = vpack.c.bf16 %v1604, %v1604
        %v1609 = vpack.c.bf16 %v1605, %v1605
        %v1610 = vld [vmem:[%s1114] sm:$0xf]
        %v1611 = vld [vmem:[%s1114 + $0x4] sm:$0xf]
        %v1612 = vld [vmem:[%s1114 + $0x8] sm:$0xf]
        %v1613 = vld [vmem:[%s1114 + $0xc] sm:$0xf]
        %v1614 = vld [vmem:[%s1114 + $0x10] sm:$0xf]
        %v1615 = vld [vmem:[%s1114 + $0x14] sm:$0xf]
        %v1616 = vld [vmem:[%s1114 + $0x18] sm:$0xf]
        %v1617 = vld [vmem:[%s1114 + $0x1c] sm:$0xf]
        %v1618 = vld [vmem:[%s1114 + $0x20] sm:$0xf]
        %v1619 = vld [vmem:[%s1114 + $0x24] sm:$0xf]
        %v1620 = vld [vmem:[%s1114 + $0x28] sm:$0xf]
        %v1621 = vld [vmem:[%s1114 + $0x2c] sm:$0xf]
        %v1622 = vld [vmem:[%s1114 + $0x30] sm:$0xf]
        %v1623 = vld [vmem:[%s1114 + $0x34] sm:$0xf]
        %v1624 = vld [vmem:[%s1114 + $0x38] sm:$0xf]
        %v1625 = vld [vmem:[%s1114 + $0x3c] sm:$0xf]
        %v1626 = vld [vmem:[%s1114 + $0x40] sm:$0xf]
        %v1627 = vld [vmem:[%s1114 + $0x44] sm:$0xf]
        %v1628 = vld [vmem:[%s1114 + $0x48] sm:$0xf]
        %v1629 = vld [vmem:[%s1114 + $0x4c] sm:$0xf]
        %v1630 = vld [vmem:[%s1114 + $0x50] sm:$0xf]
        %v1631 = vld [vmem:[%s1114 + $0x54] sm:$0xf]
        %v1632 = vld [vmem:[%s1114 + $0x58] sm:$0xf]
        %v1633 = vld [vmem:[%s1114 + $0x5c] sm:$0xf]
        %v1634 = vld [vmem:[%s1114 + $0x60] sm:$0xf]
        %v1635 = vld [vmem:[%s1114 + $0x64] sm:$0xf]
        %v1636 = vld [vmem:[%s1114 + $0x68] sm:$0xf]
        %v1637 = vld [vmem:[%s1114 + $0x6c] sm:$0xf]
        %v1638 = vld [vmem:[%s1114 + $0x70] sm:$0xf]
        %v1639 = vld [vmem:[%s1114 + $0x74] sm:$0xf]
        %v1640 = vld [vmem:[%s1114 + $0x78] sm:$0xf]
        %v1641 = vld [vmem:[%s1114 + $0x7c] sm:$0xf]
        %v1642 = vld [vmem:[%s1114 + $0x80] sm:$0xf]
        %v1643 = vld [vmem:[%s1114 + $0x84] sm:$0xf]
        %v1644 = vld [vmem:[%s1114 + $0x88] sm:$0xf]
        %v1645 = vld [vmem:[%s1114 + $0x8c] sm:$0xf]
        %v1646 = vld [vmem:[%s1114 + $0x90] sm:$0xf]
        %v1647 = vld [vmem:[%s1114 + $0x94] sm:$0xf]
        %v1648 = vld [vmem:[%s1114 + $0x98] sm:$0xf]
        %v1649 = vld [vmem:[%s1114 + $0x9c] sm:$0xf]
        %v1650 = vld [vmem:[%s1114 + $0xa0] sm:$0xf]
        %v1651 = vld [vmem:[%s1114 + $0xa4] sm:$0xf]
        %v1652 = vld [vmem:[%s1114 + $0xa8] sm:$0xf]
        %v1653 = vld [vmem:[%s1114 + $0xac] sm:$0xf]
        %v1654 = vld [vmem:[%s1114 + $0xb0] sm:$0xf]
        %v1655 = vld [vmem:[%s1114 + $0xb4] sm:$0xf]
        %v1656 = vld [vmem:[%s1114 + $0xb8] sm:$0xf]
        %v1657 = vld [vmem:[%s1114 + $0xbc] sm:$0xf]
        %v1658 = vld [vmem:[%s1114 + $0xc0] sm:$0xf]
        %v1659 = vld [vmem:[%s1114 + $0xc4] sm:$0xf]
        %v1660 = vld [vmem:[%s1114 + $0xc8] sm:$0xf]
        %v1661 = vld [vmem:[%s1114 + $0xcc] sm:$0xf]
        %v1662 = vld [vmem:[%s1114 + $0xd0] sm:$0xf]
        %v1663 = vld [vmem:[%s1114 + $0xd4] sm:$0xf]
        %v1664 = vld [vmem:[%s1114 + $0xd8] sm:$0xf]
        %v1665 = vld [vmem:[%s1114 + $0xdc] sm:$0xf]
        %v1666 = vld [vmem:[%s1114 + $0xe0] sm:$0xf]
        %v1667 = vld [vmem:[%s1114 + $0xe4] sm:$0xf]
        %v1668 = vld [vmem:[%s1114 + $0xe8] sm:$0xf]
        %v1669 = vld [vmem:[%s1114 + $0xec] sm:$0xf]
        %v1670 = vld [vmem:[%s1114 + $0xf0] sm:$0xf]
        %v1671 = vld [vmem:[%s1114 + $0xf4] sm:$0xf]
        %v1672 = vld [vmem:[%s1114 + $0xf8] sm:$0xf]
        %v1673 = vld [vmem:[%s1114 + $0xfc] sm:$0xf]
        %v1674 = vld [vmem:[%s1117] sm:$0x1]
        %v1676 = vlaneseq
        %v1677 = vshrl.u32 %v1676, 7
        %v1678 = vsub.s32 0, %v1677
        %v1679 = vrot.slane %v1674, %v1678
        %v1745 = vunpack.c.l.b16 %v1610
        %v1746 = vunpack.c.l.b16 %v1611
        %v1747 = vunpack.c.l.b16 %v1612
        %v1748 = vunpack.c.l.b16 %v1613
        %v1749 = vunpack.c.l.b16 %v1614
        %v1750 = vunpack.c.l.b16 %v1615
        %v1751 = vunpack.c.l.b16 %v1616
        %v1752 = vunpack.c.l.b16 %v1617
        %v1753 = vunpack.c.l.b16 %v1618
        %v1754 = vunpack.c.l.b16 %v1619
        %v1755 = vunpack.c.l.b16 %v1620
        %v1756 = vunpack.c.l.b16 %v1621
        %v1757 = vunpack.c.l.b16 %v1622
        %v1758 = vunpack.c.l.b16 %v1623
        %v1759 = vunpack.c.l.b16 %v1624
        %v1760 = vunpack.c.l.b16 %v1625
        %v1761 = vunpack.c.l.b16 %v1626
        %v1762 = vunpack.c.l.b16 %v1627
        %v1763 = vunpack.c.l.b16 %v1628
        %v1764 = vunpack.c.l.b16 %v1629
        %v1765 = vunpack.c.l.b16 %v1630
        %v1766 = vunpack.c.l.b16 %v1631
        %v1767 = vunpack.c.l.b16 %v1632
        %v1768 = vunpack.c.l.b16 %v1633
        %v1769 = vunpack.c.l.b16 %v1634
        %v1770 = vunpack.c.l.b16 %v1635
        %v1771 = vunpack.c.l.b16 %v1636
        %v1772 = vunpack.c.l.b16 %v1637
        %v1773 = vunpack.c.l.b16 %v1638
        %v1774 = vunpack.c.l.b16 %v1639
        %v1775 = vunpack.c.l.b16 %v1640
        %v1776 = vunpack.c.l.b16 %v1641
        %v1777 = vunpack.c.l.b16 %v1642
        %v1778 = vunpack.c.l.b16 %v1643
        %v1779 = vunpack.c.l.b16 %v1644
        %v1780 = vunpack.c.l.b16 %v1645
        %v1781 = vunpack.c.l.b16 %v1646
        %v1782 = vunpack.c.l.b16 %v1647
        %v1783 = vunpack.c.l.b16 %v1648
        %v1784 = vunpack.c.l.b16 %v1649
        %v1785 = vunpack.c.l.b16 %v1650
        %v1786 = vunpack.c.l.b16 %v1651
        %v1787 = vunpack.c.l.b16 %v1652
        %v1788 = vunpack.c.l.b16 %v1653
        %v1789 = vunpack.c.l.b16 %v1654
        %v1790 = vunpack.c.l.b16 %v1655
        %v1791 = vunpack.c.l.b16 %v1656
        %v1792 = vunpack.c.l.b16 %v1657
        %v1793 = vunpack.c.l.b16 %v1658
        %v1794 = vunpack.c.l.b16 %v1659
        %v1795 = vunpack.c.l.b16 %v1660
        %v1796 = vunpack.c.l.b16 %v1661
        %v1797 = vunpack.c.l.b16 %v1662
        %v1798 = vunpack.c.l.b16 %v1663
        %v1799 = vunpack.c.l.b16 %v1664
        %v1800 = vunpack.c.l.b16 %v1665
        %v1801 = vunpack.c.l.b16 %v1666
        %v1802 = vunpack.c.l.b16 %v1667
        %v1803 = vunpack.c.l.b16 %v1668
        %v1804 = vunpack.c.l.b16 %v1669
        %v1805 = vunpack.c.l.b16 %v1670
        %v1806 = vunpack.c.l.b16 %v1671
        %v1807 = vunpack.c.l.b16 %v1672
        %v1808 = vunpack.c.l.b16 %v1673
        %v1809 = vpack.c.b16 %v1746, %v1745
        %v1810 = vpack.c.b16 %v1748, %v1747
        %v1811 = vpack.c.b16 %v1750, %v1749
        %v1812 = vpack.c.b16 %v1752, %v1751
        %v1813 = vpack.c.b16 %v1754, %v1753
        %v1814 = vpack.c.b16 %v1756, %v1755
        %v1815 = vpack.c.b16 %v1758, %v1757
        %v1816 = vpack.c.b16 %v1760, %v1759
        %v1817 = vpack.c.b16 %v1762, %v1761
        %v1818 = vpack.c.b16 %v1764, %v1763
        %v1819 = vpack.c.b16 %v1766, %v1765
        %v1820 = vpack.c.b16 %v1768, %v1767
        %v1821 = vpack.c.b16 %v1770, %v1769
        %v1822 = vpack.c.b16 %v1772, %v1771
        %v1823 = vpack.c.b16 %v1774, %v1773
        %v1824 = vpack.c.b16 %v1776, %v1775
        %v1825 = vpack.c.b16 %v1778, %v1777
        %v1826 = vpack.c.b16 %v1780, %v1779
        %v1827 = vpack.c.b16 %v1782, %v1781
        %v1828 = vpack.c.b16 %v1784, %v1783
        %v1829 = vpack.c.b16 %v1786, %v1785
        %v1830 = vpack.c.b16 %v1788, %v1787
        %v1831 = vpack.c.b16 %v1790, %v1789
        %v1832 = vpack.c.b16 %v1792, %v1791
        %v1833 = vpack.c.b16 %v1794, %v1793
        %v1834 = vpack.c.b16 %v1796, %v1795
        %v1835 = vpack.c.b16 %v1798, %v1797
        %v1836 = vpack.c.b16 %v1800, %v1799
        %v1837 = vpack.c.b16 %v1802, %v1801
        %v1838 = vpack.c.b16 %v1804, %v1803
        %v1839 = vpack.c.b16 %v1806, %v1805
        %v1840 = vpack.c.b16 %v1808, %v1807
        %1873 = vmatprep.subr.bf16.mxu0 0
        %1874 = vmatpush1.bf16.msra.mxu0 %v1809
        %1875 = vmatprep.subr.bf16.mxu0 0
        %1876 = vmatpush1.bf16.msra.mxu0 %v1810
        %1877 = vmatprep.subr.bf16.mxu0 0
        %1878 = vmatpush1.bf16.msra.mxu0 %v1811
        %1879 = vmatprep.subr.bf16.mxu0 0
        %1880 = vmatpush1.bf16.msra.mxu0 %v1812
        %1881 = vmatprep.subr.bf16.mxu0 0
        %1882 = vmatpush1.bf16.msra.mxu0 %v1813
        %1883 = vmatprep.subr.bf16.mxu0 0
        %1884 = vmatpush1.bf16.msra.mxu0 %v1814
        %1885 = vmatprep.subr.bf16.mxu0 0
        %1886 = vmatpush1.bf16.msra.mxu0 %v1815
        %1887 = vmatprep.subr.bf16.mxu0 0
        %1888 = vmatpush1.bf16.msra.mxu0 %v1816
        %1889 = vmatprep.subr.bf16.mxu0 0
        %1890 = vmatpush1.bf16.msra.mxu0 %v1817
        %1891 = vmatprep.subr.bf16.mxu0 0
        %1892 = vmatpush1.bf16.msra.mxu0 %v1818
        %1893 = vmatprep.subr.bf16.mxu0 0
        %1894 = vmatpush1.bf16.msra.mxu0 %v1819
        %1895 = vmatprep.subr.bf16.mxu0 0
        %1896 = vmatpush1.bf16.msra.mxu0 %v1820
        %1897 = vmatprep.subr.bf16.mxu0 0
        %1898 = vmatpush1.bf16.msra.mxu0 %v1821
        %1899 = vmatprep.subr.bf16.mxu0 0
        %1900 = vmatpush1.bf16.msra.mxu0 %v1822
        %1901 = vmatprep.subr.bf16.mxu0 0
        %1902 = vmatpush1.bf16.msra.mxu0 %v1823
        %1903 = vmatprep.subr.bf16.mxu0 0
        %1904 = vmatpush1.bf16.msra.mxu0 %v1824
        %1905 = vmatprep.mubr.bf16.mxu0 %v1607
        %1906 = vmatmul.mubr.bf16.gmra.mrb[0].mxu0 %v1606
        %v1907 = vpop.f32.mrb[0].mxu0
        %v1908 = vadd.f32 %v1679, %v1907
        %v1909 = vpop.f32.mrb[0].mxu0
        %v1910 = vpop.f32.mrb[0].mxu0
        %v1911 = vpop.f32.mrb[0].mxu0
        %1912 = vdwg.mxu0
        %1913 = vmatprep.subr.bf16.mxu0 0
        %1914 = vmatpush1.bf16.msra.mxu0 %v1825
        %1915 = vmatprep.subr.bf16.mxu0 0
        %1916 = vmatpush1.bf16.msra.mxu0 %v1826
        %1917 = vmatprep.subr.bf16.mxu0 0
        %1918 = vmatpush1.bf16.msra.mxu0 %v1827
        %1919 = vmatprep.subr.bf16.mxu0 0
        %1920 = vmatpush1.bf16.msra.mxu0 %v1828
        %1921 = vmatprep.subr.bf16.mxu0 0
        %1922 = vmatpush1.bf16.msra.mxu0 %v1829
        %1923 = vmatprep.subr.bf16.mxu0 0
        %1924 = vmatpush1.bf16.msra.mxu0 %v1830
        %1925 = vmatprep.subr.bf16.mxu0 0
        %1926 = vmatpush1.bf16.msra.mxu0 %v1831
        %1927 = vmatprep.subr.bf16.mxu0 0
        %1928 = vmatpush1.bf16.msra.mxu0 %v1832
        %1929 = vmatprep.subr.bf16.mxu0 0
        %1930 = vmatpush1.bf16.msra.mxu0 %v1833
        %1931 = vmatprep.subr.bf16.mxu0 0
        %1932 = vmatpush1.bf16.msra.mxu0 %v1834
        %1933 = vmatprep.subr.bf16.mxu0 0
        %1934 = vmatpush1.bf16.msra.mxu0 %v1835
        %1935 = vmatprep.subr.bf16.mxu0 0
        %1936 = vmatpush1.bf16.msra.mxu0 %v1836
        %1937 = vmatprep.subr.bf16.mxu0 0
        %1938 = vmatpush1.bf16.msra.mxu0 %v1837
        %1939 = vmatprep.subr.bf16.mxu0 0
        %1940 = vmatpush1.bf16.msra.mxu0 %v1838
        %1941 = vmatprep.subr.bf16.mxu0 0
        %1942 = vmatpush1.bf16.msra.mxu0 %v1839
        %1943 = vmatprep.subr.bf16.mxu0 0
        %1944 = vmatpush1.bf16.msra.mxu0 %v1840
        %1945 = vmatprep.mubr.bf16.mxu0 %v1609
        %1946 = vmatmul.mubr.bf16.gmra.mrb[0].mxu0 %v1608
        %v1947 = vpop.f32.mrb[0].mxu0
        %v1948 = vadd.f32 %v1908, %v1947
        %v1949 = vpop.f32.mrb[0].mxu0
        %v1950 = vpop.f32.mrb[0].mxu0
        %v1951 = vpop.f32.mrb[0].mxu0
        %1952 = vdwg.mxu0
        %v1953 = vlaneseq
        %v1954 = vshrl.u32 %v1953, 7
        %v1955 = vsub.s32 0, %v1954
        %v1956 = vrot.slane %v1948, %v1955
        %v1957 = vlaneseq
        %v1958 = vshrl.u32 %v1957, 7
        %v1959 = vsub.s32 1, %v1958
        %v1960 = vrot.slane %v1948, %v1959
        %v1961 = vpack.c.bf16 %v1245, %v1244
        %v1962 = vpack.c.bf16 %v1247, %v1246
        %v1963 = vpack.c.bf16 %v1249, %v1248
        %v1964 = vpack.c.bf16 %v1251, %v1250
        %v1965 = vpack.c.bf16 %v1273, %v1272
        %v1966 = vpack.c.bf16 %v1275, %v1274
        %v1967 = vpack.c.bf16 %v1277, %v1276
        %v1968 = vpack.c.bf16 %v1279, %v1278
        %v1969 = vld [vmem:[%s1122] sm:$0xf]
        %v1970 = vld [vmem:[%s1122 + $0x4] sm:$0xf]
        %v1971 = vld [vmem:[%s1125] sm:$0x1]
        %v1973 = vlaneseq
        %v1974 = vshrl.u32 %v1973, 7
        %v1975 = vsub.s32 0, %v1974
        %v1976 = vrot.slane %v1971, %v1975
        %v1980 = vunpack.c.l.b16 %v1969
        %v1981 = vunpack.c.l.b16 %v1970
        %v1982 = vpack.c.b16 %v1981, %v1980
        %vm1984 = vcmask 130048
        %v1986 = vsel %vm1984, %v1961, 0
        %v1989 = vsel %vm1984, %v1962, 0
        %v1992 = vsel %vm1984, %v1963, 0
        %v1995 = vsel %vm1984, %v1964, 0
        %v1998 = vsel %vm1984, %v1965, 0
        %v2001 = vsel %vm1984, %v1966, 0
        %v2004 = vsel %vm1984, %v1967, 0
        %v2007 = vsel %vm1984, %v1968, 0
        %2009 = vmatprep.subr.bf16.mxu0 0
        %2010 = vmatpush1.bf16.msra.mxu0 %v1982
        %2011 = vmatprep.subr.bf16.mxu0 0
        %2012 = vmatpush1.bf16.msra.mxu0 0
        %2013 = vmatprep.subr.bf16.mxu0 0
        %2014 = vmatpush1.bf16.msra.mxu0 0
        %2015 = vmatprep.subr.bf16.mxu0 0
        %2016 = vmatpush1.bf16.msra.mxu0 0
        %2017 = vmatprep.subr.bf16.mxu0 0
        %2018 = vmatpush1.bf16.msra.mxu0 0
        %2019 = vmatprep.subr.bf16.mxu0 0
        %2020 = vmatpush1.bf16.msra.mxu0 0
        %2021 = vmatprep.subr.bf16.mxu0 0
        %2022 = vmatpush1.bf16.msra.mxu0 0
        %2023 = vmatprep.subr.bf16.mxu0 0
        %2024 = vmatpush1.bf16.msra.mxu0 0
        %2025 = vmatprep.subr.bf16.mxu0 0
        %2026 = vmatpush1.bf16.msra.mxu0 0
        %2027 = vmatprep.subr.bf16.mxu0 0
        %2028 = vmatpush1.bf16.msra.mxu0 0
        %2029 = vmatprep.subr.bf16.mxu0 0
        %2030 = vmatpush1.bf16.msra.mxu0 0
        %2031 = vmatprep.subr.bf16.mxu0 0
        %2032 = vmatpush1.bf16.msra.mxu0 0
        %2033 = vmatprep.subr.bf16.mxu0 0
        %2034 = vmatpush1.bf16.msra.mxu0 0
        %2035 = vmatprep.subr.bf16.mxu0 0
        %2036 = vmatpush1.bf16.msra.mxu0 0
        %2037 = vmatprep.subr.bf16.mxu0 0
        %2038 = vmatpush1.bf16.msra.mxu0 0
        %2039 = vmatprep.subr.bf16.mxu0 0
        %2040 = vmatpush1.bf16.msra.mxu0 0
        %2041 = vmatprep.mubr.bf16.mxu0 0
        %2042 = vmatmul.mubr.bf16.gmra.mrb[0].mxu0 %v1986
        %v2043 = vpop.f32.mrb[0].mxu0
        %v2044 = vadd.f32 %v1976, %v2043
        %v2045 = vpop.f32.mrb[0].mxu0
        %v2046 = vpop.f32.mrb[0].mxu0
        %v2047 = vadd.f32 %v1976, %v2046
        %v2048 = vpop.f32.mrb[0].mxu0
        %2049 = vmatprep.mubr.bf16.mxu0 0
        %2050 = vmatmul.mubr.bf16.gmra.mrb[0].mxu0 %v1989
        %v2051 = vpop.f32.mrb[0].mxu0
        %v2052 = vadd.f32 %v1976, %v2051
        %v2053 = vpop.f32.mrb[0].mxu0
        %v2054 = vpop.f32.mrb[0].mxu0
        %v2055 = vadd.f32 %v1976, %v2054
        %v2056 = vpop.f32.mrb[0].mxu0
        %2057 = vmatprep.mubr.bf16.mxu0 0
        %2058 = vmatmul.mubr.bf16.gmra.mrb[0].mxu0 %v1992
        %v2059 = vpop.f32.mrb[0].mxu0
        %v2060 = vadd.f32 %v1976, %v2059
        %v2061 = vpop.f32.mrb[0].mxu0
        %v2062 = vpop.f32.mrb[0].mxu0
        %v2063 = vadd.f32 %v1976, %v2062
        %v2064 = vpop.f32.mrb[0].mxu0
        %2065 = vmatprep.mubr.bf16.mxu0 0
        %2066 = vmatmul.mubr.bf16.gmra.mrb[0].mxu0 %v1995
        %v2067 = vpop.f32.mrb[0].mxu0
        %v2068 = vadd.f32 %v1976, %v2067
        %v2069 = vpop.f32.mrb[0].mxu0
        %v2070 = vpop.f32.mrb[0].mxu0
        %v2071 = vadd.f32 %v1976, %v2070
        %v2072 = vpop.f32.mrb[0].mxu0
        %2073 = vmatprep.mubr.bf16.mxu0 0
        %2074 = vmatmul.mubr.bf16.gmra.mrb[0].mxu0 %v1998
        %v2075 = vpop.f32.mrb[0].mxu0
        %v2076 = vadd.f32 %v1976, %v2075
        %v2077 = vpop.f32.mrb[0].mxu0
        %v2078 = vpop.f32.mrb[0].mxu0
        %v2079 = vadd.f32 %v1976, %v2078
        %v2080 = vpop.f32.mrb[0].mxu0
        %2081 = vmatprep.mubr.bf16.mxu0 0
        %2082 = vmatmul.mubr.bf16.gmra.mrb[0].mxu0 %v2001
        %v2083 = vpop.f32.mrb[0].mxu0
        %v2084 = vadd.f32 %v1976, %v2083
        %v2085 = vpop.f32.mrb[0].mxu0
        %v2086 = vpop.f32.mrb[0].mxu0
        %v2087 = vadd.f32 %v1976, %v2086
        %v2088 = vpop.f32.mrb[0].mxu0
        %2089 = vmatprep.mubr.bf16.mxu0 0
        %2090 = vmatmul.mubr.bf16.gmra.mrb[0].mxu0 %v2004
        %v2091 = vpop.f32.mrb[0].mxu0
        %v2092 = vadd.f32 %v1976, %v2091
        %v2093 = vpop.f32.mrb[0].mxu0
        %v2094 = vpop.f32.mrb[0].mxu0
        %v2095 = vadd.f32 %v1976, %v2094
        %v2096 = vpop.f32.mrb[0].mxu0
        %2097 = vmatprep.mubr.bf16.mxu0 0
        %2098 = vmatmul.mubr.bf16.gmra.mrb[0].mxu0 %v2007
        %v2099 = vpop.f32.mrb[0].mxu0
        %v2100 = vadd.f32 %v1976, %v2099
        %v2101 = vpop.f32.mrb[0].mxu0
        %v2102 = vpop.f32.mrb[0].mxu0
        %v2103 = vadd.f32 %v1976, %v2102
        %v2104 = vpop.f32.mrb[0].mxu0
        %2105 = vdwg.mxu0
        %v2106 = vadd.f32 %v2044, %v1956
        %v2107 = vadd.f32 %v2047, %v1956
        %v2108 = vadd.f32 %v2052, %v1956
        %v2109 = vadd.f32 %v2055, %v1956
        %v2110 = vadd.f32 %v2060, %v1956
        %v2111 = vadd.f32 %v2063, %v1956
        %v2112 = vadd.f32 %v2068, %v1956
        %v2113 = vadd.f32 %v2071, %v1956
        %v2114 = vadd.f32 %v2076, %v1960
        %v2115 = vadd.f32 %v2079, %v1960
        %v2116 = vadd.f32 %v2084, %v1960
        %v2117 = vadd.f32 %v2087, %v1960
        %v2118 = vadd.f32 %v2092, %v1960
        %v2119 = vadd.f32 %v2095, %v1960
        %v2120 = vadd.f32 %v2100, %v1960
        %v2121 = vadd.f32 %v2103, %v1960
        %v2122 = vld [vmem:[%s1128] sm:$0x1]
        %v2123 = vld [vmem:[%s1131] sm:$0x1]
        %2124 = vadd.xlane.f32.xlu0 %v2106
        %v2125 = vpop.xlane.xlu0 %2124
        %2126 = vadd.xlane.f32.xlu0 %v2107
        %v2127 = vpop.xlane.xlu0 %2126
        %2128 = vadd.xlane.f32.xlu0 %v2108
        %v2129 = vpop.xlane.xlu0 %2128
        %2130 = vadd.xlane.f32.xlu0 %v2109
        %v2131 = vpop.xlane.xlu0 %2130
        %2132 = vadd.xlane.f32.xlu0 %v2110
        %v2133 = vpop.xlane.xlu0 %2132
        %2134 = vadd.xlane.f32.xlu0 %v2111
        %v2135 = vpop.xlane.xlu0 %2134
        %2136 = vadd.xlane.f32.xlu0 %v2112
        %v2137 = vpop.xlane.xlu0 %2136
        %2138 = vadd.xlane.f32.xlu0 %v2113
        %v2139 = vpop.xlane.xlu0 %2138
        %2140 = vadd.xlane.f32.xlu0 %v2114
        %v2141 = vpop.xlane.xlu0 %2140
        %2142 = vadd.xlane.f32.xlu0 %v2115
        %v2143 = vpop.xlane.xlu0 %2142
        %2144 = vadd.xlane.f32.xlu0 %v2116
        %v2145 = vpop.xlane.xlu0 %2144
        %2146 = vadd.xlane.f32.xlu0 %v2117
        %v2147 = vpop.xlane.xlu0 %2146
        %2148 = vadd.xlane.f32.xlu0 %v2118
        %v2149 = vpop.xlane.xlu0 %2148
        %2150 = vadd.xlane.f32.xlu0 %v2119
        %v2151 = vpop.xlane.xlu0 %2150
        %2152 = vadd.xlane.f32.xlu0 %v2120
        %v2153 = vpop.xlane.xlu0 %2152
        %2154 = vadd.xlane.f32.xlu0 %v2121
        %v2155 = vpop.xlane.xlu0 %2154
        %v2156 = vrcp.pop 128.0
        %v2157 = vmul.f32 %v2125, %v2156
        %v2158 = vmul.f32 %v2127, %v2156
        %v2159 = vmul.f32 %v2129, %v2156
        %v2160 = vmul.f32 %v2131, %v2156
        %v2161 = vmul.f32 %v2133, %v2156
        %v2162 = vmul.f32 %v2135, %v2156
        %v2163 = vmul.f32 %v2137, %v2156
        %v2164 = vmul.f32 %v2139, %v2156
        %v2165 = vmul.f32 %v2141, %v2156
        %v2166 = vmul.f32 %v2143, %v2156
        %v2167 = vmul.f32 %v2145, %v2156
        %v2168 = vmul.f32 %v2147, %v2156
        %v2169 = vmul.f32 %v2149, %v2156
        %v2170 = vmul.f32 %v2151, %v2156
        %v2171 = vmul.f32 %v2153, %v2156
        %v2172 = vmul.f32 %v2155, %v2156
        %v2173 = vsub.f32 %v2106, %v2157
        %v2174 = vsub.f32 %v2107, %v2158
        %v2175 = vsub.f32 %v2108, %v2159
        %v2176 = vsub.f32 %v2109, %v2160
        %v2177 = vsub.f32 %v2110, %v2161
        %v2178 = vsub.f32 %v2111, %v2162
        %v2179 = vsub.f32 %v2112, %v2163
        %v2180 = vsub.f32 %v2113, %v2164
        %v2181 = vsub.f32 %v2114, %v2165
        %v2182 = vsub.f32 %v2115, %v2166
        %v2183 = vsub.f32 %v2116, %v2167
        %v2184 = vsub.f32 %v2117, %v2168
        %v2185 = vsub.f32 %v2118, %v2169
        %v2186 = vsub.f32 %v2119, %v2170
        %v2187 = vsub.f32 %v2120, %v2171
        %v2188 = vsub.f32 %v2121, %v2172
        %v2189 = vmul.f32 %v2173, %v2173
        %v2190 = vmul.f32 %v2174, %v2174
        %v2191 = vmul.f32 %v2175, %v2175
        %v2192 = vmul.f32 %v2176, %v2176
        %v2193 = vmul.f32 %v2177, %v2177
        %v2194 = vmul.f32 %v2178, %v2178
        %v2195 = vmul.f32 %v2179, %v2179
        %v2196 = vmul.f32 %v2180, %v2180
        %v2197 = vmul.f32 %v2181, %v2181
        %v2198 = vmul.f32 %v2182, %v2182
        %v2199 = vmul.f32 %v2183, %v2183
        %v2200 = vmul.f32 %v2184, %v2184
        %v2201 = vmul.f32 %v2185, %v2185
        %v2202 = vmul.f32 %v2186, %v2186
        %v2203 = vmul.f32 %v2187, %v2187
        %v2204 = vmul.f32 %v2188, %v2188
        %2205 = vadd.xlane.f32.xlu0 %v2189
        %v2206 = vpop.xlane.xlu0 %2205
        %2207 = vadd.xlane.f32.xlu0 %v2190
        %v2208 = vpop.xlane.xlu0 %2207
        %2209 = vadd.xlane.f32.xlu0 %v2191
        %v2210 = vpop.xlane.xlu0 %2209
        %2211 = vadd.xlane.f32.xlu0 %v2192
        %v2212 = vpop.xlane.xlu0 %2211
        %2213 = vadd.xlane.f32.xlu0 %v2193
        %v2214 = vpop.xlane.xlu0 %2213
        %2215 = vadd.xlane.f32.xlu0 %v2194
        %v2216 = vpop.xlane.xlu0 %2215
        %2217 = vadd.xlane.f32.xlu0 %v2195
        %v2218 = vpop.xlane.xlu0 %2217
        %2219 = vadd.xlane.f32.xlu0 %v2196
        %v2220 = vpop.xlane.xlu0 %2219
        %2221 = vadd.xlane.f32.xlu0 %v2197
        %v2222 = vpop.xlane.xlu0 %2221
        %2223 = vadd.xlane.f32.xlu0 %v2198
        %v2224 = vpop.xlane.xlu0 %2223
        %2225 = vadd.xlane.f32.xlu0 %v2199
        %v2226 = vpop.xlane.xlu0 %2225
        %2227 = vadd.xlane.f32.xlu0 %v2200
        %v2228 = vpop.xlane.xlu0 %2227
        %2229 = vadd.xlane.f32.xlu0 %v2201
        %v2230 = vpop.xlane.xlu0 %2229
        %2231 = vadd.xlane.f32.xlu0 %v2202
        %v2232 = vpop.xlane.xlu0 %2231
        %2233 = vadd.xlane.f32.xlu0 %v2203
        %v2234 = vpop.xlane.xlu0 %2233
        %2235 = vadd.xlane.f32.xlu0 %v2204
        %v2236 = vpop.xlane.xlu0 %2235
        %v2237 = vmul.f32 %v2206, %v2156
        %v2238 = vmul.f32 %v2208, %v2156
        %v2239 = vmul.f32 %v2210, %v2156
        %v2240 = vmul.f32 %v2212, %v2156
        %v2241 = vmul.f32 %v2214, %v2156
        %v2242 = vmul.f32 %v2216, %v2156
        %v2243 = vmul.f32 %v2218, %v2156
        %v2244 = vmul.f32 %v2220, %v2156
        %v2245 = vmul.f32 %v2222, %v2156
        %v2246 = vmul.f32 %v2224, %v2156
        %v2247 = vmul.f32 %v2226, %v2156
        %v2248 = vmul.f32 %v2228, %v2156
        %v2249 = vmul.f32 %v2230, %v2156
        %v2250 = vmul.f32 %v2232, %v2156
        %v2251 = vmul.f32 %v2234, %v2156
        %v2252 = vmul.f32 %v2236, %v2156
        %v2253 = vadd.f32 %v2237, 1e-05
        %v2254 = vadd.f32 %v2238, 1e-05
        %v2255 = vadd.f32 %v2239, 1e-05
        %v2256 = vadd.f32 %v2240, 1e-05
        %v2257 = vadd.f32 %v2241, 1e-05
        %v2258 = vadd.f32 %v2242, 1e-05
        %v2259 = vadd.f32 %v2243, 1e-05
        %v2260 = vadd.f32 %v2244, 1e-05
        %v2261 = vadd.f32 %v2245, 1e-05
        %v2262 = vadd.f32 %v2246, 1e-05
        %v2263 = vadd.f32 %v2247, 1e-05
        %v2264 = vadd.f32 %v2248, 1e-05
        %v2265 = vadd.f32 %v2249, 1e-05
        %v2266 = vadd.f32 %v2250, 1e-05
        %v2267 = vadd.f32 %v2251, 1e-05
        %v2268 = vadd.f32 %v2252, 1e-05
        %v2269 = vrsqrt.pop %v2253
        %v2270 = vrsqrt.pop %v2254
        %v2271 = vrsqrt.pop %v2255
        %v2272 = vrsqrt.pop %v2256
        %v2273 = vrsqrt.pop %v2257
        %v2274 = vrsqrt.pop %v2258
        %v2275 = vrsqrt.pop %v2259
        %v2276 = vrsqrt.pop %v2260
        %v2277 = vrsqrt.pop %v2261
        %v2278 = vrsqrt.pop %v2262
        %v2279 = vrsqrt.pop %v2263
        %v2280 = vrsqrt.pop %v2264
        %v2281 = vrsqrt.pop %v2265
        %v2282 = vrsqrt.pop %v2266
        %v2283 = vrsqrt.pop %v2267
        %v2284 = vrsqrt.pop %v2268
        %v2285 = vmul.f32 %v2173, %v2269
        %v2286 = vmul.f32 %v2174, %v2270
        %v2287 = vmul.f32 %v2175, %v2271
        %v2288 = vmul.f32 %v2176, %v2272
        %v2289 = vmul.f32 %v2177, %v2273
        %v2290 = vmul.f32 %v2178, %v2274
        %v2291 = vmul.f32 %v2179, %v2275
        %v2292 = vmul.f32 %v2180, %v2276
        %v2293 = vmul.f32 %v2181, %v2277
        %v2294 = vmul.f32 %v2182, %v2278
        %v2295 = vmul.f32 %v2183, %v2279
        %v2296 = vmul.f32 %v2184, %v2280
        %v2297 = vmul.f32 %v2185, %v2281
        %v2298 = vmul.f32 %v2186, %v2282
        %v2299 = vmul.f32 %v2187, %v2283
        %v2300 = vmul.f32 %v2188, %v2284
        %v2302 = vlaneseq
        %v2303 = vshrl.u32 %v2302, 7
        %v2304 = vsub.s32 0, %v2303
        %v2305 = vrot.slane %v2122, %v2304
        %v2307 = vmul.f32 %v2285, %v2305
        %v2308 = vmul.f32 %v2286, %v2305
        %v2309 = vmul.f32 %v2287, %v2305
        %v2310 = vmul.f32 %v2288, %v2305
        %v2311 = vmul.f32 %v2289, %v2305
        %v2312 = vmul.f32 %v2290, %v2305
        %v2313 = vmul.f32 %v2291, %v2305
        %v2314 = vmul.f32 %v2292, %v2305
        %v2315 = vmul.f32 %v2293, %v2305
        %v2316 = vmul.f32 %v2294, %v2305
        %v2317 = vmul.f32 %v2295, %v2305
        %v2318 = vmul.f32 %v2296, %v2305
        %v2319 = vmul.f32 %v2297, %v2305
        %v2320 = vmul.f32 %v2298, %v2305
        %v2321 = vmul.f32 %v2299, %v2305
        %v2322 = vmul.f32 %v2300, %v2305
        %v2324 = vlaneseq
        %v2325 = vshrl.u32 %v2324, 7
        %v2326 = vsub.s32 0, %v2325
        %v2327 = vrot.slane %v2123, %v2326
        %v2329 = vadd.f32 %v2307, %v2327
        %v2330 = vadd.f32 %v2308, %v2327
        %v2331 = vadd.f32 %v2309, %v2327
        %v2332 = vadd.f32 %v2310, %v2327
        %v2333 = vadd.f32 %v2311, %v2327
        %v2334 = vadd.f32 %v2312, %v2327
        %v2335 = vadd.f32 %v2313, %v2327
        %v2336 = vadd.f32 %v2314, %v2327
        %v2337 = vadd.f32 %v2315, %v2327
        %v2338 = vadd.f32 %v2316, %v2327
        %v2339 = vadd.f32 %v2317, %v2327
        %v2340 = vadd.f32 %v2318, %v2327
        %v2341 = vadd.f32 %v2319, %v2327
        %v2342 = vadd.f32 %v2320, %v2327
        %v2343 = vadd.f32 %v2321, %v2327
        %v2344 = vadd.f32 %v2322, %v2327
        %v2345 = vpack.c.bf16 %v2330, %v2329
        %v2346 = vpack.c.bf16 %v2332, %v2331
        %v2347 = vpack.c.bf16 %v2334, %v2333
        %v2348 = vpack.c.bf16 %v2336, %v2335
        %v2349 = vpack.c.bf16 %v2338, %v2337
        %v2350 = vpack.c.bf16 %v2340, %v2339
        %v2351 = vpack.c.bf16 %v2342, %v2341
        %v2352 = vpack.c.bf16 %v2344, %v2343
        %v2353 = vld [vmem:[%s1136] sm:$0xff]
        %v2354 = vld [vmem:[%s1136 + $0x8] sm:$0xf]
        %v2355 = vld [vmem:[%s1136 + $0xc] sm:$0xff]
        %v2356 = vld [vmem:[%s1136 + $0x14] sm:$0xf]
        %v2357 = vld [vmem:[%s1136 + $0x18] sm:$0xff]
        %v2358 = vld [vmem:[%s1136 + $0x20] sm:$0xf]
        %v2359 = vld [vmem:[%s1136 + $0x24] sm:$0xff]
        %v2360 = vld [vmem:[%s1136 + $0x2c] sm:$0xf]
        %v2361 = vld [vmem:[%s1136 + $0x30] sm:$0xff]
        %v2362 = vld [vmem:[%s1136 + $0x38] sm:$0xf]
        %v2363 = vld [vmem:[%s1136 + $0x3c] sm:$0xff]
        %v2364 = vld [vmem:[%s1136 + $0x44] sm:$0xf]
        %v2365 = vld [vmem:[%s1136 + $0x48] sm:$0xff]
        %v2366 = vld [vmem:[%s1136 + $0x50] sm:$0xf]
        %v2367 = vld [vmem:[%s1136 + $0x54] sm:$0xff]
        %v2368 = vld [vmem:[%s1136 + $0x5c] sm:$0xf]
        %v2369 = vld [vmem:[%s1136 + $0x60] sm:$0xff]
        %v2370 = vld [vmem:[%s1136 + $0x68] sm:$0xf]
        %v2371 = vld [vmem:[%s1136 + $0x6c] sm:$0xff]
        %v2372 = vld [vmem:[%s1136 + $0x74] sm:$0xf]
        %v2373 = vld [vmem:[%s1136 + $0x78] sm:$0xff]
        %v2374 = vld [vmem:[%s1136 + $0x80] sm:$0xf]
        %v2375 = vld [vmem:[%s1136 + $0x84] sm:$0xff]
        %v2376 = vld [vmem:[%s1136 + $0x8c] sm:$0xf]
        %v2377 = vld [vmem:[%s1136 + $0x90] sm:$0xff]
        %v2378 = vld [vmem:[%s1136 + $0x98] sm:$0xf]
        %v2379 = vld [vmem:[%s1136 + $0x9c] sm:$0xff]
        %v2380 = vld [vmem:[%s1136 + $0xa4] sm:$0xf]
        %v2381 = vld [vmem:[%s1136 + $0xa8] sm:$0xff]
        %v2382 = vld [vmem:[%s1136 + $0xb0] sm:$0xf]
        %v2383 = vld [vmem:[%s1136 + $0xb4] sm:$0xff]
        %v2384 = vld [vmem:[%s1136 + $0xbc] sm:$0xf]
        %v2385 = vld [vmem:[%s1140] sm:$0x7]
        %v2387 = vlaneseq
        %v2388 = vshrl.u32 %v2387, 7
        %v2389 = vsub.s32 0, %v2388
        %v2390 = vrot.slane %v2385, %v2389
        %v2391 = vlaneseq
        %v2392 = vshrl.u32 %v2391, 7
        %v2393 = vsub.s32 1, %v2392
        %v2394 = vrot.slane %v2385, %v2393
        %v2395 = vlaneseq
        %v2396 = vshrl.u32 %v2395, 7
        %v2397 = vsub.s32 2, %v2396
        %v2398 = vrot.slane %v2385, %v2397
        %v2434 = vunpack.c.l.b16 %v2353
        %v2435 = vunpack.c.h.b16 %v2353
        %v2436 = vunpack.c.l.b16 %v2354
        %v2437 = vunpack.c.l.b16 %v2355
        %v2438 = vunpack.c.h.b16 %v2355
        %v2439 = vunpack.c.l.b16 %v2356
        %v2440 = vunpack.c.l.b16 %v2357
        %v2441 = vunpack.c.h.b16 %v2357
        %v2442 = vunpack.c.l.b16 %v2358
        %v2443 = vunpack.c.l.b16 %v2359
        %v2444 = vunpack.c.h.b16 %v2359
        %v2445 = vunpack.c.l.b16 %v2360
        %v2446 = vunpack.c.l.b16 %v2361
        %v2447 = vunpack.c.h.b16 %v2361
        %v2448 = vunpack.c.l.b16 %v2362
        %v2449 = vunpack.c.l.b16 %v2363
        %v2450 = vunpack.c.h.b16 %v2363
        %v2451 = vunpack.c.l.b16 %v2364
        %v2452 = vunpack.c.l.b16 %v2365
        %v2453 = vunpack.c.h.b16 %v2365
        %v2454 = vunpack.c.l.b16 %v2366
        %v2455 = vunpack.c.l.b16 %v2367
        %v2456 = vunpack.c.h.b16 %v2367
        %v2457 = vunpack.c.l.b16 %v2368
        %v2458 = vunpack.c.l.b16 %v2369
        %v2459 = vunpack.c.h.b16 %v2369
        %v2460 = vunpack.c.l.b16 %v2370
        %v2461 = vunpack.c.l.b16 %v2371
        %v2462 = vunpack.c.h.b16 %v2371
        %v2463 = vunpack.c.l.b16 %v2372
        %v2464 = vunpack.c.l.b16 %v2373
        %v2465 = vunpack.c.h.b16 %v2373
        %v2466 = vunpack.c.l.b16 %v2374
        %v2467 = vunpack.c.l.b16 %v2375
        %v2468 = vunpack.c.h.b16 %v2375
        %v2469 = vunpack.c.l.b16 %v2376
        %v2470 = vunpack.c.l.b16 %v2377
        %v2471 = vunpack.c.h.b16 %v2377
        %v2472 = vunpack.c.l.b16 %v2378
        %v2473 = vunpack.c.l.b16 %v2379
        %v2474 = vunpack.c.h.b16 %v2379
        %v2475 = vunpack.c.l.b16 %v2380
        %v2476 = vunpack.c.l.b16 %v2381
        %v2477 = vunpack.c.h.b16 %v2381
        %v2478 = vunpack.c.l.b16 %v2382
        %v2479 = vunpack.c.l.b16 %v2383
        %v2480 = vunpack.c.h.b16 %v2383
        %v2481 = vunpack.c.l.b16 %v2384
        %v2482 = vpack.c.b16 %v2437, %v2434
        %v2483 = vpack.c.b16 %v2438, %v2435
        %v2484 = vpack.c.b16 %v2439, %v2436
        %v2485 = vpack.c.b16 %v2443, %v2440
        %v2486 = vpack.c.b16 %v2444, %v2441
        %v2487 = vpack.c.b16 %v2445, %v2442
        %v2488 = vpack.c.b16 %v2449, %v2446
        %v2489 = vpack.c.b16 %v2450, %v2447
        %v2490 = vpack.c.b16 %v2451, %v2448
        %v2491 = vpack.c.b16 %v2455, %v2452
        %v2492 = vpack.c.b16 %v2456, %v2453
        %v2493 = vpack.c.b16 %v2457, %v2454
        %v2494 = vpack.c.b16 %v2461, %v2458
        %v2495 = vpack.c.b16 %v2462, %v2459
        %v2496 = vpack.c.b16 %v2463, %v2460
        %v2497 = vpack.c.b16 %v2467, %v2464
        %v2498 = vpack.c.b16 %v2468, %v2465
        %v2499 = vpack.c.b16 %v2469, %v2466
        %v2500 = vpack.c.b16 %v2473, %v2470
        %v2501 = vpack.c.b16 %v2474, %v2471
        %v2502 = vpack.c.b16 %v2475, %v2472
        %v2503 = vpack.c.b16 %v2479, %v2476
        %v2504 = vpack.c.b16 %v2480, %v2477
        %v2505 = vpack.c.b16 %v2481, %v2478
        %2530 = vmatprep.subr.bf16.mxu0 %v2483
        %2531 = vmatpush1.bf16.msra.mxu0 %v2482
        %2532 = vmatprep.subr.bf16.mxu0 %v2486
        %2533 = vmatpush1.bf16.msra.mxu0 %v2485
        %2534 = vmatprep.subr.bf16.mxu0 %v2489
        %2535 = vmatpush1.bf16.msra.mxu0 %v2488
        %2536 = vmatprep.subr.bf16.mxu0 %v2492
        %2537 = vmatpush1.bf16.msra.mxu0 %v2491
        %2538 = vmatprep.subr.bf16.mxu0 %v2495
        %2539 = vmatpush1.bf16.msra.mxu0 %v2494
        %2540 = vmatprep.subr.bf16.mxu0 %v2498
        %2541 = vmatpush1.bf16.msra.mxu0 %v2497
        %2542 = vmatprep.subr.bf16.mxu0 %v2501
        %2543 = vmatpush1.bf16.msra.mxu0 %v2500
        %2544 = vmatprep.subr.bf16.mxu0 %v2504
        %2545 = vmatpush1.bf16.msra.mxu0 %v2503
        %2546 = vmatprep.subr.bf16.mxu0 0
        %2547 = vmatpush1.bf16.msra.mxu0 0
        %2548 = vmatprep.subr.bf16.mxu0 0
        %2549 = vmatpush1.bf16.msra.mxu0 0
        %2550 = vmatprep.subr.bf16.mxu0 0
        %2551 = vmatpush1.bf16.msra.mxu0 0
        %2552 = vmatprep.subr.bf16.mxu0 0
        %2553 = vmatpush1.bf16.msra.mxu0 0
        %2554 = vmatprep.subr.bf16.mxu0 0
        %2555 = vmatpush1.bf16.msra.mxu0 0
        %2556 = vmatprep.subr.bf16.mxu0 0
        %2557 = vmatpush1.bf16.msra.mxu0 0
        %2558 = vmatprep.subr.bf16.mxu0 0
        %2559 = vmatpush1.bf16.msra.mxu0 0
        %2560 = vmatprep.subr.bf16.mxu0 0
        %2561 = vmatpush1.bf16.msra.mxu0 0
        %2562 = vmatprep.mubr.bf16.mxu0 0
        %2563 = vmatmul.mubr.bf16.gmra.mrb[0].mxu0 %v2345
        %v2564 = vpop.f32.mrb[0].mxu0
        %v2565 = vadd.f32 %v2390, %v2564
        %v2566 = vpop.f32.mrb[0].mxu0
        %v2567 = vadd.f32 %v2394, %v2566
        %v2568 = vpop.f32.mrb[0].mxu0
        %v2569 = vadd.f32 %v2390, %v2568
        %v2570 = vpop.f32.mrb[0].mxu0
        %v2571 = vadd.f32 %v2394, %v2570
        %2572 = vmatprep.mubr.bf16.mxu0 0
        %2573 = vmatmul.mubr.bf16.gmra.mrb[0].mxu0 %v2346
        %v2574 = vpop.f32.mrb[0].mxu0
        %v2575 = vadd.f32 %v2390, %v2574
        %v2576 = vpop.f32.mrb[0].mxu0
        %v2577 = vadd.f32 %v2394, %v2576
        %v2578 = vpop.f32.mrb[0].mxu0
        %v2579 = vadd.f32 %v2390, %v2578
        %v2580 = vpop.f32.mrb[0].mxu0
        %v2581 = vadd.f32 %v2394, %v2580
        %2582 = vmatprep.mubr.bf16.mxu0 0
        %2583 = vmatmul.mubr.bf16.gmra.mrb[0].mxu0 %v2347
        %v2584 = vpop.f32.mrb[0].mxu0
        %v2585 = vadd.f32 %v2390, %v2584
        %v2586 = vpop.f32.mrb[0].mxu0
        %v2587 = vadd.f32 %v2394, %v2586
        %v2588 = vpop.f32.mrb[0].mxu0
        %v2589 = vadd.f32 %v2390, %v2588
        %v2590 = vpop.f32.mrb[0].mxu0
        %v2591 = vadd.f32 %v2394, %v2590
        %2592 = vmatprep.mubr.bf16.mxu0 0
        %2593 = vmatmul.mubr.bf16.gmra.mrb[0].mxu0 %v2348
        %v2594 = vpop.f32.mrb[0].mxu0
        %v2595 = vadd.f32 %v2390, %v2594
        %v2596 = vpop.f32.mrb[0].mxu0
        %v2597 = vadd.f32 %v2394, %v2596
        %v2598 = vpop.f32.mrb[0].mxu0
        %v2599 = vadd.f32 %v2390, %v2598
        %v2600 = vpop.f32.mrb[0].mxu0
        %v2601 = vadd.f32 %v2394, %v2600
        %2602 = vmatprep.mubr.bf16.mxu0 0
        %2603 = vmatmul.mubr.bf16.gmra.mrb[0].mxu0 %v2349
        %v2604 = vpop.f32.mrb[0].mxu0
        %v2605 = vadd.f32 %v2390, %v2604
        %v2606 = vpop.f32.mrb[0].mxu0
        %v2607 = vadd.f32 %v2394, %v2606
        %v2608 = vpop.f32.mrb[0].mxu0
        %v2609 = vadd.f32 %v2390, %v2608
        %v2610 = vpop.f32.mrb[0].mxu0
        %v2611 = vadd.f32 %v2394, %v2610
        %2612 = vmatprep.mubr.bf16.mxu0 0
        %2613 = vmatmul.mubr.bf16.gmra.mrb[0].mxu0 %v2350
        %v2614 = vpop.f32.mrb[0].mxu0
        %v2615 = vadd.f32 %v2390, %v2614
        %v2616 = vpop.f32.mrb[0].mxu0
        %v2617 = vadd.f32 %v2394, %v2616
        %v2618 = vpop.f32.mrb[0].mxu0
        %v2619 = vadd.f32 %v2390, %v2618
        %v2620 = vpop.f32.mrb[0].mxu0
        %v2621 = vadd.f32 %v2394, %v2620
        %2622 = vmatprep.mubr.bf16.mxu0 0
        %2623 = vmatmul.mubr.bf16.gmra.mrb[0].mxu0 %v2351
        %v2624 = vpop.f32.mrb[0].mxu0
        %v2625 = vadd.f32 %v2390, %v2624
        %v2626 = vpop.f32.mrb[0].mxu0
        %v2627 = vadd.f32 %v2394, %v2626
        %v2628 = vpop.f32.mrb[0].mxu0
        %v2629 = vadd.f32 %v2390, %v2628
        %v2630 = vpop.f32.mrb[0].mxu0
        %v2631 = vadd.f32 %v2394, %v2630
        %2632 = vmatprep.mubr.bf16.mxu0 0
        %2633 = vmatmul.mubr.bf16.gmra.mrb[0].mxu0 %v2352
        %v2634 = vpop.f32.mrb[0].mxu0
        %v2635 = vadd.f32 %v2390, %v2634
        %v2636 = vpop.f32.mrb[0].mxu0
        %v2637 = vadd.f32 %v2394, %v2636
        %v2638 = vpop.f32.mrb[0].mxu0
        %v2639 = vadd.f32 %v2390, %v2638
        %v2640 = vpop.f32.mrb[0].mxu0
        %v2641 = vadd.f32 %v2394, %v2640
        %2642 = vdwg.mxu0
        %2643 = vmatprep.subr.bf16.mxu0 0
        %2644 = vmatpush1.bf16.msra.mxu0 %v2484
        %2645 = vmatprep.subr.bf16.mxu0 0
        %2646 = vmatpush1.bf16.msra.mxu0 %v2487
        %2647 = vmatprep.subr.bf16.mxu0 0
        %2648 = vmatpush1.bf16.msra.mxu0 %v2490
        %2649 = vmatprep.subr.bf16.mxu0 0
        %2650 = vmatpush1.bf16.msra.mxu0 %v2493
        %2651 = vmatprep.subr.bf16.mxu0 0
        %2652 = vmatpush1.bf16.msra.mxu0 %v2496
        %2653 = vmatprep.subr.bf16.mxu0 0
        %2654 = vmatpush1.bf16.msra.mxu0 %v2499
        %2655 = vmatprep.subr.bf16.mxu0 0
        %2656 = vmatpush1.bf16.msra.mxu0 %v2502
        %2657 = vmatprep.subr.bf16.mxu0 0
        %2658 = vmatpush1.bf16.msra.mxu0 %v2505
        %2659 = vmatprep.subr.bf16.mxu0 0
        %2660 = vmatpush1.bf16.msra.mxu0 0
        %2661 = vmatprep.subr.bf16.mxu0 0
        %2662 = vmatpush1.bf16.msra.mxu0 0
        %2663 = vmatprep.subr.bf16.mxu0 0
        %2664 = vmatpush1.bf16.msra.mxu0 0
        %2665 = vmatprep.subr.bf16.mxu0 0
        %2666 = vmatpush1.bf16.msra.mxu0 0
        %2667 = vmatprep.subr.bf16.mxu0 0
        %2668 = vmatpush1.bf16.msra.mxu0 0
        %2669 = vmatprep.subr.bf16.mxu0 0
        %2670 = vmatpush1.bf16.msra.mxu0 0
        %2671 = vmatprep.subr.bf16.mxu0 0
        %2672 = vmatpush1.bf16.msra.mxu0 0
        %2673 = vmatprep.subr.bf16.mxu0 0
        %2674 = vmatpush1.bf16.msra.mxu0 0
        %2675 = vmatprep.mubr.bf16.mxu0 0
        %2676 = vmatmul.mubr.bf16.gmra.mrb[0].mxu0 %v2345
        %v2677 = vpop.f32.mrb[0].mxu0
        %v2678 = vadd.f32 %v2398, %v2677
        %v2679 = vpop.f32.mrb[0].mxu0
        %v2680 = vpop.f32.mrb[0].mxu0
        %v2681 = vadd.f32 %v2398, %v2680
        %v2682 = vpop.f32.mrb[0].mxu0
        %2683 = vmatprep.mubr.bf16.mxu0 0
        %2684 = vmatmul.mubr.bf16.gmra.mrb[0].mxu0 %v2346
        %v2685 = vpop.f32.mrb[0].mxu0
        %v2686 = vadd.f32 %v2398, %v2685
        %v2687 = vpop.f32.mrb[0].mxu0
        %v2688 = vpop.f32.mrb[0].mxu0
        %v2689 = vadd.f32 %v2398, %v2688
        %v2690 = vpop.f32.mrb[0].mxu0
        %2691 = vmatprep.mubr.bf16.mxu0 0
        %2692 = vmatmul.mubr.bf16.gmra.mrb[0].mxu0 %v2347
        %v2693 = vpop.f32.mrb[0].mxu0
        %v2694 = vadd.f32 %v2398, %v2693
        %v2695 = vpop.f32.mrb[0].mxu0
        %v2696 = vpop.f32.mrb[0].mxu0
        %v2697 = vadd.f32 %v2398, %v2696
        %v2698 = vpop.f32.mrb[0].mxu0
        %2699 = vmatprep.mubr.bf16.mxu0 0
        %2700 = vmatmul.mubr.bf16.gmra.mrb[0].mxu0 %v2348
        %v2701 = vpop.f32.mrb[0].mxu0
        %v2702 = vadd.f32 %v2398, %v2701
        %v2703 = vpop.f32.mrb[0].mxu0
        %v2704 = vpop.f32.mrb[0].mxu0
        %v2705 = vadd.f32 %v2398, %v2704
        %v2706 = vpop.f32.mrb[0].mxu0
        %2707 = vmatprep.mubr.bf16.mxu0 0
        %2708 = vmatmul.mubr.bf16.gmra.mrb[0].mxu0 %v2349
        %v2709 = vpop.f32.mrb[0].mxu0
        %v2710 = vadd.f32 %v2398, %v2709
        %v2711 = vpop.f32.mrb[0].mxu0
        %v2712 = vpop.f32.mrb[0].mxu0
        %v2713 = vadd.f32 %v2398, %v2712
        %v2714 = vpop.f32.mrb[0].mxu0
        %2715 = vmatprep.mubr.bf16.mxu0 0
        %2716 = vmatmul.mubr.bf16.gmra.mrb[0].mxu0 %v2350
        %v2717 = vpop.f32.mrb[0].mxu0
        %v2718 = vadd.f32 %v2398, %v2717
        %v2719 = vpop.f32.mrb[0].mxu0
        %v2720 = vpop.f32.mrb[0].mxu0
        %v2721 = vadd.f32 %v2398, %v2720
        %v2722 = vpop.f32.mrb[0].mxu0
        %2723 = vmatprep.mubr.bf16.mxu0 0
        %2724 = vmatmul.mubr.bf16.gmra.mrb[0].mxu0 %v2351
        %v2725 = vpop.f32.mrb[0].mxu0
        %v2726 = vadd.f32 %v2398, %v2725
        %v2727 = vpop.f32.mrb[0].mxu0
        %v2728 = vpop.f32.mrb[0].mxu0
        %v2729 = vadd.f32 %v2398, %v2728
        %v2730 = vpop.f32.mrb[0].mxu0
        %2731 = vmatprep.mubr.bf16.mxu0 0
        %2732 = vmatmul.mubr.bf16.gmra.mrb[0].mxu0 %v2352
        %v2733 = vpop.f32.mrb[0].mxu0
        %v2734 = vadd.f32 %v2398, %v2733
        %v2735 = vpop.f32.mrb[0].mxu0
        %v2736 = vpop.f32.mrb[0].mxu0
        %v2737 = vadd.f32 %v2398, %v2736
        %v2738 = vpop.f32.mrb[0].mxu0
        %2739 = vdwg.mxu0
        %v2740 = vpack.c.bf16 %v2569, %v2565
        %v2741 = vpack.c.bf16 %v2579, %v2575
        %v2742 = vpack.c.bf16 %v2589, %v2585
        %v2743 = vpack.c.bf16 %v2599, %v2595
        %2744 = vxpose.xlu0.b32.start [1/16] %v2567, 128
        %2745 = vxpose.xlu0.b32.cont [2/16] %v2571, 128
        %2746 = vxpose.xlu0.b32.cont [3/16] %v2577, 128
        %2747 = vxpose.xlu0.b32.cont [4/16] %v2581, 128
        %2748 = vxpose.xlu0.b32.cont [5/16] %v2587, 128
        %2749 = vxpose.xlu0.b32.cont [6/16] %v2591, 128
        %2750 = vxpose.xlu0.b32.cont [7/16] %v2597, 128
        %2751 = vxpose.xlu0.b32.cont [8/16] %v2601, 128
        %2752 = vxpose.xlu0.b32.cont [9/16] 0.0, 128
        %2753 = vxpose.xlu0.b32.cont [10/16] 0.0, 128
        %2754 = vxpose.xlu0.b32.cont [11/16] 0.0, 128
        %2755 = vxpose.xlu0.b32.cont [12/16] 0.0, 128
        %2756 = vxpose.xlu0.b32.cont [13/16] 0.0, 128
        %2757 = vxpose.xlu0.b32.cont [14/16] 0.0, 128
        %2758 = vxpose.xlu0.b32.cont [15/16] 0.0, 128
        %2759 = vxpose.xlu0.b32.end [16/16] 0.0, 128
        %v2760 = vpop.trf.xlu0
        %v2761 = vpop.trf.xlu0
        %v2762 = vpop.trf.xlu0
        %v2763 = vpop.trf.xlu0
        %v2764 = vpop.trf.xlu0
        %v2765 = vpop.trf.xlu0
        %v2766 = vpop.trf.xlu0
        %v2767 = vpop.trf.xlu0
        %v2768 = vpop.trf.xlu0
        %v2769 = vpop.trf.xlu0
        %v2770 = vpop.trf.xlu0
        %v2771 = vpop.trf.xlu0
        %v2772 = vpop.trf.xlu0
        %v2773 = vpop.trf.xlu0
        %v2774 = vpop.trf.xlu0
        %v2775 = vpop.trf.xlu0
        %v2776 = vpack.c.bf16 %v2761, %v2760
        %v2777 = vpack.c.bf16 %v2763, %v2762
        %v2778 = vpack.c.bf16 %v2765, %v2764
        %v2779 = vpack.c.bf16 %v2767, %v2766
        %v2780 = vpack.c.bf16 %v2769, %v2768
        %v2781 = vpack.c.bf16 %v2771, %v2770
        %v2782 = vpack.c.bf16 %v2773, %v2772
        %v2783 = vpack.c.bf16 %v2775, %v2774
        %2784 = vmatprep.subr.bf16.mxu0 0
        %2785 = vmatpush1.bf16.msra.mxu0 %v2776
        %2786 = vmatprep.subr.bf16.mxu0 0
        %2787 = vmatpush1.bf16.msra.mxu0 %v2777
        %2788 = vmatprep.subr.bf16.mxu0 0
        %2789 = vmatpush1.bf16.msra.mxu0 %v2778
        %2790 = vmatprep.subr.bf16.mxu0 0
        %2791 = vmatpush1.bf16.msra.mxu0 %v2779
        %2792 = vmatprep.subr.bf16.mxu0 0
        %2793 = vmatpush1.bf16.msra.mxu0 %v2780
        %2794 = vmatprep.subr.bf16.mxu0 0
        %2795 = vmatpush1.bf16.msra.mxu0 %v2781
        %2796 = vmatprep.subr.bf16.mxu0 0
        %2797 = vmatpush1.bf16.msra.mxu0 %v2782
        %2798 = vmatprep.subr.bf16.mxu0 0
        %2799 = vmatpush1.bf16.msra.mxu0 %v2783
        %2800 = vmatprep.subr.bf16.mxu0 0
        %2801 = vmatpush1.bf16.msra.mxu0 0
        %2802 = vmatprep.subr.bf16.mxu0 0
        %2803 = vmatpush1.bf16.msra.mxu0 0
        %2804 = vmatprep.subr.bf16.mxu0 0
        %2805 = vmatpush1.bf16.msra.mxu0 0
        %2806 = vmatprep.subr.bf16.mxu0 0
        %2807 = vmatpush1.bf16.msra.mxu0 0
        %2808 = vmatprep.subr.bf16.mxu0 0
        %2809 = vmatpush1.bf16.msra.mxu0 0
        %2810 = vmatprep.subr.bf16.mxu0 0
        %2811 = vmatpush1.bf16.msra.mxu0 0
        %2812 = vmatprep.subr.bf16.mxu0 0
        %2813 = vmatpush1.bf16.msra.mxu0 0
        %2814 = vmatprep.subr.bf16.mxu0 0
        %2815 = vmatpush1.bf16.msra.mxu0 0
        %2816 = vmatprep.mubr.bf16.mxu0 0
        %2817 = vmatmul.mubr.bf16.gmra.mrb[0].mxu0 %v2740
        %v2818 = vpop.f32.mrb[0].mxu0
        %v2819 = vadd.f32 0.0, %v2818
        %v2820 = vpop.f32.mrb[0].mxu0
        %v2821 = vpop.f32.mrb[0].mxu0
        %v2822 = vadd.f32 0.0, %v2821
        %v2823 = vpop.f32.mrb[0].mxu0
        %2824 = vmatprep.mubr.bf16.mxu0 0
        %2825 = vmatmul.mubr.bf16.gmra.mrb[0].mxu0 %v2741
        %v2826 = vpop.f32.mrb[0].mxu0
        %v2827 = vadd.f32 0.0, %v2826
        %v2828 = vpop.f32.mrb[0].mxu0
        %v2829 = vpop.f32.mrb[0].mxu0
        %v2830 = vadd.f32 0.0, %v2829
        %v2831 = vpop.f32.mrb[0].mxu0
        %2832 = vmatprep.mubr.bf16.mxu0 0
        %2833 = vmatmul.mubr.bf16.gmra.mrb[0].mxu0 %v2742
        %v2834 = vpop.f32.mrb[0].mxu0
        %v2835 = vadd.f32 0.0, %v2834
        %v2836 = vpop.f32.mrb[0].mxu0
        %v2837 = vpop.f32.mrb[0].mxu0
        %v2838 = vadd.f32 0.0, %v2837
        %v2839 = vpop.f32.mrb[0].mxu0
        %2840 = vmatprep.mubr.bf16.mxu0 0
        %2841 = vmatmul.mubr.bf16.gmra.mrb[0].mxu0 %v2743
        %v2842 = vpop.f32.mrb[0].mxu0
        %v2843 = vadd.f32 0.0, %v2842
        %v2844 = vpop.f32.mrb[0].mxu0
        %v2845 = vpop.f32.mrb[0].mxu0
        %v2846 = vadd.f32 0.0, %v2845
        %v2847 = vpop.f32.mrb[0].mxu0
        %2848 = vdwg.mxu0
        %v2849 = vmul.f32 %v2819, 0.088388346
        %v2850 = vmul.f32 %v2822, 0.088388346
        %v2851 = vmul.f32 %v2827, 0.088388346
        %v2852 = vmul.f32 %v2830, 0.088388346
        %v2853 = vmul.f32 %v2835, 0.088388346
        %v2854 = vmul.f32 %v2838, 0.088388346
        %v2855 = vmul.f32 %v2843, 0.088388346
        %v2856 = vmul.f32 %v2846, 0.088388346
        %vm2857 = vcmask 523264
        %v2858 = vsel %vm2857, %v2849, -inf
        %2859 = vmax.xlane.f32.xlu0 %v2858
        %v2860 = vpop.xlane.xlu0 %2859
        %v2861 = vsel %vm2857, %v2850, -inf
        %2862 = vmax.xlane.f32.xlu0 %v2861
        %v2863 = vpop.xlane.xlu0 %2862
        %v2864 = vsel %vm2857, %v2851, -inf
        %2865 = vmax.xlane.f32.xlu0 %v2864
        %v2866 = vpop.xlane.xlu0 %2865
        %v2867 = vsel %vm2857, %v2852, -inf
        %2868 = vmax.xlane.f32.xlu0 %v2867
        %v2869 = vpop.xlane.xlu0 %2868
        %v2870 = vsel %vm2857, %v2853, -inf
        %2871 = vmax.xlane.f32.xlu0 %v2870
        %v2872 = vpop.xlane.xlu0 %2871
        %v2873 = vsel %vm2857, %v2854, -inf
        %2874 = vmax.xlane.f32.xlu0 %v2873
        %v2875 = vpop.xlane.xlu0 %2874
        %v2876 = vsel %vm2857, %v2855, -inf
        %2877 = vmax.xlane.f32.xlu0 %v2876
        %v2878 = vpop.xlane.xlu0 %2877
        %v2879 = vsel %vm2857, %v2856, -inf
        %2880 = vmax.xlane.f32.xlu0 %v2879
        %v2881 = vpop.xlane.xlu0 %2880
        %v2882 = vsub.f32 %v2849, %v2860
        %v2883 = vsub.f32 %v2850, %v2863
        %v2884 = vsub.f32 %v2851, %v2866
        %v2885 = vsub.f32 %v2852, %v2869
        %v2886 = vsub.f32 %v2853, %v2872
        %v2887 = vsub.f32 %v2854, %v2875
        %v2888 = vsub.f32 %v2855, %v2878
        %v2889 = vsub.f32 %v2856, %v2881
        %v2890 = vmul.f32 %v2882, 1.442695
        %v2891 = vpow.pop %v2890
        %v2892 = vmul.f32 %v2883, 1.442695
        %v2893 = vpow.pop %v2892
        %v2894 = vmul.f32 %v2884, 1.442695
        %v2895 = vpow.pop %v2894
        %v2896 = vmul.f32 %v2885, 1.442695
        %v2897 = vpow.pop %v2896
        %v2898 = vmul.f32 %v2886, 1.442695
        %v2899 = vpow.pop %v2898
        %v2900 = vmul.f32 %v2887, 1.442695
        %v2901 = vpow.pop %v2900
        %v2902 = vmul.f32 %v2888, 1.442695
        %v2903 = vpow.pop %v2902
        %v2904 = vmul.f32 %v2889, 1.442695
        %v2905 = vpow.pop %v2904
        %v2906 = vsel %vm2857, %v2891, 0.0
        %2907 = vadd.xlane.f32.xlu0 %v2906
        %v2908 = vpop.xlane.xlu0 %2907
        %v2909 = vsel %vm2857, %v2893, 0.0
        %2910 = vadd.xlane.f32.xlu0 %v2909
        %v2911 = vpop.xlane.xlu0 %2910
        %v2912 = vsel %vm2857, %v2895, 0.0
        %2913 = vadd.xlane.f32.xlu0 %v2912
        %v2914 = vpop.xlane.xlu0 %2913
        %v2915 = vsel %vm2857, %v2897, 0.0
        %2916 = vadd.xlane.f32.xlu0 %v2915
        %v2917 = vpop.xlane.xlu0 %2916
        %v2918 = vsel %vm2857, %v2899, 0.0
        %2919 = vadd.xlane.f32.xlu0 %v2918
        %v2920 = vpop.xlane.xlu0 %2919
        %v2921 = vsel %vm2857, %v2901, 0.0
        %2922 = vadd.xlane.f32.xlu0 %v2921
        %v2923 = vpop.xlane.xlu0 %2922
        %v2924 = vsel %vm2857, %v2903, 0.0
        %2925 = vadd.xlane.f32.xlu0 %v2924
        %v2926 = vpop.xlane.xlu0 %2925
        %v2927 = vsel %vm2857, %v2905, 0.0
        %2928 = vadd.xlane.f32.xlu0 %v2927
        %v2929 = vpop.xlane.xlu0 %2928
        %v2930 = vrcp.pop %v2908
        %v2931 = vrcp.pop %v2911
        %v2932 = vrcp.pop %v2914
        %v2933 = vrcp.pop %v2917
        %v2934 = vrcp.pop %v2920
        %v2935 = vrcp.pop %v2923
        %v2936 = vrcp.pop %v2926
        %v2937 = vrcp.pop %v2929
        %v2938 = vmul.f32 %v2891, %v2930
        %v2939 = vmul.f32 %v2893, %v2931
        %v2940 = vmul.f32 %v2895, %v2932
        %v2941 = vmul.f32 %v2897, %v2933
        %v2942 = vmul.f32 %v2899, %v2934
        %v2943 = vmul.f32 %v2901, %v2935
        %v2944 = vmul.f32 %v2903, %v2936
        %v2945 = vmul.f32 %v2905, %v2937
        %v2946 = vpack.c.bf16 %v2939, %v2938
        %v2947 = vpack.c.bf16 %v2941, %v2940
        %v2948 = vpack.c.bf16 %v2943, %v2942
        %v2949 = vpack.c.bf16 %v2945, %v2944
        %v2950 = vpack.c.bf16 %v2681, %v2678
        %v2951 = vpack.c.bf16 %v2689, %v2686
        %v2952 = vpack.c.bf16 %v2697, %v2694
        %v2953 = vpack.c.bf16 %v2705, %v2702
        %v2955 = vsel %vm2857, %v2946, 0
        %v2958 = vsel %vm2857, %v2947, 0
        %v2961 = vsel %vm2857, %v2948, 0
        %v2964 = vsel %vm2857, %v2949, 0
        %2966 = vmatprep.subr.bf16.mxu0 0
        %2967 = vmatpush1.bf16.msra.mxu0 %v2950
        %2968 = vmatprep.subr.bf16.mxu0 0
        %2969 = vmatpush1.bf16.msra.mxu0 %v2951
        %2970 = vmatprep.subr.bf16.mxu0 0
        %2971 = vmatpush1.bf16.msra.mxu0 %v2952
        %2972 = vmatprep.subr.bf16.mxu0 0
        %2973 = vmatpush1.bf16.msra.mxu0 %v2953
        %2974 = vmatprep.subr.bf16.mxu0 0
        %2975 = vmatpush1.bf16.msra.mxu0 0
        %2976 = vmatprep.subr.bf16.mxu0 0
        %2977 = vmatpush1.bf16.msra.mxu0 0
        %2978 = vmatprep.subr.bf16.mxu0 0
        %2979 = vmatpush1.bf16.msra.mxu0 0
        %2980 = vmatprep.subr.bf16.mxu0 0
        %2981 = vmatpush1.bf16.msra.mxu0 0
        %2982 = vmatprep.subr.bf16.mxu0 0
        %2983 = vmatpush1.bf16.msra.mxu0 0
        %2984 = vmatprep.subr.bf16.mxu0 0
        %2985 = vmatpush1.bf16.msra.mxu0 0
        %2986 = vmatprep.subr.bf16.mxu0 0
        %2987 = vmatpush1.bf16.msra.mxu0 0
        %2988 = vmatprep.subr.bf16.mxu0 0
        %2989 = vmatpush1.bf16.msra.mxu0 0
        %2990 = vmatprep.subr.bf16.mxu0 0
        %2991 = vmatpush1.bf16.msra.mxu0 0
        %2992 = vmatprep.subr.bf16.mxu0 0
        %2993 = vmatpush1.bf16.msra.mxu0 0
        %2994 = vmatprep.subr.bf16.mxu0 0
        %2995 = vmatpush1.bf16.msra.mxu0 0
        %2996 = vmatprep.subr.bf16.mxu0 0
        %2997 = vmatpush1.bf16.msra.mxu0 0
        %2998 = vmatprep.mubr.bf16.mxu0 0
        %2999 = vmatmul.mubr.bf16.gmra.mrb[0].mxu0 %v2955
        %v3000 = vpop.f32.mrb[0].mxu0
        %v3001 = vadd.f32 0.0, %v3000
        %v3002 = vpop.f32.mrb[0].mxu0
        %v3003 = vpop.f32.mrb[0].mxu0
        %v3004 = vadd.f32 0.0, %v3003
        %v3005 = vpop.f32.mrb[0].mxu0
        %3006 = vmatprep.mubr.bf16.mxu0 0
        %3007 = vmatmul.mubr.bf16.gmra.mrb[0].mxu0 %v2958
        %v3008 = vpop.f32.mrb[0].mxu0
        %v3009 = vadd.f32 0.0, %v3008
        %v3010 = vpop.f32.mrb[0].mxu0
        %v3011 = vpop.f32.mrb[0].mxu0
        %v3012 = vadd.f32 0.0, %v3011
        %v3013 = vpop.f32.mrb[0].mxu0
        %3014 = vmatprep.mubr.bf16.mxu0 0
        %3015 = vmatmul.mubr.bf16.gmra.mrb[0].mxu0 %v2961
        %v3016 = vpop.f32.mrb[0].mxu0
        %v3017 = vadd.f32 0.0, %v3016
        %v3018 = vpop.f32.mrb[0].mxu0
        %v3019 = vpop.f32.mrb[0].mxu0
        %v3020 = vadd.f32 0.0, %v3019
        %v3021 = vpop.f32.mrb[0].mxu0
        %3022 = vmatprep.mubr.bf16.mxu0 0
        %3023 = vmatmul.mubr.bf16.gmra.mrb[0].mxu0 %v2964
        %v3024 = vpop.f32.mrb[0].mxu0
        %v3025 = vadd.f32 0.0, %v3024
        %v3026 = vpop.f32.mrb[0].mxu0
        %v3027 = vpop.f32.mrb[0].mxu0
        %v3028 = vadd.f32 0.0, %v3027
        %v3029 = vpop.f32.mrb[0].mxu0
        %3030 = vdwg.mxu0
        %v3031 = vpack.c.bf16 %v2609, %v2605
        %v3032 = vpack.c.bf16 %v2619, %v2615
        %v3033 = vpack.c.bf16 %v2629, %v2625
        %v3034 = vpack.c.bf16 %v2639, %v2635
        %3035 = vxpose.xlu0.b32.start [1/16] %v2607, 128
        %3036 = vxpose.xlu0.b32.cont [2/16] %v2611, 128
        %3037 = vxpose.xlu0.b32.cont [3/16] %v2617, 128
        %3038 = vxpose.xlu0.b32.cont [4/16] %v2621, 128
        %3039 = vxpose.xlu0.b32.cont [5/16] %v2627, 128
        %3040 = vxpose.xlu0.b32.cont [6/16] %v2631, 128
        %3041 = vxpose.xlu0.b32.cont [7/16] %v2637, 128
        %3042 = vxpose.xlu0.b32.cont [8/16] %v2641, 128
        %3043 = vxpose.xlu0.b32.cont [9/16] 0.0, 128
        %3044 = vxpose.xlu0.b32.cont [10/16] 0.0, 128
        %3045 = vxpose.xlu0.b32.cont [11/16] 0.0, 128
        %3046 = vxpose.xlu0.b32.cont [12/16] 0.0, 128
        %3047 = vxpose.xlu0.b32.cont [13/16] 0.0, 128
        %3048 = vxpose.xlu0.b32.cont [14/16] 0.0, 128
        %3049 = vxpose.xlu0.b32.cont [15/16] 0.0, 128
        %3050 = vxpose.xlu0.b32.end [16/16] 0.0, 128
        %v3051 = vpop.trf.xlu0
        %v3052 = vpop.trf.xlu0
        %v3053 = vpop.trf.xlu0
        %v3054 = vpop.trf.xlu0
        %v3055 = vpop.trf.xlu0
        %v3056 = vpop.trf.xlu0
        %v3057 = vpop.trf.xlu0
        %v3058 = vpop.trf.xlu0
        %v3059 = vpop.trf.xlu0
        %v3060 = vpop.trf.xlu0
        %v3061 = vpop.trf.xlu0
        %v3062 = vpop.trf.xlu0
        %v3063 = vpop.trf.xlu0
        %v3064 = vpop.trf.xlu0
        %v3065 = vpop.trf.xlu0
        %v3066 = vpop.trf.xlu0
        %v3067 = vpack.c.bf16 %v3052, %v3051
        %v3068 = vpack.c.bf16 %v3054, %v3053
        %v3069 = vpack.c.bf16 %v3056, %v3055
        %v3070 = vpack.c.bf16 %v3058, %v3057
        %v3071 = vpack.c.bf16 %v3060, %v3059
        %v3072 = vpack.c.bf16 %v3062, %v3061
        %v3073 = vpack.c.bf16 %v3064, %v3063
        %v3074 = vpack.c.bf16 %v3066, %v3065
        %3075 = vmatprep.subr.bf16.mxu0 0
        %3076 = vmatpush1.bf16.msra.mxu0 %v3067
        %3077 = vmatprep.subr.bf16.mxu0 0
        %3078 = vmatpush1.bf16.msra.mxu0 %v3068
        %3079 = vmatprep.subr.bf16.mxu0 0
        %3080 = vmatpush1.bf16.msra.mxu0 %v3069
        %3081 = vmatprep.subr.bf16.mxu0 0
        %3082 = vmatpush1.bf16.msra.mxu0 %v3070
        %3083 = vmatprep.subr.bf16.mxu0 0
        %3084 = vmatpush1.bf16.msra.mxu0 %v3071
        %3085 = vmatprep.subr.bf16.mxu0 0
        %3086 = vmatpush1.bf16.msra.mxu0 %v3072
        %3087 = vmatprep.subr.bf16.mxu0 0
        %3088 = vmatpush1.bf16.msra.mxu0 %v3073
        %3089 = vmatprep.subr.bf16.mxu0 0
        %3090 = vmatpush1.bf16.msra.mxu0 %v3074
        %3091 = vmatprep.subr.bf16.mxu0 0
        %3092 = vmatpush1.bf16.msra.mxu0 0
        %3093 = vmatprep.subr.bf16.mxu0 0
        %3094 = vmatpush1.bf16.msra.mxu0 0
        %3095 = vmatprep.subr.bf16.mxu0 0
        %3096 = vmatpush1.bf16.msra.mxu0 0
        %3097 = vmatprep.subr.bf16.mxu0 0
        %3098 = vmatpush1.bf16.msra.mxu0 0
        %3099 = vmatprep.subr.bf16.mxu0 0
        %3100 = vmatpush1.bf16.msra.mxu0 0
        %3101 = vmatprep.subr.bf16.mxu0 0
        %3102 = vmatpush1.bf16.msra.mxu0 0
        %3103 = vmatprep.subr.bf16.mxu0 0
        %3104 = vmatpush1.bf16.msra.mxu0 0
        %3105 = vmatprep.subr.bf16.mxu0 0
        %3106 = vmatpush1.bf16.msra.mxu0 0
        %3107 = vmatprep.mubr.bf16.mxu0 0
        %3108 = vmatmul.mubr.bf16.gmra.mrb[0].mxu0 %v3031
        %v3109 = vpop.f32.mrb[0].mxu0
        %v3110 = vadd.f32 0.0, %v3109
        %v3111 = vpop.f32.mrb[0].mxu0
        %v3112 = vpop.f32.mrb[0].mxu0
        %v3113 = vadd.f32 0.0, %v3112
        %v3114 = vpop.f32.mrb[0].mxu0
        %3115 = vmatprep.mubr.bf16.mxu0 0
        %3116 = vmatmul.mubr.bf16.gmra.mrb[0].mxu0 %v3032
        %v3117 = vpop.f32.mrb[0].mxu0
        %v3118 = vadd.f32 0.0, %v3117
        %v3119 = vpop.f32.mrb[0].mxu0
        %v3120 = vpop.f32.mrb[0].mxu0
        %v3121 = vadd.f32 0.0, %v3120
        %v3122 = vpop.f32.mrb[0].mxu0
        %3123 = vmatprep.mubr.bf16.mxu0 0
        %3124 = vmatmul.mubr.bf16.gmra.mrb[0].mxu0 %v3033
        %v3125 = vpop.f32.mrb[0].mxu0
        %v3126 = vadd.f32 0.0, %v3125
        %v3127 = vpop.f32.mrb[0].mxu0
        %v3128 = vpop.f32.mrb[0].mxu0
        %v3129 = vadd.f32 0.0, %v3128
        %v3130 = vpop.f32.mrb[0].mxu0
        %3131 = vmatprep.mubr.bf16.mxu0 0
        %3132 = vmatmul.mubr.bf16.gmra.mrb[0].mxu0 %v3034
        %v3133 = vpop.f32.mrb[0].mxu0
        %v3134 = vadd.f32 0.0, %v3133
        %v3135 = vpop.f32.mrb[0].mxu0
        %v3136 = vpop.f32.mrb[0].mxu0
        %v3137 = vadd.f32 0.0, %v3136
        %v3138 = vpop.f32.mrb[0].mxu0
        %3139 = vdwg.mxu0
        %v3140 = vmul.f32 %v3110, 0.088388346
        %v3141 = vmul.f32 %v3113, 0.088388346
        %v3142 = vmul.f32 %v3118, 0.088388346
        %v3143 = vmul.f32 %v3121, 0.088388346
        %v3144 = vmul.f32 %v3126, 0.088388346
        %v3145 = vmul.f32 %v3129, 0.088388346
        %v3146 = vmul.f32 %v3134, 0.088388346
        %v3147 = vmul.f32 %v3137, 0.088388346
        %v3148 = vsel %vm2857, %v3140, -inf
        %3149 = vmax.xlane.f32.xlu0 %v3148
        %v3150 = vpop.xlane.xlu0 %3149
        %v3151 = vsel %vm2857, %v3141, -inf
        %3152 = vmax.xlane.f32.xlu0 %v3151
        %v3153 = vpop.xlane.xlu0 %3152
        %v3154 = vsel %vm2857, %v3142, -inf
        %3155 = vmax.xlane.f32.xlu0 %v3154
        %v3156 = vpop.xlane.xlu0 %3155
        %v3157 = vsel %vm2857, %v3143, -inf
        %3158 = vmax.xlane.f32.xlu0 %v3157
        %v3159 = vpop.xlane.xlu0 %3158
        %v3160 = vsel %vm2857, %v3144, -inf
        %3161 = vmax.xlane.f32.xlu0 %v3160
        %v3162 = vpop.xlane.xlu0 %3161
        %v3163 = vsel %vm2857, %v3145, -inf
        %3164 = vmax.xlane.f32.xlu0 %v3163
        %v3165 = vpop.xlane.xlu0 %3164
        %v3166 = vsel %vm2857, %v3146, -inf
        %3167 = vmax.xlane.f32.xlu0 %v3166
        %v3168 = vpop.xlane.xlu0 %3167
        %v3169 = vsel %vm2857, %v3147, -inf
        %3170 = vmax.xlane.f32.xlu0 %v3169
        %v3171 = vpop.xlane.xlu0 %3170
        %v3172 = vsub.f32 %v3140, %v3150
        %v3173 = vsub.f32 %v3141, %v3153
        %v3174 = vsub.f32 %v3142, %v3156
        %v3175 = vsub.f32 %v3143, %v3159
        %v3176 = vsub.f32 %v3144, %v3162
        %v3177 = vsub.f32 %v3145, %v3165
        %v3178 = vsub.f32 %v3146, %v3168
        %v3179 = vsub.f32 %v3147, %v3171
        %v3180 = vmul.f32 %v3172, 1.442695
        %v3181 = vpow.pop %v3180
        %v3182 = vmul.f32 %v3173, 1.442695
        %v3183 = vpow.pop %v3182
        %v3184 = vmul.f32 %v3174, 1.442695
        %v3185 = vpow.pop %v3184
        %v3186 = vmul.f32 %v3175, 1.442695
        %v3187 = vpow.pop %v3186
        %v3188 = vmul.f32 %v3176, 1.442695
        %v3189 = vpow.pop %v3188
        %v3190 = vmul.f32 %v3177, 1.442695
        %v3191 = vpow.pop %v3190
        %v3192 = vmul.f32 %v3178, 1.442695
        %v3193 = vpow.pop %v3192
        %v3194 = vmul.f32 %v3179, 1.442695
        %v3195 = vpow.pop %v3194
        %v3196 = vsel %vm2857, %v3181, 0.0
        %3197 = vadd.xlane.f32.xlu0 %v3196
        %v3198 = vpop.xlane.xlu0 %3197
        %v3199 = vsel %vm2857, %v3183, 0.0
        %3200 = vadd.xlane.f32.xlu0 %v3199
        %v3201 = vpop.xlane.xlu0 %3200
        %v3202 = vsel %vm2857, %v3185, 0.0
        %3203 = vadd.xlane.f32.xlu0 %v3202
        %v3204 = vpop.xlane.xlu0 %3203
        %v3205 = vsel %vm2857, %v3187, 0.0
        %3206 = vadd.xlane.f32.xlu0 %v3205
        %v3207 = vpop.xlane.xlu0 %3206
        %v3208 = vsel %vm2857, %v3189, 0.0
        %3209 = vadd.xlane.f32.xlu0 %v3208
        %v3210 = vpop.xlane.xlu0 %3209
        %v3211 = vsel %vm2857, %v3191, 0.0
        %3212 = vadd.xlane.f32.xlu0 %v3211
        %v3213 = vpop.xlane.xlu0 %3212
        %v3214 = vsel %vm2857, %v3193, 0.0
        %3215 = vadd.xlane.f32.xlu0 %v3214
        %v3216 = vpop.xlane.xlu0 %3215
        %v3217 = vsel %vm2857, %v3195, 0.0
        %3218 = vadd.xlane.f32.xlu0 %v3217
        %v3219 = vpop.xlane.xlu0 %3218
        %v3220 = vrcp.pop %v3198
        %v3221 = vrcp.pop %v3201
        %v3222 = vrcp.pop %v3204
        %v3223 = vrcp.pop %v3207
        %v3224 = vrcp.pop %v3210
        %v3225 = vrcp.pop %v3213
        %v3226 = vrcp.pop %v3216
        %v3227 = vrcp.pop %v3219
        %v3228 = vmul.f32 %v3181, %v3220
        %v3229 = vmul.f32 %v3183, %v3221
        %v3230 = vmul.f32 %v3185, %v3222
        %v3231 = vmul.f32 %v3187, %v3223
        %v3232 = vmul.f32 %v3189, %v3224
        %v3233 = vmul.f32 %v3191, %v3225
        %v3234 = vmul.f32 %v3193, %v3226
        %v3235 = vmul.f32 %v3195, %v3227
        %v3236 = vpack.c.bf16 %v3229, %v3228
        %v3237 = vpack.c.bf16 %v3231, %v3230
        %v3238 = vpack.c.bf16 %v3233, %v3232
        %v3239 = vpack.c.bf16 %v3235, %v3234
        %v3240 = vpack.c.bf16 %v2713, %v2710
        %v3241 = vpack.c.bf16 %v2721, %v2718
        %v3242 = vpack.c.bf16 %v2729, %v2726
        %v3243 = vpack.c.bf16 %v2737, %v2734
        %v3245 = vsel %vm2857, %v3236, 0
        %v3248 = vsel %vm2857, %v3237, 0
        %v3251 = vsel %vm2857, %v3238, 0
        %v3254 = vsel %vm2857, %v3239, 0
        %3256 = vmatprep.subr.bf16.mxu0 0
        %3257 = vmatpush1.bf16.msra.mxu0 %v3240
        %3258 = vmatprep.subr.bf16.mxu0 0
        %3259 = vmatpush1.bf16.msra.mxu0 %v3241
        %3260 = vmatprep.subr.bf16.mxu0 0
        %3261 = vmatpush1.bf16.msra.mxu0 %v3242
        %3262 = vmatprep.subr.bf16.mxu0 0
        %3263 = vmatpush1.bf16.msra.mxu0 %v3243
        %3264 = vmatprep.subr.bf16.mxu0 0
        %3265 = vmatpush1.bf16.msra.mxu0 0
        %3266 = vmatprep.subr.bf16.mxu0 0
        %3267 = vmatpush1.bf16.msra.mxu0 0
        %3268 = vmatprep.subr.bf16.mxu0 0
        %3269 = vmatpush1.bf16.msra.mxu0 0
        %3270 = vmatprep.subr.bf16.mxu0 0
        %3271 = vmatpush1.bf16.msra.mxu0 0
        %3272 = vmatprep.subr.bf16.mxu0 0
        %3273 = vmatpush1.bf16.msra.mxu0 0
        %3274 = vmatprep.subr.bf16.mxu0 0
        %3275 = vmatpush1.bf16.msra.mxu0 0
        %3276 = vmatprep.subr.bf16.mxu0 0
        %3277 = vmatpush1.bf16.msra.mxu0 0
        %3278 = vmatprep.subr.bf16.mxu0 0
        %3279 = vmatpush1.bf16.msra.mxu0 0
        %3280 = vmatprep.subr.bf16.mxu0 0
        %3281 = vmatpush1.bf16.msra.mxu0 0
        %3282 = vmatprep.subr.bf16.mxu0 0
        %3283 = vmatpush1.bf16.msra.mxu0 0
        %3284 = vmatprep.subr.bf16.mxu0 0
        %3285 = vmatpush1.bf16.msra.mxu0 0
        %3286 = vmatprep.subr.bf16.mxu0 0
        %3287 = vmatpush1.bf16.msra.mxu0 0
        %3288 = vmatprep.mubr.bf16.mxu0 0
        %3289 = vmatmul.mubr.bf16.gmra.mrb[0].mxu0 %v3245
        %v3290 = vpop.f32.mrb[0].mxu0
        %v3291 = vadd.f32 0.0, %v3290
        %v3292 = vpop.f32.mrb[0].mxu0
        %v3293 = vpop.f32.mrb[0].mxu0
        %v3294 = vadd.f32 0.0, %v3293
        %v3295 = vpop.f32.mrb[0].mxu0
        %3296 = vmatprep.mubr.bf16.mxu0 0
        %3297 = vmatmul.mubr.bf16.gmra.mrb[0].mxu0 %v3248
        %v3298 = vpop.f32.mrb[0].mxu0
        %v3299 = vadd.f32 0.0, %v3298
        %v3300 = vpop.f32.mrb[0].mxu0
        %v3301 = vpop.f32.mrb[0].mxu0
        %v3302 = vadd.f32 0.0, %v3301
        %v3303 = vpop.f32.mrb[0].mxu0
        %3304 = vmatprep.mubr.bf16.mxu0 0
        %3305 = vmatmul.mubr.bf16.gmra.mrb[0].mxu0 %v3251
        %v3306 = vpop.f32.mrb[0].mxu0
        %v3307 = vadd.f32 0.0, %v3306
        %v3308 = vpop.f32.mrb[0].mxu0
        %v3309 = vpop.f32.mrb[0].mxu0
        %v3310 = vadd.f32 0.0, %v3309
        %v3311 = vpop.f32.mrb[0].mxu0
        %3312 = vmatprep.mubr.bf16.mxu0 0
        %3313 = vmatmul.mubr.bf16.gmra.mrb[0].mxu0 %v3254
        %v3314 = vpop.f32.mrb[0].mxu0
        %v3315 = vadd.f32 0.0, %v3314
        %v3316 = vpop.f32.mrb[0].mxu0
        %v3317 = vpop.f32.mrb[0].mxu0
        %v3318 = vadd.f32 0.0, %v3317
        %v3319 = vpop.f32.mrb[0].mxu0
        %3320 = vdwg.mxu0
        %v3321 = vpack.c.bf16 %v3004, %v3001
        %v3322 = vpack.c.bf16 %v3012, %v3009
        %v3323 = vpack.c.bf16 %v3020, %v3017
        %v3324 = vpack.c.bf16 %v3028, %v3025
        %v3325 = vpack.c.bf16 %v3294, %v3291
        %v3326 = vpack.c.bf16 %v3302, %v3299
        %v3327 = vpack.c.bf16 %v3310, %v3307
        %v3328 = vpack.c.bf16 %v3318, %v3315
        %v3329 = vld [vmem:[%s1145] sm:$0xf]
        %v3330 = vld [vmem:[%s1145 + $0x4] sm:$0xf]
        %v3331 = vld [vmem:[%s1145 + $0x8] sm:$0xf]
        %v3332 = vld [vmem:[%s1145 + $0xc] sm:$0xf]
        %v3333 = vld [vmem:[%s1145 + $0x10] sm:$0xf]
        %v3334 = vld [vmem:[%s1145 + $0x14] sm:$0xf]
        %v3335 = vld [vmem:[%s1145 + $0x18] sm:$0xf]
        %v3336 = vld [vmem:[%s1145 + $0x1c] sm:$0xf]
        %v3337 = vld [vmem:[%s1145 + $0x20] sm:$0xf]
        %v3338 = vld [vmem:[%s1145 + $0x24] sm:$0xf]
        %v3339 = vld [vmem:[%s1145 + $0x28] sm:$0xf]
        %v3340 = vld [vmem:[%s1145 + $0x2c] sm:$0xf]
        %v3341 = vld [vmem:[%s1145 + $0x30] sm:$0xf]
        %v3342 = vld [vmem:[%s1145 + $0x34] sm:$0xf]
        %v3343 = vld [vmem:[%s1145 + $0x38] sm:$0xf]
        %v3344 = vld [vmem:[%s1145 + $0x3c] sm:$0xf]
        %v3361 = vunpack.c.l.b16 %v3329
        %v3362 = vunpack.c.l.b16 %v3330
        %v3363 = vunpack.c.l.b16 %v3331
        %v3364 = vunpack.c.l.b16 %v3332
        %v3365 = vunpack.c.l.b16 %v3333
        %v3366 = vunpack.c.l.b16 %v3334
        %v3367 = vunpack.c.l.b16 %v3335
        %v3368 = vunpack.c.l.b16 %v3336
        %v3369 = vunpack.c.l.b16 %v3337
        %v3370 = vunpack.c.l.b16 %v3338
        %v3371 = vunpack.c.l.b16 %v3339
        %v3372 = vunpack.c.l.b16 %v3340
        %v3373 = vunpack.c.l.b16 %v3341
        %v3374 = vunpack.c.l.b16 %v3342
        %v3375 = vunpack.c.l.b16 %v3343
        %v3376 = vunpack.c.l.b16 %v3344
        %v3377 = vpack.c.b16 %v3362, %v3361
        %v3378 = vpack.c.b16 %v3364, %v3363
        %v3379 = vpack.c.b16 %v3366, %v3365
        %v3380 = vpack.c.b16 %v3368, %v3367
        %v3381 = vpack.c.b16 %v3370, %v3369
        %v3382 = vpack.c.b16 %v3372, %v3371
        %v3383 = vpack.c.b16 %v3374, %v3373
        %v3384 = vpack.c.b16 %v3376, %v3375
        %3393 = vmatprep.subr.bf16.mxu0 0
        %3394 = vmatpush1.bf16.msra.mxu0 %v3377
        %3395 = vmatprep.subr.bf16.mxu0 0
        %3396 = vmatpush1.bf16.msra.mxu0 %v3378
        %3397 = vmatprep.subr.bf16.mxu0 0
        %3398 = vmatpush1.bf16.msra.mxu0 %v3379
        %3399 = vmatprep.subr.bf16.mxu0 0
        %3400 = vmatpush1.bf16.msra.mxu0 %v3380
        %3401 = vmatprep.subr.bf16.mxu0 0
        %3402 = vmatpush1.bf16.msra.mxu0 %v3381
        %3403 = vmatprep.subr.bf16.mxu0 0
        %3404 = vmatpush1.bf16.msra.mxu0 %v3382
        %3405 = vmatprep.subr.bf16.mxu0 0
        %3406 = vmatpush1.bf16.msra.mxu0 %v3383
        %3407 = vmatprep.subr.bf16.mxu0 0
        %3408 = vmatpush1.bf16.msra.mxu0 %v3384
        %3409 = vmatprep.subr.bf16.mxu0 0
        %3410 = vmatpush1.bf16.msra.mxu0 0
        %3411 = vmatprep.subr.bf16.mxu0 0
        %3412 = vmatpush1.bf16.msra.mxu0 0
        %3413 = vmatprep.subr.bf16.mxu0 0
        %3414 = vmatpush1.bf16.msra.mxu0 0
        %3415 = vmatprep.subr.bf16.mxu0 0
        %3416 = vmatpush1.bf16.msra.mxu0 0
        %3417 = vmatprep.subr.bf16.mxu0 0
        %3418 = vmatpush1.bf16.msra.mxu0 0
        %3419 = vmatprep.subr.bf16.mxu0 0
        %3420 = vmatpush1.bf16.msra.mxu0 0
        %3421 = vmatprep.subr.bf16.mxu0 0
        %3422 = vmatpush1.bf16.msra.mxu0 0
        %3423 = vmatprep.subr.bf16.mxu0 0
        %3424 = vmatpush1.bf16.msra.mxu0 0
        %3425 = vmatprep.mubr.bf16.mxu0 0
        %3426 = vmatmul.mubr.bf16.gmra.mrb[0].mxu0 %v3321
        %v3427 = vpop.f32.mrb[0].mxu0
        %v3428 = vadd.f32 0.0, %v3427
        %v3429 = vpop.f32.mrb[0].mxu0
        %v3430 = vpop.f32.mrb[0].mxu0
        %v3431 = vadd.f32 0.0, %v3430
        %v3432 = vpop.f32.mrb[0].mxu0
        %3433 = vmatprep.mubr.bf16.mxu0 0
        %3434 = vmatmul.mubr.bf16.gmra.mrb[0].mxu0 %v3322
        %v3435 = vpop.f32.mrb[0].mxu0
        %v3436 = vadd.f32 0.0, %v3435
        %v3437 = vpop.f32.mrb[0].mxu0
        %v3438 = vpop.f32.mrb[0].mxu0
        %v3439 = vadd.f32 0.0, %v3438
        %v3440 = vpop.f32.mrb[0].mxu0
        %3441 = vmatprep.mubr.bf16.mxu0 0
        %3442 = vmatmul.mubr.bf16.gmra.mrb[0].mxu0 %v3323
        %v3443 = vpop.f32.mrb[0].mxu0
        %v3444 = vadd.f32 0.0, %v3443
        %v3445 = vpop.f32.mrb[0].mxu0
        %v3446 = vpop.f32.mrb[0].mxu0
        %v3447 = vadd.f32 0.0, %v3446
        %v3448 = vpop.f32.mrb[0].mxu0
        %3449 = vmatprep.mubr.bf16.mxu0 0
        %3450 = vmatmul.mubr.bf16.gmra.mrb[0].mxu0 %v3324
        %v3451 = vpop.f32.mrb[0].mxu0
        %v3452 = vadd.f32 0.0, %v3451
        %v3453 = vpop.f32.mrb[0].mxu0
        %v3454 = vpop.f32.mrb[0].mxu0
        %v3455 = vadd.f32 0.0, %v3454
        %v3456 = vpop.f32.mrb[0].mxu0
        %3457 = vmatprep.mubr.bf16.mxu0 0
        %3458 = vmatmul.mubr.bf16.gmra.mrb[0].mxu0 %v3325
        %v3459 = vpop.f32.mrb[0].mxu0
        %v3460 = vadd.f32 0.0, %v3459
        %v3461 = vpop.f32.mrb[0].mxu0
        %v3462 = vpop.f32.mrb[0].mxu0
        %v3463 = vadd.f32 0.0, %v3462
        %v3464 = vpop.f32.mrb[0].mxu0
        %3465 = vmatprep.mubr.bf16.mxu0 0
        %3466 = vmatmul.mubr.bf16.gmra.mrb[0].mxu0 %v3326
        %v3467 = vpop.f32.mrb[0].mxu0
        %v3468 = vadd.f32 0.0, %v3467
        %v3469 = vpop.f32.mrb[0].mxu0
        %v3470 = vpop.f32.mrb[0].mxu0
        %v3471 = vadd.f32 0.0, %v3470
        %v3472 = vpop.f32.mrb[0].mxu0
        %3473 = vmatprep.mubr.bf16.mxu0 0
        %3474 = vmatmul.mubr.bf16.gmra.mrb[0].mxu0 %v3327
        %v3475 = vpop.f32.mrb[0].mxu0
        %v3476 = vadd.f32 0.0, %v3475
        %v3477 = vpop.f32.mrb[0].mxu0
        %v3478 = vpop.f32.mrb[0].mxu0
        %v3479 = vadd.f32 0.0, %v3478
        %v3480 = vpop.f32.mrb[0].mxu0
        %3481 = vmatprep.mubr.bf16.mxu0 0
        %3482 = vmatmul.mubr.bf16.gmra.mrb[0].mxu0 %v3328
        %v3483 = vpop.f32.mrb[0].mxu0
        %v3484 = vadd.f32 0.0, %v3483
        %v3485 = vpop.f32.mrb[0].mxu0
        %v3486 = vpop.f32.mrb[0].mxu0
        %v3487 = vadd.f32 0.0, %v3486
        %v3488 = vpop.f32.mrb[0].mxu0
        %3489 = vdwg.mxu0
        %v3490 = vadd.f32 %v2106, %v3428
        %v3491 = vadd.f32 %v2107, %v3431
        %v3492 = vadd.f32 %v2108, %v3436
        %v3493 = vadd.f32 %v2109, %v3439
        %v3494 = vadd.f32 %v2110, %v3444
        %v3495 = vadd.f32 %v2111, %v3447
        %v3496 = vadd.f32 %v2112, %v3452
        %v3497 = vadd.f32 %v2113, %v3455
        %v3498 = vadd.f32 %v2114, %v3460
        %v3499 = vadd.f32 %v2115, %v3463
        %v3500 = vadd.f32 %v2116, %v3468
        %v3501 = vadd.f32 %v2117, %v3471
        %v3502 = vadd.f32 %v2118, %v3476
        %v3503 = vadd.f32 %v2119, %v3479
        %v3504 = vadd.f32 %v2120, %v3484
        %v3505 = vadd.f32 %v2121, %v3487
        %v3506 = vld [vmem:[%s1148] sm:$0x1]
        %v3508 = vlaneseq
        %v3509 = vshrl.u32 %v3508, 7
        %v3510 = vsub.s32 0, %v3509
        %v3511 = vrot.slane %v3506, %v3510
        %v3513 = vadd.f32 %v3490, %v3511
        %v3514 = vadd.f32 %v3491, %v3511
        %v3515 = vadd.f32 %v3492, %v3511
        %v3516 = vadd.f32 %v3493, %v3511
        %v3517 = vadd.f32 %v3494, %v3511
        %v3518 = vadd.f32 %v3495, %v3511
        %v3519 = vadd.f32 %v3496, %v3511
        %v3520 = vadd.f32 %v3497, %v3511
        %v3521 = vadd.f32 %v3498, %v3511
        %v3522 = vadd.f32 %v3499, %v3511
        %v3523 = vadd.f32 %v3500, %v3511
        %v3524 = vadd.f32 %v3501, %v3511
        %v3525 = vadd.f32 %v3502, %v3511
        %v3526 = vadd.f32 %v3503, %v3511
        %v3527 = vadd.f32 %v3504, %v3511
        %v3528 = vadd.f32 %v3505, %v3511
        %v3529 = vld [vmem:[%s1151] sm:$0x1]
        %v3530 = vld [vmem:[%s1154] sm:$0x1]
        %3531 = vadd.xlane.f32.xlu0 %v3513
        %v3532 = vpop.xlane.xlu0 %3531
        %3533 = vadd.xlane.f32.xlu0 %v3514
        %v3534 = vpop.xlane.xlu0 %3533
        %3535 = vadd.xlane.f32.xlu0 %v3515
        %v3536 = vpop.xlane.xlu0 %3535
        %3537 = vadd.xlane.f32.xlu0 %v3516
        %v3538 = vpop.xlane.xlu0 %3537
        %3539 = vadd.xlane.f32.xlu0 %v3517
        %v3540 = vpop.xlane.xlu0 %3539
        %3541 = vadd.xlane.f32.xlu0 %v3518
        %v3542 = vpop.xlane.xlu0 %3541
        %3543 = vadd.xlane.f32.xlu0 %v3519
        %v3544 = vpop.xlane.xlu0 %3543
        %3545 = vadd.xlane.f32.xlu0 %v3520
        %v3546 = vpop.xlane.xlu0 %3545
        %3547 = vadd.xlane.f32.xlu0 %v3521
        %v3548 = vpop.xlane.xlu0 %3547
        %3549 = vadd.xlane.f32.xlu0 %v3522
        %v3550 = vpop.xlane.xlu0 %3549
        %3551 = vadd.xlane.f32.xlu0 %v3523
        %v3552 = vpop.xlane.xlu0 %3551
        %3553 = vadd.xlane.f32.xlu0 %v3524
        %v3554 = vpop.xlane.xlu0 %3553
        %3555 = vadd.xlane.f32.xlu0 %v3525
        %v3556 = vpop.xlane.xlu0 %3555
        %3557 = vadd.xlane.f32.xlu0 %v3526
        %v3558 = vpop.xlane.xlu0 %3557
        %3559 = vadd.xlane.f32.xlu0 %v3527
        %v3560 = vpop.xlane.xlu0 %3559
        %3561 = vadd.xlane.f32.xlu0 %v3528
        %v3562 = vpop.xlane.xlu0 %3561
        %v3563 = vmul.f32 %v3532, %v2156
        %v3564 = vmul.f32 %v3534, %v2156
        %v3565 = vmul.f32 %v3536, %v2156
        %v3566 = vmul.f32 %v3538, %v2156
        %v3567 = vmul.f32 %v3540, %v2156
        %v3568 = vmul.f32 %v3542, %v2156
        %v3569 = vmul.f32 %v3544, %v2156
        %v3570 = vmul.f32 %v3546, %v2156
        %v3571 = vmul.f32 %v3548, %v2156
        %v3572 = vmul.f32 %v3550, %v2156
        %v3573 = vmul.f32 %v3552, %v2156
        %v3574 = vmul.f32 %v3554, %v2156
        %v3575 = vmul.f32 %v3556, %v2156
        %v3576 = vmul.f32 %v3558, %v2156
        %v3577 = vmul.f32 %v3560, %v2156
        %v3578 = vmul.f32 %v3562, %v2156
        %v3579 = vsub.f32 %v3513, %v3563
        %v3580 = vsub.f32 %v3514, %v3564
        %v3581 = vsub.f32 %v3515, %v3565
        %v3582 = vsub.f32 %v3516, %v3566
        %v3583 = vsub.f32 %v3517, %v3567
        %v3584 = vsub.f32 %v3518, %v3568
        %v3585 = vsub.f32 %v3519, %v3569
        %v3586 = vsub.f32 %v3520, %v3570
        %v3587 = vsub.f32 %v3521, %v3571
        %v3588 = vsub.f32 %v3522, %v3572
        %v3589 = vsub.f32 %v3523, %v3573
        %v3590 = vsub.f32 %v3524, %v3574
        %v3591 = vsub.f32 %v3525, %v3575
        %v3592 = vsub.f32 %v3526, %v3576
        %v3593 = vsub.f32 %v3527, %v3577
        %v3594 = vsub.f32 %v3528, %v3578
        %v3595 = vmul.f32 %v3579, %v3579
        %v3596 = vmul.f32 %v3580, %v3580
        %v3597 = vmul.f32 %v3581, %v3581
        %v3598 = vmul.f32 %v3582, %v3582
        %v3599 = vmul.f32 %v3583, %v3583
        %v3600 = vmul.f32 %v3584, %v3584
        %v3601 = vmul.f32 %v3585, %v3585
        %v3602 = vmul.f32 %v3586, %v3586
        %v3603 = vmul.f32 %v3587, %v3587
        %v3604 = vmul.f32 %v3588, %v3588
        %v3605 = vmul.f32 %v3589, %v3589
        %v3606 = vmul.f32 %v3590, %v3590
        %v3607 = vmul.f32 %v3591, %v3591
        %v3608 = vmul.f32 %v3592, %v3592
        %v3609 = vmul.f32 %v3593, %v3593
        %v3610 = vmul.f32 %v3594, %v3594
        %3611 = vadd.xlane.f32.xlu0 %v3595
        %v3612 = vpop.xlane.xlu0 %3611
        %3613 = vadd.xlane.f32.xlu0 %v3596
        %v3614 = vpop.xlane.xlu0 %3613
        %3615 = vadd.xlane.f32.xlu0 %v3597
        %v3616 = vpop.xlane.xlu0 %3615
        %3617 = vadd.xlane.f32.xlu0 %v3598
        %v3618 = vpop.xlane.xlu0 %3617
        %3619 = vadd.xlane.f32.xlu0 %v3599
        %v3620 = vpop.xlane.xlu0 %3619
        %3621 = vadd.xlane.f32.xlu0 %v3600
        %v3622 = vpop.xlane.xlu0 %3621
        %3623 = vadd.xlane.f32.xlu0 %v3601
        %v3624 = vpop.xlane.xlu0 %3623
        %3625 = vadd.xlane.f32.xlu0 %v3602
        %v3626 = vpop.xlane.xlu0 %3625
        %3627 = vadd.xlane.f32.xlu0 %v3603
        %v3628 = vpop.xlane.xlu0 %3627
        %3629 = vadd.xlane.f32.xlu0 %v3604
        %v3630 = vpop.xlane.xlu0 %3629
        %3631 = vadd.xlane.f32.xlu0 %v3605
        %v3632 = vpop.xlane.xlu0 %3631
        %3633 = vadd.xlane.f32.xlu0 %v3606
        %v3634 = vpop.xlane.xlu0 %3633
        %3635 = vadd.xlane.f32.xlu0 %v3607
        %v3636 = vpop.xlane.xlu0 %3635
        %3637 = vadd.xlane.f32.xlu0 %v3608
        %v3638 = vpop.xlane.xlu0 %3637
        %3639 = vadd.xlane.f32.xlu0 %v3609
        %v3640 = vpop.xlane.xlu0 %3639
        %3641 = vadd.xlane.f32.xlu0 %v3610
        %v3642 = vpop.xlane.xlu0 %3641
        %v3643 = vmul.f32 %v3612, %v2156
        %v3644 = vmul.f32 %v3614, %v2156
        %v3645 = vmul.f32 %v3616, %v2156
        %v3646 = vmul.f32 %v3618, %v2156
        %v3647 = vmul.f32 %v3620, %v2156
        %v3648 = vmul.f32 %v3622, %v2156
        %v3649 = vmul.f32 %v3624, %v2156
        %v3650 = vmul.f32 %v3626, %v2156
        %v3651 = vmul.f32 %v3628, %v2156
        %v3652 = vmul.f32 %v3630, %v2156
        %v3653 = vmul.f32 %v3632, %v2156
        %v3654 = vmul.f32 %v3634, %v2156
        %v3655 = vmul.f32 %v3636, %v2156
        %v3656 = vmul.f32 %v3638, %v2156
        %v3657 = vmul.f32 %v3640, %v2156
        %v3658 = vmul.f32 %v3642, %v2156
        %v3659 = vadd.f32 %v3643, 1e-05
        %v3660 = vadd.f32 %v3644, 1e-05
        %v3661 = vadd.f32 %v3645, 1e-05
        %v3662 = vadd.f32 %v3646, 1e-05
        %v3663 = vadd.f32 %v3647, 1e-05
        %v3664 = vadd.f32 %v3648, 1e-05
        %v3665 = vadd.f32 %v3649, 1e-05
        %v3666 = vadd.f32 %v3650, 1e-05
        %v3667 = vadd.f32 %v3651, 1e-05
        %v3668 = vadd.f32 %v3652, 1e-05
        %v3669 = vadd.f32 %v3653, 1e-05
        %v3670 = vadd.f32 %v3654, 1e-05
        %v3671 = vadd.f32 %v3655, 1e-05
        %v3672 = vadd.f32 %v3656, 1e-05
        %v3673 = vadd.f32 %v3657, 1e-05
        %v3674 = vadd.f32 %v3658, 1e-05
        %v3675 = vrsqrt.pop %v3659
        %v3676 = vrsqrt.pop %v3660
        %v3677 = vrsqrt.pop %v3661
        %v3678 = vrsqrt.pop %v3662
        %v3679 = vrsqrt.pop %v3663
        %v3680 = vrsqrt.pop %v3664
        %v3681 = vrsqrt.pop %v3665
        %v3682 = vrsqrt.pop %v3666
        %v3683 = vrsqrt.pop %v3667
        %v3684 = vrsqrt.pop %v3668
        %v3685 = vrsqrt.pop %v3669
        %v3686 = vrsqrt.pop %v3670
        %v3687 = vrsqrt.pop %v3671
        %v3688 = vrsqrt.pop %v3672
        %v3689 = vrsqrt.pop %v3673
        %v3690 = vrsqrt.pop %v3674
        %v3691 = vmul.f32 %v3579, %v3675
        %v3692 = vmul.f32 %v3580, %v3676
        %v3693 = vmul.f32 %v3581, %v3677
        %v3694 = vmul.f32 %v3582, %v3678
        %v3695 = vmul.f32 %v3583, %v3679
        %v3696 = vmul.f32 %v3584, %v3680
        %v3697 = vmul.f32 %v3585, %v3681
        %v3698 = vmul.f32 %v3586, %v3682
        %v3699 = vmul.f32 %v3587, %v3683
        %v3700 = vmul.f32 %v3588, %v3684
        %v3701 = vmul.f32 %v3589, %v3685
        %v3702 = vmul.f32 %v3590, %v3686
        %v3703 = vmul.f32 %v3591, %v3687
        %v3704 = vmul.f32 %v3592, %v3688
        %v3705 = vmul.f32 %v3593, %v3689
        %v3706 = vmul.f32 %v3594, %v3690
        %v3708 = vlaneseq
        %v3709 = vshrl.u32 %v3708, 7
        %v3710 = vsub.s32 0, %v3709
        %v3711 = vrot.slane %v3529, %v3710
        %v3713 = vmul.f32 %v3691, %v3711
        %v3714 = vmul.f32 %v3692, %v3711
        %v3715 = vmul.f32 %v3693, %v3711
        %v3716 = vmul.f32 %v3694, %v3711
        %v3717 = vmul.f32 %v3695, %v3711
        %v3718 = vmul.f32 %v3696, %v3711
        %v3719 = vmul.f32 %v3697, %v3711
        %v3720 = vmul.f32 %v3698, %v3711
        %v3721 = vmul.f32 %v3699, %v3711
        %v3722 = vmul.f32 %v3700, %v3711
        %v3723 = vmul.f32 %v3701, %v3711
        %v3724 = vmul.f32 %v3702, %v3711
        %v3725 = vmul.f32 %v3703, %v3711
        %v3726 = vmul.f32 %v3704, %v3711
        %v3727 = vmul.f32 %v3705, %v3711
        %v3728 = vmul.f32 %v3706, %v3711
        %v3730 = vlaneseq
        %v3731 = vshrl.u32 %v3730, 7
        %v3732 = vsub.s32 0, %v3731
        %v3733 = vrot.slane %v3530, %v3732
        %v3735 = vadd.f32 %v3713, %v3733
        %v3736 = vadd.f32 %v3714, %v3733
        %v3737 = vadd.f32 %v3715, %v3733
        %v3738 = vadd.f32 %v3716, %v3733
        %v3739 = vadd.f32 %v3717, %v3733
        %v3740 = vadd.f32 %v3718, %v3733
        %v3741 = vadd.f32 %v3719, %v3733
        %v3742 = vadd.f32 %v3720, %v3733
        %v3743 = vadd.f32 %v3721, %v3733
        %v3744 = vadd.f32 %v3722, %v3733
        %v3745 = vadd.f32 %v3723, %v3733
        %v3746 = vadd.f32 %v3724, %v3733
        %v3747 = vadd.f32 %v3725, %v3733
        %v3748 = vadd.f32 %v3726, %v3733
        %v3749 = vadd.f32 %v3727, %v3733
        %v3750 = vadd.f32 %v3728, %v3733
        %v3751 = vpack.c.bf16 %v3736, %v3735
        %v3752 = vpack.c.bf16 %v3738, %v3737
        %v3753 = vpack.c.bf16 %v3740, %v3739
        %v3754 = vpack.c.bf16 %v3742, %v3741
        %v3755 = vpack.c.bf16 %v3744, %v3743
        %v3756 = vpack.c.bf16 %v3746, %v3745
        %v3757 = vpack.c.bf16 %v3748, %v3747
        %v3758 = vpack.c.bf16 %v3750, %v3749
        %v3759 = vld [vmem:[%s1159] sm:$0xff]
        %v3760 = vld [vmem:[%s1159 + $0x8] sm:$0xff]
        %v3761 = vld [vmem:[%s1159 + $0x10] sm:$0xff]
        %v3762 = vld [vmem:[%s1159 + $0x18] sm:$0xff]
        %v3763 = vld [vmem:[%s1159 + $0x20] sm:$0xff]
        %v3764 = vld [vmem:[%s1159 + $0x28] sm:$0xff]
        %v3765 = vld [vmem:[%s1159 + $0x30] sm:$0xff]
        %v3766 = vld [vmem:[%s1159 + $0x38] sm:$0xff]
        %v3767 = vld [vmem:[%s1159 + $0x40] sm:$0xff]
        %v3768 = vld [vmem:[%s1159 + $0x48] sm:$0xff]
        %v3769 = vld [vmem:[%s1159 + $0x50] sm:$0xff]
        %v3770 = vld [vmem:[%s1159 + $0x58] sm:$0xff]
        %v3771 = vld [vmem:[%s1159 + $0x60] sm:$0xff]
        %v3772 = vld [vmem:[%s1159 + $0x68] sm:$0xff]
        %v3773 = vld [vmem:[%s1159 + $0x70] sm:$0xff]
        %v3774 = vld [vmem:[%s1159 + $0x78] sm:$0xff]
        %v3775 = vld [vmem:[%s1159 + $0x80] sm:$0xff]
        %v3776 = vld [vmem:[%s1159 + $0x88] sm:$0xff]
        %v3777 = vld [vmem:[%s1159 + $0x90] sm:$0xff]
        %v3778 = vld [vmem:[%s1159 + $0x98] sm:$0xff]
        %v3779 = vld [vmem:[%s1159 + $0xa0] sm:$0xff]
        %v3780 = vld [vmem:[%s1159 + $0xa8] sm:$0xff]
        %v3781 = vld [vmem:[%s1159 + $0xb0] sm:$0xff]
        %v3782 = vld [vmem:[%s1159 + $0xb8] sm:$0xff]
        %v3783 = vld [vmem:[%s1159 + $0xc0] sm:$0xff]
        %v3784 = vld [vmem:[%s1159 + $0xc8] sm:$0xff]
        %v3785 = vld [vmem:[%s1159 + $0xd0] sm:$0xff]
        %v3786 = vld [vmem:[%s1159 + $0xd8] sm:$0xff]
        %v3787 = vld [vmem:[%s1159 + $0xe0] sm:$0xff]
        %v3788 = vld [vmem:[%s1159 + $0xe8] sm:$0xff]
        %v3789 = vld [vmem:[%s1159 + $0xf0] sm:$0xff]
        %v3790 = vld [vmem:[%s1159 + $0xf8] sm:$0xff]
        %v3791 = vld [vmem:[%s1163] sm:$0xf]
        %v3793 = vlaneseq
        %v3794 = vshrl.u32 %v3793, 7
        %v3795 = vsub.s32 0, %v3794
        %v3796 = vrot.slane %v3791, %v3795
        %v3797 = vlaneseq
        %v3798 = vshrl.u32 %v3797, 7
        %v3799 = vsub.s32 1, %v3798
        %v3800 = vrot.slane %v3791, %v3799
        %v3801 = vlaneseq
        %v3802 = vshrl.u32 %v3801, 7
        %v3803 = vsub.s32 2, %v3802
        %v3804 = vrot.slane %v3791, %v3803
        %v3805 = vlaneseq
        %v3806 = vshrl.u32 %v3805, 7
        %v3807 = vsub.s32 3, %v3806
        %v3808 = vrot.slane %v3791, %v3807
        %v3845 = vunpack.c.l.b16 %v3759
        %v3846 = vunpack.c.h.b16 %v3759
        %v3847 = vunpack.c.l.b16 %v3760
        %v3848 = vunpack.c.h.b16 %v3760
        %v3849 = vunpack.c.l.b16 %v3761
        %v3850 = vunpack.c.h.b16 %v3761
        %v3851 = vunpack.c.l.b16 %v3762
        %v3852 = vunpack.c.h.b16 %v3762
        %v3853 = vunpack.c.l.b16 %v3763
        %v3854 = vunpack.c.h.b16 %v3763
        %v3855 = vunpack.c.l.b16 %v3764
        %v3856 = vunpack.c.h.b16 %v3764
        %v3857 = vunpack.c.l.b16 %v3765
        %v3858 = vunpack.c.h.b16 %v3765
        %v3859 = vunpack.c.l.b16 %v3766
        %v3860 = vunpack.c.h.b16 %v3766
        %v3861 = vunpack.c.l.b16 %v3767
        %v3862 = vunpack.c.h.b16 %v3767
        %v3863 = vunpack.c.l.b16 %v3768
        %v3864 = vunpack.c.h.b16 %v3768
        %v3865 = vunpack.c.l.b16 %v3769
        %v3866 = vunpack.c.h.b16 %v3769
        %v3867 = vunpack.c.l.b16 %v3770
        %v3868 = vunpack.c.h.b16 %v3770
        %v3869 = vunpack.c.l.b16 %v3771
        %v3870 = vunpack.c.h.b16 %v3771
        %v3871 = vunpack.c.l.b16 %v3772
        %v3872 = vunpack.c.h.b16 %v3772
        %v3873 = vunpack.c.l.b16 %v3773
        %v3874 = vunpack.c.h.b16 %v3773
        %v3875 = vunpack.c.l.b16 %v3774
        %v3876 = vunpack.c.h.b16 %v3774
        %v3877 = vunpack.c.l.b16 %v3775
        %v3878 = vunpack.c.h.b16 %v3775
        %v3879 = vunpack.c.l.b16 %v3776
        %v3880 = vunpack.c.h.b16 %v3776
        %v3881 = vunpack.c.l.b16 %v3777
        %v3882 = vunpack.c.h.b16 %v3777
        %v3883 = vunpack.c.l.b16 %v3778
        %v3884 = vunpack.c.h.b16 %v3778
        %v3885 = vunpack.c.l.b16 %v3779
        %v3886 = vunpack.c.h.b16 %v3779
        %v3887 = vunpack.c.l.b16 %v3780
        %v3888 = vunpack.c.h.b16 %v3780
        %v3889 = vunpack.c.l.b16 %v3781
        %v3890 = vunpack.c.h.b16 %v3781
        %v3891 = vunpack.c.l.b16 %v3782
        %v3892 = vunpack.c.h.b16 %v3782
        %v3893 = vunpack.c.l.b16 %v3783
        %v3894 = vunpack.c.h.b16 %v3783
        %v3895 = vunpack.c.l.b16 %v3784
        %v3896 = vunpack.c.h.b16 %v3784
        %v3897 = vunpack.c.l.b16 %v3785
        %v3898 = vunpack.c.h.b16 %v3785
        %v3899 = vunpack.c.l.b16 %v3786
        %v3900 = vunpack.c.h.b16 %v3786
        %v3901 = vunpack.c.l.b16 %v3787
        %v3902 = vunpack.c.h.b16 %v3787
        %v3903 = vunpack.c.l.b16 %v3788
        %v3904 = vunpack.c.h.b16 %v3788
        %v3905 = vunpack.c.l.b16 %v3789
        %v3906 = vunpack.c.h.b16 %v3789
        %v3907 = vunpack.c.l.b16 %v3790
        %v3908 = vunpack.c.h.b16 %v3790
        %v3909 = vpack.c.b16 %v3849, %v3845
        %v3910 = vpack.c.b16 %v3850, %v3846
        %v3911 = vpack.c.b16 %v3851, %v3847
        %v3912 = vpack.c.b16 %v3852, %v3848
        %v3913 = vpack.c.b16 %v3857, %v3853
        %v3914 = vpack.c.b16 %v3858, %v3854
        %v3915 = vpack.c.b16 %v3859, %v3855
        %v3916 = vpack.c.b16 %v3860, %v3856
        %v3917 = vpack.c.b16 %v3865, %v3861
        %v3918 = vpack.c.b16 %v3866, %v3862
        %v3919 = vpack.c.b16 %v3867, %v3863
        %v3920 = vpack.c.b16 %v3868, %v3864
        %v3921 = vpack.c.b16 %v3873, %v3869
        %v3922 = vpack.c.b16 %v3874, %v3870
        %v3923 = vpack.c.b16 %v3875, %v3871
        %v3924 = vpack.c.b16 %v3876, %v3872
        %v3925 = vpack.c.b16 %v3881, %v3877
        %v3926 = vpack.c.b16 %v3882, %v3878
        %v3927 = vpack.c.b16 %v3883, %v3879
        %v3928 = vpack.c.b16 %v3884, %v3880
        %v3929 = vpack.c.b16 %v3889, %v3885
        %v3930 = vpack.c.b16 %v3890, %v3886
        %v3931 = vpack.c.b16 %v3891, %v3887
        %v3932 = vpack.c.b16 %v3892, %v3888
        %v3933 = vpack.c.b16 %v3897, %v3893
        %v3934 = vpack.c.b16 %v3898, %v3894
        %v3935 = vpack.c.b16 %v3899, %v3895
        %v3936 = vpack.c.b16 %v3900, %v3896
        %v3937 = vpack.c.b16 %v3905, %v3901
        %v3938 = vpack.c.b16 %v3906, %v3902
        %v3939 = vpack.c.b16 %v3907, %v3903
        %v3940 = vpack.c.b16 %v3908, %v3904
        %3973 = vmatprep.subr.bf16.mxu0 %v3910
        %3974 = vmatpush1.bf16.msra.mxu0 %v3909
        %3975 = vmatprep.subr.bf16.mxu0 %v3914
        %3976 = vmatpush1.bf16.msra.mxu0 %v3913
        %3977 = vmatprep.subr.bf16.mxu0 %v3918
        %3978 = vmatpush1.bf16.msra.mxu0 %v3917
        %3979 = vmatprep.subr.bf16.mxu0 %v3922
        %3980 = vmatpush1.bf16.msra.mxu0 %v3921
        %3981 = vmatprep.subr.bf16.mxu0 %v3926
        %3982 = vmatpush1.bf16.msra.mxu0 %v3925
        %3983 = vmatprep.subr.bf16.mxu0 %v3930
        %3984 = vmatpush1.bf16.msra.mxu0 %v3929
        %3985 = vmatprep.subr.bf16.mxu0 %v3934
        %3986 = vmatpush1.bf16.msra.mxu0 %v3933
        %3987 = vmatprep.subr.bf16.mxu0 %v3938
        %3988 = vmatpush1.bf16.msra.mxu0 %v3937
        %3989 = vmatprep.subr.bf16.mxu0 0
        %3990 = vmatpush1.bf16.msra.mxu0 0
        %3991 = vmatprep.subr.bf16.mxu0 0
        %3992 = vmatpush1.bf16.msra.mxu0 0
        %3993 = vmatprep.subr.bf16.mxu0 0
        %3994 = vmatpush1.bf16.msra.mxu0 0
        %3995 = vmatprep.subr.bf16.mxu0 0
        %3996 = vmatpush1.bf16.msra.mxu0 0
        %3997 = vmatprep.subr.bf16.mxu0 0
        %3998 = vmatpush1.bf16.msra.mxu0 0
        %3999 = vmatprep.subr.bf16.mxu0 0
        %4000 = vmatpush1.bf16.msra.mxu0 0
        %4001 = vmatprep.subr.bf16.mxu0 0
        %4002 = vmatpush1.bf16.msra.mxu0 0
        %4003 = vmatprep.subr.bf16.mxu0 0
        %4004 = vmatpush1.bf16.msra.mxu0 0
        %4005 = vmatprep.mubr.bf16.mxu0 0
        %4006 = vmatmul.mubr.bf16.gmra.mrb[0].mxu0 %v3751
        %v4007 = vpop.f32.mrb[0].mxu0
        %v4008 = vadd.f32 %v3796, %v4007
        %v4009 = vpop.f32.mrb[0].mxu0
        %v4010 = vadd.f32 %v3800, %v4009
        %v4011 = vpop.f32.mrb[0].mxu0
        %v4012 = vadd.f32 %v3796, %v4011
        %v4013 = vpop.f32.mrb[0].mxu0
        %v4014 = vadd.f32 %v3800, %v4013
        %4015 = vmatprep.mubr.bf16.mxu0 0
        %4016 = vmatmul.mubr.bf16.gmra.mrb[0].mxu0 %v3752
        %v4017 = vpop.f32.mrb[0].mxu0
        %v4018 = vadd.f32 %v3796, %v4017
        %v4019 = vpop.f32.mrb[0].mxu0
        %v4020 = vadd.f32 %v3800, %v4019
        %v4021 = vpop.f32.mrb[0].mxu0
        %v4022 = vadd.f32 %v3796, %v4021
        %v4023 = vpop.f32.mrb[0].mxu0
        %v4024 = vadd.f32 %v3800, %v4023
        %4025 = vmatprep.mubr.bf16.mxu0 0
        %4026 = vmatmul.mubr.bf16.gmra.mrb[0].mxu0 %v3753
        %v4027 = vpop.f32.mrb[0].mxu0
        %v4028 = vadd.f32 %v3796, %v4027
        %v4029 = vpop.f32.mrb[0].mxu0
        %v4030 = vadd.f32 %v3800, %v4029
        %v4031 = vpop.f32.mrb[0].mxu0
        %v4032 = vadd.f32 %v3796, %v4031
        %v4033 = vpop.f32.mrb[0].mxu0
        %v4034 = vadd.f32 %v3800, %v4033
        %4035 = vmatprep.mubr.bf16.mxu0 0
        %4036 = vmatmul.mubr.bf16.gmra.mrb[0].mxu0 %v3754
        %v4037 = vpop.f32.mrb[0].mxu0
        %v4038 = vadd.f32 %v3796, %v4037
        %v4039 = vpop.f32.mrb[0].mxu0
        %v4040 = vadd.f32 %v3800, %v4039
        %v4041 = vpop.f32.mrb[0].mxu0
        %v4042 = vadd.f32 %v3796, %v4041
        %v4043 = vpop.f32.mrb[0].mxu0
        %v4044 = vadd.f32 %v3800, %v4043
        %4045 = vmatprep.mubr.bf16.mxu0 0
        %4046 = vmatmul.mubr.bf16.gmra.mrb[0].mxu0 %v3755
        %v4047 = vpop.f32.mrb[0].mxu0
        %v4048 = vadd.f32 %v3796, %v4047
        %v4049 = vpop.f32.mrb[0].mxu0
        %v4050 = vadd.f32 %v3800, %v4049
        %v4051 = vpop.f32.mrb[0].mxu0
        %v4052 = vadd.f32 %v3796, %v4051
        %v4053 = vpop.f32.mrb[0].mxu0
        %v4054 = vadd.f32 %v3800, %v4053
        %4055 = vmatprep.mubr.bf16.mxu0 0
        %4056 = vmatmul.mubr.bf16.gmra.mrb[0].mxu0 %v3756
        %v4057 = vpop.f32.mrb[0].mxu0
        %v4058 = vadd.f32 %v3796, %v4057
        %v4059 = vpop.f32.mrb[0].mxu0
        %v4060 = vadd.f32 %v3800, %v4059
        %v4061 = vpop.f32.mrb[0].mxu0
        %v4062 = vadd.f32 %v3796, %v4061
        %v4063 = vpop.f32.mrb[0].mxu0
        %v4064 = vadd.f32 %v3800, %v4063
        %4065 = vmatprep.mubr.bf16.mxu0 0
        %4066 = vmatmul.mubr.bf16.gmra.mrb[0].mxu0 %v3757
        %v4067 = vpop.f32.mrb[0].mxu0
        %v4068 = vadd.f32 %v3796, %v4067
        %v4069 = vpop.f32.mrb[0].mxu0
        %v4070 = vadd.f32 %v3800, %v4069
        %v4071 = vpop.f32.mrb[0].mxu0
        %v4072 = vadd.f32 %v3796, %v4071
        %v4073 = vpop.f32.mrb[0].mxu0
        %v4074 = vadd.f32 %v3800, %v4073
        %4075 = vmatprep.mubr.bf16.mxu0 0
        %4076 = vmatmul.mubr.bf16.gmra.mrb[0].mxu0 %v3758
        %v4077 = vpop.f32.mrb[0].mxu0
        %v4078 = vadd.f32 %v3796, %v4077
        %v4079 = vpop.f32.mrb[0].mxu0
        %v4080 = vadd.f32 %v3800, %v4079
        %v4081 = vpop.f32.mrb[0].mxu0
        %v4082 = vadd.f32 %v3796, %v4081
        %v4083 = vpop.f32.mrb[0].mxu0
        %v4084 = vadd.f32 %v3800, %v4083
        %4085 = vdwg.mxu0
        %4086 = vmatprep.subr.bf16.mxu0 %v3912
        %4087 = vmatpush1.bf16.msra.mxu0 %v3911
        %4088 = vmatprep.subr.bf16.mxu0 %v3916
        %4089 = vmatpush1.bf16.msra.mxu0 %v3915
        %4090 = vmatprep.subr.bf16.mxu0 %v3920
        %4091 = vmatpush1.bf16.msra.mxu0 %v3919
        %4092 = vmatprep.subr.bf16.mxu0 %v3924
        %4093 = vmatpush1.bf16.msra.mxu0 %v3923
        %4094 = vmatprep.subr.bf16.mxu0 %v3928
        %4095 = vmatpush1.bf16.msra.mxu0 %v3927
        %4096 = vmatprep.subr.bf16.mxu0 %v3932
        %4097 = vmatpush1.bf16.msra.mxu0 %v3931
        %4098 = vmatprep.subr.bf16.mxu0 %v3936
        %4099 = vmatpush1.bf16.msra.mxu0 %v3935
        %4100 = vmatprep.subr.bf16.mxu0 %v3940
        %4101 = vmatpush1.bf16.msra.mxu0 %v3939
        %4102 = vmatprep.subr.bf16.mxu0 0
        %4103 = vmatpush1.bf16.msra.mxu0 0
        %4104 = vmatprep.subr.bf16.mxu0 0
        %4105 = vmatpush1.bf16.msra.mxu0 0
        %4106 = vmatprep.subr.bf16.mxu0 0
        %4107 = vmatpush1.bf16.msra.mxu0 0
        %4108 = vmatprep.subr.bf16.mxu0 0
        %4109 = vmatpush1.bf16.msra.mxu0 0
        %4110 = vmatprep.subr.bf16.mxu0 0
        %4111 = vmatpush1.bf16.msra.mxu0 0
        %4112 = vmatprep.subr.bf16.mxu0 0
        %4113 = vmatpush1.bf16.msra.mxu0 0
        %4114 = vmatprep.subr.bf16.mxu0 0
        %4115 = vmatpush1.bf16.msra.mxu0 0
        %4116 = vmatprep.subr.bf16.mxu0 0
        %4117 = vmatpush1.bf16.msra.mxu0 0
        %4118 = vmatprep.mubr.bf16.mxu0 0
        %4119 = vmatmul.mubr.bf16.gmra.mrb[0].mxu0 %v3751
        %v4120 = vpop.f32.mrb[0].mxu0
        %v4121 = vadd.f32 %v3804, %v4120
        %v4122 = vpop.f32.mrb[0].mxu0
        %v4123 = vadd.f32 %v3808, %v4122
        %v4124 = vpop.f32.mrb[0].mxu0
        %v4125 = vadd.f32 %v3804, %v4124
        %v4126 = vpop.f32.mrb[0].mxu0
        %v4127 = vadd.f32 %v3808, %v4126
        %4128 = vmatprep.mubr.bf16.mxu0 0
        %4129 = vmatmul.mubr.bf16.gmra.mrb[0].mxu0 %v3752
        %v4130 = vpop.f32.mrb[0].mxu0
        %v4131 = vadd.f32 %v3804, %v4130
        %v4132 = vpop.f32.mrb[0].mxu0
        %v4133 = vadd.f32 %v3808, %v4132
        %v4134 = vpop.f32.mrb[0].mxu0
        %v4135 = vadd.f32 %v3804, %v4134
        %v4136 = vpop.f32.mrb[0].mxu0
        %v4137 = vadd.f32 %v3808, %v4136
        %4138 = vmatprep.mubr.bf16.mxu0 0
        %4139 = vmatmul.mubr.bf16.gmra.mrb[0].mxu0 %v3753
        %v4140 = vpop.f32.mrb[0].mxu0
        %v4141 = vadd.f32 %v3804, %v4140
        %v4142 = vpop.f32.mrb[0].mxu0
        %v4143 = vadd.f32 %v3808, %v4142
        %v4144 = vpop.f32.mrb[0].mxu0
        %v4145 = vadd.f32 %v3804, %v4144
        %v4146 = vpop.f32.mrb[0].mxu0
        %v4147 = vadd.f32 %v3808, %v4146
        %4148 = vmatprep.mubr.bf16.mxu0 0
        %4149 = vmatmul.mubr.bf16.gmra.mrb[0].mxu0 %v3754
        %v4150 = vpop.f32.mrb[0].mxu0
        %v4151 = vadd.f32 %v3804, %v4150
        %v4152 = vpop.f32.mrb[0].mxu0
        %v4153 = vadd.f32 %v3808, %v4152
        %v4154 = vpop.f32.mrb[0].mxu0
        %v4155 = vadd.f32 %v3804, %v4154
        %v4156 = vpop.f32.mrb[0].mxu0
        %v4157 = vadd.f32 %v3808, %v4156
        %4158 = vmatprep.mubr.bf16.mxu0 0
        %4159 = vmatmul.mubr.bf16.gmra.mrb[0].mxu0 %v3755
        %v4160 = vpop.f32.mrb[0].mxu0
        %v4161 = vadd.f32 %v3804, %v4160
        %v4162 = vpop.f32.mrb[0].mxu0
        %v4163 = vadd.f32 %v3808, %v4162
        %v4164 = vpop.f32.mrb[0].mxu0
        %v4165 = vadd.f32 %v3804, %v4164
        %v4166 = vpop.f32.mrb[0].mxu0
        %v4167 = vadd.f32 %v3808, %v4166
        %4168 = vmatprep.mubr.bf16.mxu0 0
        %4169 = vmatmul.mubr.bf16.gmra.mrb[0].mxu0 %v3756
        %v4170 = vpop.f32.mrb[0].mxu0
        %v4171 = vadd.f32 %v3804, %v4170
        %v4172 = vpop.f32.mrb[0].mxu0
        %v4173 = vadd.f32 %v3808, %v4172
        %v4174 = vpop.f32.mrb[0].mxu0
        %v4175 = vadd.f32 %v3804, %v4174
        %v4176 = vpop.f32.mrb[0].mxu0
        %v4177 = vadd.f32 %v3808, %v4176
        %4178 = vmatprep.mubr.bf16.mxu0 0
        %4179 = vmatmul.mubr.bf16.gmra.mrb[0].mxu0 %v3757
        %v4180 = vpop.f32.mrb[0].mxu0
        %v4181 = vadd.f32 %v3804, %v4180
        %v4182 = vpop.f32.mrb[0].mxu0
        %v4183 = vadd.f32 %v3808, %v4182
        %v4184 = vpop.f32.mrb[0].mxu0
        %v4185 = vadd.f32 %v3804, %v4184
        %v4186 = vpop.f32.mrb[0].mxu0
        %v4187 = vadd.f32 %v3808, %v4186
        %4188 = vmatprep.mubr.bf16.mxu0 0
        %4189 = vmatmul.mubr.bf16.gmra.mrb[0].mxu0 %v3758
        %v4190 = vpop.f32.mrb[0].mxu0
        %v4191 = vadd.f32 %v3804, %v4190
        %v4192 = vpop.f32.mrb[0].mxu0
        %v4193 = vadd.f32 %v3808, %v4192
        %v4194 = vpop.f32.mrb[0].mxu0
        %v4195 = vadd.f32 %v3804, %v4194
        %v4196 = vpop.f32.mrb[0].mxu0
        %v4197 = vadd.f32 %v3808, %v4196
        %4198 = vdwg.mxu0
        %v4199 = vmul.f32 %v4008, 0.5
        %v4200 = vmul.f32 %v4010, 0.5
        %v4201 = vmul.f32 %v4121, 0.5
        %v4202 = vmul.f32 %v4123, 0.5
        %v4203 = vmul.f32 %v4012, 0.5
        %v4204 = vmul.f32 %v4014, 0.5
        %v4205 = vmul.f32 %v4125, 0.5
        %v4206 = vmul.f32 %v4127, 0.5
        %v4207 = vmul.f32 %v4018, 0.5
        %v4208 = vmul.f32 %v4020, 0.5
        %v4209 = vmul.f32 %v4131, 0.5
        %v4210 = vmul.f32 %v4133, 0.5
        %v4211 = vmul.f32 %v4022, 0.5
        %v4212 = vmul.f32 %v4024, 0.5
        %v4213 = vmul.f32 %v4135, 0.5
        %v4214 = vmul.f32 %v4137, 0.5
        %v4215 = vmul.f32 %v4028, 0.5
        %v4216 = vmul.f32 %v4030, 0.5
        %v4217 = vmul.f32 %v4141, 0.5
        %v4218 = vmul.f32 %v4143, 0.5
        %v4219 = vmul.f32 %v4032, 0.5
        %v4220 = vmul.f32 %v4034, 0.5
        %v4221 = vmul.f32 %v4145, 0.5
        %v4222 = vmul.f32 %v4147, 0.5
        %v4223 = vmul.f32 %v4038, 0.5
        %v4224 = vmul.f32 %v4040, 0.5
        %v4225 = vmul.f32 %v4151, 0.5
        %v4226 = vmul.f32 %v4153, 0.5
        %v4227 = vmul.f32 %v4042, 0.5
        %v4228 = vmul.f32 %v4044, 0.5
        %v4229 = vmul.f32 %v4155, 0.5
        %v4230 = vmul.f32 %v4157, 0.5
        %v4231 = vmul.f32 %v4048, 0.5
        %v4232 = vmul.f32 %v4050, 0.5
        %v4233 = vmul.f32 %v4161, 0.5
        %v4234 = vmul.f32 %v4163, 0.5
        %v4235 = vmul.f32 %v4052, 0.5
        %v4236 = vmul.f32 %v4054, 0.5
        %v4237 = vmul.f32 %v4165, 0.5
        %v4238 = vmul.f32 %v4167, 0.5
        %v4239 = vmul.f32 %v4058, 0.5
        %v4240 = vmul.f32 %v4060, 0.5
        %v4241 = vmul.f32 %v4171, 0.5
        %v4242 = vmul.f32 %v4173, 0.5
        %v4243 = vmul.f32 %v4062, 0.5
        %v4244 = vmul.f32 %v4064, 0.5
        %v4245 = vmul.f32 %v4175, 0.5
        %v4246 = vmul.f32 %v4177, 0.5
        %v4247 = vmul.f32 %v4068, 0.5
        %v4248 = vmul.f32 %v4070, 0.5
        %v4249 = vmul.f32 %v4181, 0.5
        %v4250 = vmul.f32 %v4183, 0.5
        %v4251 = vmul.f32 %v4072, 0.5
        %v4252 = vmul.f32 %v4074, 0.5
        %v4253 = vmul.f32 %v4185, 0.5
        %v4254 = vmul.f32 %v4187, 0.5
        %v4255 = vmul.f32 %v4078, 0.5
        %v4256 = vmul.f32 %v4080, 0.5
        %v4257 = vmul.f32 %v4191, 0.5
        %v4258 = vmul.f32 %v4193, 0.5
        %v4259 = vmul.f32 %v4082, 0.5
        %v4260 = vmul.f32 %v4084, 0.5
        %v4261 = vmul.f32 %v4195, 0.5
        %v4262 = vmul.f32 %v4197, 0.5
        %v4263 = vmul.f32 %v4008, 0.044715
        %v4264 = vmul.f32 %v4010, 0.044715
        %v4265 = vmul.f32 %v4121, 0.044715
        %v4266 = vmul.f32 %v4123, 0.044715
        %v4267 = vmul.f32 %v4012, 0.044715
        %v4268 = vmul.f32 %v4014, 0.044715
        %v4269 = vmul.f32 %v4125, 0.044715
        %v4270 = vmul.f32 %v4127, 0.044715
        %v4271 = vmul.f32 %v4018, 0.044715
        %v4272 = vmul.f32 %v4020, 0.044715
        %v4273 = vmul.f32 %v4131, 0.044715
        %v4274 = vmul.f32 %v4133, 0.044715
        %v4275 = vmul.f32 %v4022, 0.044715
        %v4276 = vmul.f32 %v4024, 0.044715
        %v4277 = vmul.f32 %v4135, 0.044715
        %v4278 = vmul.f32 %v4137, 0.044715
        %v4279 = vmul.f32 %v4028, 0.044715
        %v4280 = vmul.f32 %v4030, 0.044715
        %v4281 = vmul.f32 %v4141, 0.044715
        %v4282 = vmul.f32 %v4143, 0.044715
        %v4283 = vmul.f32 %v4032, 0.044715
        %v4284 = vmul.f32 %v4034, 0.044715
        %v4285 = vmul.f32 %v4145, 0.044715
        %v4286 = vmul.f32 %v4147, 0.044715
        %v4287 = vmul.f32 %v4038, 0.044715
        %v4288 = vmul.f32 %v4040, 0.044715
        %v4289 = vmul.f32 %v4151, 0.044715
        %v4290 = vmul.f32 %v4153, 0.044715
        %v4291 = vmul.f32 %v4042, 0.044715
        %v4292 = vmul.f32 %v4044, 0.044715
        %v4293 = vmul.f32 %v4155, 0.044715
        %v4294 = vmul.f32 %v4157, 0.044715
        %v4295 = vmul.f32 %v4048, 0.044715
        %v4296 = vmul.f32 %v4050, 0.044715
        %v4297 = vmul.f32 %v4161, 0.044715
        %v4298 = vmul.f32 %v4163, 0.044715
        %v4299 = vmul.f32 %v4052, 0.044715
        %v4300 = vmul.f32 %v4054, 0.044715
        %v4301 = vmul.f32 %v4165, 0.044715
        %v4302 = vmul.f32 %v4167, 0.044715
        %v4303 = vmul.f32 %v4058, 0.044715
        %v4304 = vmul.f32 %v4060, 0.044715
        %v4305 = vmul.f32 %v4171, 0.044715
        %v4306 = vmul.f32 %v4173, 0.044715
        %v4307 = vmul.f32 %v4062, 0.044715
        %v4308 = vmul.f32 %v4064, 0.044715
        %v4309 = vmul.f32 %v4175, 0.044715
        %v4310 = vmul.f32 %v4177, 0.044715
        %v4311 = vmul.f32 %v4068, 0.044715
        %v4312 = vmul.f32 %v4070, 0.044715
        %v4313 = vmul.f32 %v4181, 0.044715
        %v4314 = vmul.f32 %v4183, 0.044715
        %v4315 = vmul.f32 %v4072, 0.044715
        %v4316 = vmul.f32 %v4074, 0.044715
        %v4317 = vmul.f32 %v4185, 0.044715
        %v4318 = vmul.f32 %v4187, 0.044715
        %v4319 = vmul.f32 %v4078, 0.044715
        %v4320 = vmul.f32 %v4080, 0.044715
        %v4321 = vmul.f32 %v4191, 0.044715
        %v4322 = vmul.f32 %v4193, 0.044715
        %v4323 = vmul.f32 %v4082, 0.044715
        %v4324 = vmul.f32 %v4084, 0.044715
        %v4325 = vmul.f32 %v4195, 0.044715
        %v4326 = vmul.f32 %v4197, 0.044715
        %v4327 = vmul.f32 %v4263, %v4008
        %v4328 = vmul.f32 %v4264, %v4010
        %v4329 = vmul.f32 %v4265, %v4121
        %v4330 = vmul.f32 %v4266, %v4123
        %v4331 = vmul.f32 %v4267, %v4012
        %v4332 = vmul.f32 %v4268, %v4014
        %v4333 = vmul.f32 %v4269, %v4125
        %v4334 = vmul.f32 %v4270, %v4127
        %v4335 = vmul.f32 %v4271, %v4018
        %v4336 = vmul.f32 %v4272, %v4020
        %v4337 = vmul.f32 %v4273, %v4131
        %v4338 = vmul.f32 %v4274, %v4133
        %v4339 = vmul.f32 %v4275, %v4022
        %v4340 = vmul.f32 %v4276, %v4024
        %v4341 = vmul.f32 %v4277, %v4135
        %v4342 = vmul.f32 %v4278, %v4137
        %v4343 = vmul.f32 %v4279, %v4028
        %v4344 = vmul.f32 %v4280, %v4030
        %v4345 = vmul.f32 %v4281, %v4141
        %v4346 = vmul.f32 %v4282, %v4143
        %v4347 = vmul.f32 %v4283, %v4032
        %v4348 = vmul.f32 %v4284, %v4034
        %v4349 = vmul.f32 %v4285, %v4145
        %v4350 = vmul.f32 %v4286, %v4147
        %v4351 = vmul.f32 %v4287, %v4038
        %v4352 = vmul.f32 %v4288, %v4040
        %v4353 = vmul.f32 %v4289, %v4151
        %v4354 = vmul.f32 %v4290, %v4153
        %v4355 = vmul.f32 %v4291, %v4042
        %v4356 = vmul.f32 %v4292, %v4044
        %v4357 = vmul.f32 %v4293, %v4155
        %v4358 = vmul.f32 %v4294, %v4157
        %v4359 = vmul.f32 %v4295, %v4048
        %v4360 = vmul.f32 %v4296, %v4050
        %v4361 = vmul.f32 %v4297, %v4161
        %v4362 = vmul.f32 %v4298, %v4163
        %v4363 = vmul.f32 %v4299, %v4052
        %v4364 = vmul.f32 %v4300, %v4054
        %v4365 = vmul.f32 %v4301, %v4165
        %v4366 = vmul.f32 %v4302, %v4167
        %v4367 = vmul.f32 %v4303, %v4058
        %v4368 = vmul.f32 %v4304, %v4060
        %v4369 = vmul.f32 %v4305, %v4171
        %v4370 = vmul.f32 %v4306, %v4173
        %v4371 = vmul.f32 %v4307, %v4062
        %v4372 = vmul.f32 %v4308, %v4064
        %v4373 = vmul.f32 %v4309, %v4175
        %v4374 = vmul.f32 %v4310, %v4177
        %v4375 = vmul.f32 %v4311, %v4068
        %v4376 = vmul.f32 %v4312, %v4070
        %v4377 = vmul.f32 %v4313, %v4181
        %v4378 = vmul.f32 %v4314, %v4183
        %v4379 = vmul.f32 %v4315, %v4072
        %v4380 = vmul.f32 %v4316, %v4074
        %v4381 = vmul.f32 %v4317, %v4185
        %v4382 = vmul.f32 %v4318, %v4187
        %v4383 = vmul.f32 %v4319, %v4078
        %v4384 = vmul.f32 %v4320, %v4080
        %v4385 = vmul.f32 %v4321, %v4191
        %v4386 = vmul.f32 %v4322, %v4193
        %v4387 = vmul.f32 %v4323, %v4082
        %v4388 = vmul.f32 %v4324, %v4084
        %v4389 = vmul.f32 %v4325, %v4195
        %v4390 = vmul.f32 %v4326, %v4197
        %v4391 = vmul.f32 %v4327, %v4008
        %v4392 = vmul.f32 %v4328, %v4010
        %v4393 = vmul.f32 %v4329, %v4121
        %v4394 = vmul.f32 %v4330, %v4123
        %v4395 = vmul.f32 %v4331, %v4012
        %v4396 = vmul.f32 %v4332, %v4014
        %v4397 = vmul.f32 %v4333, %v4125
        %v4398 = vmul.f32 %v4334, %v4127
        %v4399 = vmul.f32 %v4335, %v4018
        %v4400 = vmul.f32 %v4336, %v4020
        %v4401 = vmul.f32 %v4337, %v4131
        %v4402 = vmul.f32 %v4338, %v4133
        %v4403 = vmul.f32 %v4339, %v4022
        %v4404 = vmul.f32 %v4340, %v4024
        %v4405 = vmul.f32 %v4341, %v4135
        %v4406 = vmul.f32 %v4342, %v4137
        %v4407 = vmul.f32 %v4343, %v4028
        %v4408 = vmul.f32 %v4344, %v4030
        %v4409 = vmul.f32 %v4345, %v4141
        %v4410 = vmul.f32 %v4346, %v4143
        %v4411 = vmul.f32 %v4347, %v4032
        %v4412 = vmul.f32 %v4348, %v4034
        %v4413 = vmul.f32 %v4349, %v4145
        %v4414 = vmul.f32 %v4350, %v4147
        %v4415 = vmul.f32 %v4351, %v4038
        %v4416 = vmul.f32 %v4352, %v4040
        %v4417 = vmul.f32 %v4353, %v4151
        %v4418 = vmul.f32 %v4354, %v4153
        %v4419 = vmul.f32 %v4355, %v4042
        %v4420 = vmul.f32 %v4356, %v4044
        %v4421 = vmul.f32 %v4357, %v4155
        %v4422 = vmul.f32 %v4358, %v4157
        %v4423 = vmul.f32 %v4359, %v4048
        %v4424 = vmul.f32 %v4360, %v4050
        %v4425 = vmul.f32 %v4361, %v4161
        %v4426 = vmul.f32 %v4362, %v4163
        %v4427 = vmul.f32 %v4363, %v4052
        %v4428 = vmul.f32 %v4364, %v4054
        %v4429 = vmul.f32 %v4365, %v4165
        %v4430 = vmul.f32 %v4366, %v4167
        %v4431 = vmul.f32 %v4367, %v4058
        %v4432 = vmul.f32 %v4368, %v4060
        %v4433 = vmul.f32 %v4369, %v4171
        %v4434 = vmul.f32 %v4370, %v4173
        %v4435 = vmul.f32 %v4371, %v4062
        %v4436 = vmul.f32 %v4372, %v4064
        %v4437 = vmul.f32 %v4373, %v4175
        %v4438 = vmul.f32 %v4374, %v4177
        %v4439 = vmul.f32 %v4375, %v4068
        %v4440 = vmul.f32 %v4376, %v4070
        %v4441 = vmul.f32 %v4377, %v4181
        %v4442 = vmul.f32 %v4378, %v4183
        %v4443 = vmul.f32 %v4379, %v4072
        %v4444 = vmul.f32 %v4380, %v4074
        %v4445 = vmul.f32 %v4381, %v4185
        %v4446 = vmul.f32 %v4382, %v4187
        %v4447 = vmul.f32 %v4383, %v4078
        %v4448 = vmul.f32 %v4384, %v4080
        %v4449 = vmul.f32 %v4385, %v4191
        %v4450 = vmul.f32 %v4386, %v4193
        %v4451 = vmul.f32 %v4387, %v4082
        %v4452 = vmul.f32 %v4388, %v4084
        %v4453 = vmul.f32 %v4389, %v4195
        %v4454 = vmul.f32 %v4390, %v4197
        %v4455 = vadd.f32 %v4008, %v4391
        %v4456 = vadd.f32 %v4010, %v4392
        %v4457 = vadd.f32 %v4121, %v4393
        %v4458 = vadd.f32 %v4123, %v4394
        %v4459 = vadd.f32 %v4012, %v4395
        %v4460 = vadd.f32 %v4014, %v4396
        %v4461 = vadd.f32 %v4125, %v4397
        %v4462 = vadd.f32 %v4127, %v4398
        %v4463 = vadd.f32 %v4018, %v4399
        %v4464 = vadd.f32 %v4020, %v4400
        %v4465 = vadd.f32 %v4131, %v4401
        %v4466 = vadd.f32 %v4133, %v4402
        %v4467 = vadd.f32 %v4022, %v4403
        %v4468 = vadd.f32 %v4024, %v4404
        %v4469 = vadd.f32 %v4135, %v4405
        %v4470 = vadd.f32 %v4137, %v4406
        %v4471 = vadd.f32 %v4028, %v4407
        %v4472 = vadd.f32 %v4030, %v4408
        %v4473 = vadd.f32 %v4141, %v4409
        %v4474 = vadd.f32 %v4143, %v4410
        %v4475 = vadd.f32 %v4032, %v4411
        %v4476 = vadd.f32 %v4034, %v4412
        %v4477 = vadd.f32 %v4145, %v4413
        %v4478 = vadd.f32 %v4147, %v4414
        %v4479 = vadd.f32 %v4038, %v4415
        %v4480 = vadd.f32 %v4040, %v4416
        %v4481 = vadd.f32 %v4151, %v4417
        %v4482 = vadd.f32 %v4153, %v4418
        %v4483 = vadd.f32 %v4042, %v4419
        %v4484 = vadd.f32 %v4044, %v4420
        %v4485 = vadd.f32 %v4155, %v4421
        %v4486 = vadd.f32 %v4157, %v4422
        %v4487 = vadd.f32 %v4048, %v4423
        %v4488 = vadd.f32 %v4050, %v4424
        %v4489 = vadd.f32 %v4161, %v4425
        %v4490 = vadd.f32 %v4163, %v4426
        %v4491 = vadd.f32 %v4052, %v4427
        %v4492 = vadd.f32 %v4054, %v4428
        %v4493 = vadd.f32 %v4165, %v4429
        %v4494 = vadd.f32 %v4167, %v4430
        %v4495 = vadd.f32 %v4058, %v4431
        %v4496 = vadd.f32 %v4060, %v4432
        %v4497 = vadd.f32 %v4171, %v4433
        %v4498 = vadd.f32 %v4173, %v4434
        %v4499 = vadd.f32 %v4062, %v4435
        %v4500 = vadd.f32 %v4064, %v4436
        %v4501 = vadd.f32 %v4175, %v4437
        %v4502 = vadd.f32 %v4177, %v4438
        %v4503 = vadd.f32 %v4068, %v4439
        %v4504 = vadd.f32 %v4070, %v4440
        %v4505 = vadd.f32 %v4181, %v4441
        %v4506 = vadd.f32 %v4183, %v4442
        %v4507 = vadd.f32 %v4072, %v4443
        %v4508 = vadd.f32 %v4074, %v4444
        %v4509 = vadd.f32 %v4185, %v4445
        %v4510 = vadd.f32 %v4187, %v4446
        %v4511 = vadd.f32 %v4078, %v4447
        %v4512 = vadd.f32 %v4080, %v4448
        %v4513 = vadd.f32 %v4191, %v4449
        %v4514 = vadd.f32 %v4193, %v4450
        %v4515 = vadd.f32 %v4082, %v4451
        %v4516 = vadd.f32 %v4084, %v4452
        %v4517 = vadd.f32 %v4195, %v4453
        %v4518 = vadd.f32 %v4197, %v4454
        %v4519 = vmul.f32 %v4455, 0.7978846
        %v4520 = vmul.f32 %v4456, 0.7978846
        %v4521 = vmul.f32 %v4457, 0.7978846
        %v4522 = vmul.f32 %v4458, 0.7978846
        %v4523 = vmul.f32 %v4459, 0.7978846
        %v4524 = vmul.f32 %v4460, 0.7978846
        %v4525 = vmul.f32 %v4461, 0.7978846
        %v4526 = vmul.f32 %v4462, 0.7978846
        %v4527 = vmul.f32 %v4463, 0.7978846
        %v4528 = vmul.f32 %v4464, 0.7978846
        %v4529 = vmul.f32 %v4465, 0.7978846
        %v4530 = vmul.f32 %v4466, 0.7978846
        %v4531 = vmul.f32 %v4467, 0.7978846
        %v4532 = vmul.f32 %v4468, 0.7978846
        %v4533 = vmul.f32 %v4469, 0.7978846
        %v4534 = vmul.f32 %v4470, 0.7978846
        %v4535 = vmul.f32 %v4471, 0.7978846
        %v4536 = vmul.f32 %v4472, 0.7978846
        %v4537 = vmul.f32 %v4473, 0.7978846
        %v4538 = vmul.f32 %v4474, 0.7978846
        %v4539 = vmul.f32 %v4475, 0.7978846
        %v4540 = vmul.f32 %v4476, 0.7978846
        %v4541 = vmul.f32 %v4477, 0.7978846
        %v4542 = vmul.f32 %v4478, 0.7978846
        %v4543 = vmul.f32 %v4479, 0.7978846
        %v4544 = vmul.f32 %v4480, 0.7978846
        %v4545 = vmul.f32 %v4481, 0.7978846
        %v4546 = vmul.f32 %v4482, 0.7978846
        %v4547 = vmul.f32 %v4483, 0.7978846
        %v4548 = vmul.f32 %v4484, 0.7978846
        %v4549 = vmul.f32 %v4485, 0.7978846
        %v4550 = vmul.f32 %v4486, 0.7978846
        %v4551 = vmul.f32 %v4487, 0.7978846
        %v4552 = vmul.f32 %v4488, 0.7978846
        %v4553 = vmul.f32 %v4489, 0.7978846
        %v4554 = vmul.f32 %v4490, 0.7978846
        %v4555 = vmul.f32 %v4491, 0.7978846
        %v4556 = vmul.f32 %v4492, 0.7978846
        %v4557 = vmul.f32 %v4493, 0.7978846
        %v4558 = vmul.f32 %v4494, 0.7978846
        %v4559 = vmul.f32 %v4495, 0.7978846
        %v4560 = vmul.f32 %v4496, 0.7978846
        %v4561 = vmul.f32 %v4497, 0.7978846
        %v4562 = vmul.f32 %v4498, 0.7978846
        %v4563 = vmul.f32 %v4499, 0.7978846
        %v4564 = vmul.f32 %v4500, 0.7978846
        %v4565 = vmul.f32 %v4501, 0.7978846
        %v4566 = vmul.f32 %v4502, 0.7978846
        %v4567 = vmul.f32 %v4503, 0.7978846
        %v4568 = vmul.f32 %v4504, 0.7978846
        %v4569 = vmul.f32 %v4505, 0.7978846
        %v4570 = vmul.f32 %v4506, 0.7978846
        %v4571 = vmul.f32 %v4507, 0.7978846
        %v4572 = vmul.f32 %v4508, 0.7978846
        %v4573 = vmul.f32 %v4509, 0.7978846
        %v4574 = vmul.f32 %v4510, 0.7978846
        %v4575 = vmul.f32 %v4511, 0.7978846
        %v4576 = vmul.f32 %v4512, 0.7978846
        %v4577 = vmul.f32 %v4513, 0.7978846
        %v4578 = vmul.f32 %v4514, 0.7978846
        %v4579 = vmul.f32 %v4515, 0.7978846
        %v4580 = vmul.f32 %v4516, 0.7978846
        %v4581 = vmul.f32 %v4517, 0.7978846
        %v4582 = vmul.f32 %v4518, 0.7978846
        %v4583 = vtanh.pop %v4519
        %v4584 = vtanh.pop %v4520
        %v4585 = vtanh.pop %v4521
        %v4586 = vtanh.pop %v4522
        %v4587 = vtanh.pop %v4523
        %v4588 = vtanh.pop %v4524
        %v4589 = vtanh.pop %v4525
        %v4590 = vtanh.pop %v4526
        %v4591 = vtanh.pop %v4527
        %v4592 = vtanh.pop %v4528
        %v4593 = vtanh.pop %v4529
        %v4594 = vtanh.pop %v4530
        %v4595 = vtanh.pop %v4531
        %v4596 = vtanh.pop %v4532
        %v4597 = vtanh.pop %v4533
        %v4598 = vtanh.pop %v4534
        %v4599 = vtanh.pop %v4535
        %v4600 = vtanh.pop %v4536
        %v4601 = vtanh.pop %v4537
        %v4602 = vtanh.pop %v4538
        %v4603 = vtanh.pop %v4539
        %v4604 = vtanh.pop %v4540
        %v4605 = vtanh.pop %v4541
        %v4606 = vtanh.pop %v4542
        %v4607 = vtanh.pop %v4543
        %v4608 = vtanh.pop %v4544
        %v4609 = vtanh.pop %v4545
        %v4610 = vtanh.pop %v4546
        %v4611 = vtanh.pop %v4547
        %v4612 = vtanh.pop %v4548
        %v4613 = vtanh.pop %v4549
        %v4614 = vtanh.pop %v4550
        %v4615 = vtanh.pop %v4551
        %v4616 = vtanh.pop %v4552
        %v4617 = vtanh.pop %v4553
        %v4618 = vtanh.pop %v4554
        %v4619 = vtanh.pop %v4555
        %v4620 = vtanh.pop %v4556
        %v4621 = vtanh.pop %v4557
        %v4622 = vtanh.pop %v4558
        %v4623 = vtanh.pop %v4559
        %v4624 = vtanh.pop %v4560
        %v4625 = vtanh.pop %v4561
        %v4626 = vtanh.pop %v4562
        %v4627 = vtanh.pop %v4563
        %v4628 = vtanh.pop %v4564
        %v4629 = vtanh.pop %v4565
        %v4630 = vtanh.pop %v4566
        %v4631 = vtanh.pop %v4567
        %v4632 = vtanh.pop %v4568
        %v4633 = vtanh.pop %v4569
        %v4634 = vtanh.pop %v4570
        %v4635 = vtanh.pop %v4571
        %v4636 = vtanh.pop %v4572
        %v4637 = vtanh.pop %v4573
        %v4638 = vtanh.pop %v4574
        %v4639 = vtanh.pop %v4575
        %v4640 = vtanh.pop %v4576
        %v4641 = vtanh.pop %v4577
        %v4642 = vtanh.pop %v4578
        %v4643 = vtanh.pop %v4579
        %v4644 = vtanh.pop %v4580
        %v4645 = vtanh.pop %v4581
        %v4646 = vtanh.pop %v4582
        %v4647 = vadd.f32 %v4583, 1.0
        %v4648 = vadd.f32 %v4584, 1.0
        %v4649 = vadd.f32 %v4585, 1.0
        %v4650 = vadd.f32 %v4586, 1.0
        %v4651 = vadd.f32 %v4587, 1.0
        %v4652 = vadd.f32 %v4588, 1.0
        %v4653 = vadd.f32 %v4589, 1.0
        %v4654 = vadd.f32 %v4590, 1.0
        %v4655 = vadd.f32 %v4591, 1.0
        %v4656 = vadd.f32 %v4592, 1.0
        %v4657 = vadd.f32 %v4593, 1.0
        %v4658 = vadd.f32 %v4594, 1.0
        %v4659 = vadd.f32 %v4595, 1.0
        %v4660 = vadd.f32 %v4596, 1.0
        %v4661 = vadd.f32 %v4597, 1.0
        %v4662 = vadd.f32 %v4598, 1.0
        %v4663 = vadd.f32 %v4599, 1.0
        %v4664 = vadd.f32 %v4600, 1.0
        %v4665 = vadd.f32 %v4601, 1.0
        %v4666 = vadd.f32 %v4602, 1.0
        %v4667 = vadd.f32 %v4603, 1.0
        %v4668 = vadd.f32 %v4604, 1.0
        %v4669 = vadd.f32 %v4605, 1.0
        %v4670 = vadd.f32 %v4606, 1.0
        %v4671 = vadd.f32 %v4607, 1.0
        %v4672 = vadd.f32 %v4608, 1.0
        %v4673 = vadd.f32 %v4609, 1.0
        %v4674 = vadd.f32 %v4610, 1.0
        %v4675 = vadd.f32 %v4611, 1.0
        %v4676 = vadd.f32 %v4612, 1.0
        %v4677 = vadd.f32 %v4613, 1.0
        %v4678 = vadd.f32 %v4614, 1.0
        %v4679 = vadd.f32 %v4615, 1.0
        %v4680 = vadd.f32 %v4616, 1.0
        %v4681 = vadd.f32 %v4617, 1.0
        %v4682 = vadd.f32 %v4618, 1.0
        %v4683 = vadd.f32 %v4619, 1.0
        %v4684 = vadd.f32 %v4620, 1.0
        %v4685 = vadd.f32 %v4621, 1.0
        %v4686 = vadd.f32 %v4622, 1.0
        %v4687 = vadd.f32 %v4623, 1.0
        %v4688 = vadd.f32 %v4624, 1.0
        %v4689 = vadd.f32 %v4625, 1.0
        %v4690 = vadd.f32 %v4626, 1.0
        %v4691 = vadd.f32 %v4627, 1.0
        %v4692 = vadd.f32 %v4628, 1.0
        %v4693 = vadd.f32 %v4629, 1.0
        %v4694 = vadd.f32 %v4630, 1.0
        %v4695 = vadd.f32 %v4631, 1.0
        %v4696 = vadd.f32 %v4632, 1.0
        %v4697 = vadd.f32 %v4633, 1.0
        %v4698 = vadd.f32 %v4634, 1.0
        %v4699 = vadd.f32 %v4635, 1.0
        %v4700 = vadd.f32 %v4636, 1.0
        %v4701 = vadd.f32 %v4637, 1.0
        %v4702 = vadd.f32 %v4638, 1.0
        %v4703 = vadd.f32 %v4639, 1.0
        %v4704 = vadd.f32 %v4640, 1.0
        %v4705 = vadd.f32 %v4641, 1.0
        %v4706 = vadd.f32 %v4642, 1.0
        %v4707 = vadd.f32 %v4643, 1.0
        %v4708 = vadd.f32 %v4644, 1.0
        %v4709 = vadd.f32 %v4645, 1.0
        %v4710 = vadd.f32 %v4646, 1.0
        %v4711 = vmul.f32 %v4199, %v4647
        %v4712 = vmul.f32 %v4200, %v4648
        %v4713 = vmul.f32 %v4201, %v4649
        %v4714 = vmul.f32 %v4202, %v4650
        %v4715 = vmul.f32 %v4203, %v4651
        %v4716 = vmul.f32 %v4204, %v4652
        %v4717 = vmul.f32 %v4205, %v4653
        %v4718 = vmul.f32 %v4206, %v4654
        %v4719 = vmul.f32 %v4207, %v4655
        %v4720 = vmul.f32 %v4208, %v4656
        %v4721 = vmul.f32 %v4209, %v4657
        %v4722 = vmul.f32 %v4210, %v4658
        %v4723 = vmul.f32 %v4211, %v4659
        %v4724 = vmul.f32 %v4212, %v4660
        %v4725 = vmul.f32 %v4213, %v4661
        %v4726 = vmul.f32 %v4214, %v4662
        %v4727 = vmul.f32 %v4215, %v4663
        %v4728 = vmul.f32 %v4216, %v4664
        %v4729 = vmul.f32 %v4217, %v4665
        %v4730 = vmul.f32 %v4218, %v4666
        %v4731 = vmul.f32 %v4219, %v4667
        %v4732 = vmul.f32 %v4220, %v4668
        %v4733 = vmul.f32 %v4221, %v4669
        %v4734 = vmul.f32 %v4222, %v4670
        %v4735 = vmul.f32 %v4223, %v4671
        %v4736 = vmul.f32 %v4224, %v4672
        %v4737 = vmul.f32 %v4225, %v4673
        %v4738 = vmul.f32 %v4226, %v4674
        %v4739 = vmul.f32 %v4227, %v4675
        %v4740 = vmul.f32 %v4228, %v4676
        %v4741 = vmul.f32 %v4229, %v4677
        %v4742 = vmul.f32 %v4230, %v4678
        %v4743 = vmul.f32 %v4231, %v4679
        %v4744 = vmul.f32 %v4232, %v4680
        %v4745 = vmul.f32 %v4233, %v4681
        %v4746 = vmul.f32 %v4234, %v4682
        %v4747 = vmul.f32 %v4235, %v4683
        %v4748 = vmul.f32 %v4236, %v4684
        %v4749 = vmul.f32 %v4237, %v4685
        %v4750 = vmul.f32 %v4238, %v4686
        %v4751 = vmul.f32 %v4239, %v4687
        %v4752 = vmul.f32 %v4240, %v4688
        %v4753 = vmul.f32 %v4241, %v4689
        %v4754 = vmul.f32 %v4242, %v4690
        %v4755 = vmul.f32 %v4243, %v4691
        %v4756 = vmul.f32 %v4244, %v4692
        %v4757 = vmul.f32 %v4245, %v4693
        %v4758 = vmul.f32 %v4246, %v4694
        %v4759 = vmul.f32 %v4247, %v4695
        %v4760 = vmul.f32 %v4248, %v4696
        %v4761 = vmul.f32 %v4249, %v4697
        %v4762 = vmul.f32 %v4250, %v4698
        %v4763 = vmul.f32 %v4251, %v4699
        %v4764 = vmul.f32 %v4252, %v4700
        %v4765 = vmul.f32 %v4253, %v4701
        %v4766 = vmul.f32 %v4254, %v4702
        %v4767 = vmul.f32 %v4255, %v4703
        %v4768 = vmul.f32 %v4256, %v4704
        %v4769 = vmul.f32 %v4257, %v4705
        %v4770 = vmul.f32 %v4258, %v4706
        %v4771 = vmul.f32 %v4259, %v4707
        %v4772 = vmul.f32 %v4260, %v4708
        %v4773 = vmul.f32 %v4261, %v4709
        %v4774 = vmul.f32 %v4262, %v4710
        %v4775 = vpack.c.bf16 %v4715, %v4711
        %v4776 = vpack.c.bf16 %v4716, %v4712
        %v4777 = vpack.c.bf16 %v4717, %v4713
        %v4778 = vpack.c.bf16 %v4718, %v4714
        %v4779 = vpack.c.bf16 %v4723, %v4719
        %v4780 = vpack.c.bf16 %v4724, %v4720
        %v4781 = vpack.c.bf16 %v4725, %v4721
        %v4782 = vpack.c.bf16 %v4726, %v4722
        %v4783 = vpack.c.bf16 %v4731, %v4727
        %v4784 = vpack.c.bf16 %v4732, %v4728
        %v4785 = vpack.c.bf16 %v4733, %v4729
        %v4786 = vpack.c.bf16 %v4734, %v4730
        %v4787 = vpack.c.bf16 %v4739, %v4735
        %v4788 = vpack.c.bf16 %v4740, %v4736
        %v4789 = vpack.c.bf16 %v4741, %v4737
        %v4790 = vpack.c.bf16 %v4742, %v4738
        %v4791 = vpack.c.bf16 %v4747, %v4743
        %v4792 = vpack.c.bf16 %v4748, %v4744
        %v4793 = vpack.c.bf16 %v4749, %v4745
        %v4794 = vpack.c.bf16 %v4750, %v4746
        %v4795 = vpack.c.bf16 %v4755, %v4751
        %v4796 = vpack.c.bf16 %v4756, %v4752
        %v4797 = vpack.c.bf16 %v4757, %v4753
        %v4798 = vpack.c.bf16 %v4758, %v4754
        %v4799 = vpack.c.bf16 %v4763, %v4759
        %v4800 = vpack.c.bf16 %v4764, %v4760
        %v4801 = vpack.c.bf16 %v4765, %v4761
        %v4802 = vpack.c.bf16 %v4766, %v4762
        %v4803 = vpack.c.bf16 %v4771, %v4767
        %v4804 = vpack.c.bf16 %v4772, %v4768
        %v4805 = vpack.c.bf16 %v4773, %v4769
        %v4806 = vpack.c.bf16 %v4774, %v4770
        %v4807 = vld [vmem:[%s1168] sm:$0xf]
        %v4808 = vld [vmem:[%s1168 + $0x4] sm:$0xf]
        %v4809 = vld [vmem:[%s1168 + $0x8] sm:$0xf]
        %v4810 = vld [vmem:[%s1168 + $0xc] sm:$0xf]
        %v4811 = vld [vmem:[%s1168 + $0x10] sm:$0xf]
        %v4812 = vld [vmem:[%s1168 + $0x14] sm:$0xf]
        %v4813 = vld [vmem:[%s1168 + $0x18] sm:$0xf]
        %v4814 = vld [vmem:[%s1168 + $0x1c] sm:$0xf]
        %v4815 = vld [vmem:[%s1168 + $0x20] sm:$0xf]
        %v4816 = vld [vmem:[%s1168 + $0x24] sm:$0xf]
        %v4817 = vld [vmem:[%s1168 + $0x28] sm:$0xf]
        %v4818 = vld [vmem:[%s1168 + $0x2c] sm:$0xf]
        %v4819 = vld [vmem:[%s1168 + $0x30] sm:$0xf]
        %v4820 = vld [vmem:[%s1168 + $0x34] sm:$0xf]
        %v4821 = vld [vmem:[%s1168 + $0x38] sm:$0xf]
        %v4822 = vld [vmem:[%s1168 + $0x3c] sm:$0xf]
        %v4823 = vld [vmem:[%s1168 + $0x40] sm:$0xf]
        %v4824 = vld [vmem:[%s1168 + $0x44] sm:$0xf]
        %v4825 = vld [vmem:[%s1168 + $0x48] sm:$0xf]
        %v4826 = vld [vmem:[%s1168 + $0x4c] sm:$0xf]
        %v4827 = vld [vmem:[%s1168 + $0x50] sm:$0xf]
        %v4828 = vld [vmem:[%s1168 + $0x54] sm:$0xf]
        %v4829 = vld [vmem:[%s1168 + $0x58] sm:$0xf]
        %v4830 = vld [vmem:[%s1168 + $0x5c] sm:$0xf]
        %v4831 = vld [vmem:[%s1168 + $0x60] sm:$0xf]
        %v4832 = vld [vmem:[%s1168 + $0x64] sm:$0xf]
        %v4833 = vld [vmem:[%s1168 + $0x68] sm:$0xf]
        %v4834 = vld [vmem:[%s1168 + $0x6c] sm:$0xf]
        %v4835 = vld [vmem:[%s1168 + $0x70] sm:$0xf]
        %v4836 = vld [vmem:[%s1168 + $0x74] sm:$0xf]
        %v4837 = vld [vmem:[%s1168 + $0x78] sm:$0xf]
        %v4838 = vld [vmem:[%s1168 + $0x7c] sm:$0xf]
        %v4839 = vld [vmem:[%s1168 + $0x80] sm:$0xf]
        %v4840 = vld [vmem:[%s1168 + $0x84] sm:$0xf]
        %v4841 = vld [vmem:[%s1168 + $0x88] sm:$0xf]
        %v4842 = vld [vmem:[%s1168 + $0x8c] sm:$0xf]
        %v4843 = vld [vmem:[%s1168 + $0x90] sm:$0xf]
        %v4844 = vld [vmem:[%s1168 + $0x94] sm:$0xf]
        %v4845 = vld [vmem:[%s1168 + $0x98] sm:$0xf]
        %v4846 = vld [vmem:[%s1168 + $0x9c] sm:$0xf]
        %v4847 = vld [vmem:[%s1168 + $0xa0] sm:$0xf]
        %v4848 = vld [vmem:[%s1168 + $0xa4] sm:$0xf]
        %v4849 = vld [vmem:[%s1168 + $0xa8] sm:$0xf]
        %v4850 = vld [vmem:[%s1168 + $0xac] sm:$0xf]
        %v4851 = vld [vmem:[%s1168 + $0xb0] sm:$0xf]
        %v4852 = vld [vmem:[%s1168 + $0xb4] sm:$0xf]
        %v4853 = vld [vmem:[%s1168 + $0xb8] sm:$0xf]
        %v4854 = vld [vmem:[%s1168 + $0xbc] sm:$0xf]
        %v4855 = vld [vmem:[%s1168 + $0xc0] sm:$0xf]
        %v4856 = vld [vmem:[%s1168 + $0xc4] sm:$0xf]
        %v4857 = vld [vmem:[%s1168 + $0xc8] sm:$0xf]
        %v4858 = vld [vmem:[%s1168 + $0xcc] sm:$0xf]
        %v4859 = vld [vmem:[%s1168 + $0xd0] sm:$0xf]
        %v4860 = vld [vmem:[%s1168 + $0xd4] sm:$0xf]
        %v4861 = vld [vmem:[%s1168 + $0xd8] sm:$0xf]
        %v4862 = vld [vmem:[%s1168 + $0xdc] sm:$0xf]
        %v4863 = vld [vmem:[%s1168 + $0xe0] sm:$0xf]
        %v4864 = vld [vmem:[%s1168 + $0xe4] sm:$0xf]
        %v4865 = vld [vmem:[%s1168 + $0xe8] sm:$0xf]
        %v4866 = vld [vmem:[%s1168 + $0xec] sm:$0xf]
        %v4867 = vld [vmem:[%s1168 + $0xf0] sm:$0xf]
        %v4868 = vld [vmem:[%s1168 + $0xf4] sm:$0xf]
        %v4869 = vld [vmem:[%s1168 + $0xf8] sm:$0xf]
        %v4870 = vld [vmem:[%s1168 + $0xfc] sm:$0xf]
        %v4935 = vunpack.c.l.b16 %v4807
        %v4936 = vunpack.c.l.b16 %v4808
        %v4937 = vunpack.c.l.b16 %v4809
        %v4938 = vunpack.c.l.b16 %v4810
        %v4939 = vunpack.c.l.b16 %v4811
        %v4940 = vunpack.c.l.b16 %v4812
        %v4941 = vunpack.c.l.b16 %v4813
        %v4942 = vunpack.c.l.b16 %v4814
        %v4943 = vunpack.c.l.b16 %v4815
        %v4944 = vunpack.c.l.b16 %v4816
        %v4945 = vunpack.c.l.b16 %v4817
        %v4946 = vunpack.c.l.b16 %v4818
        %v4947 = vunpack.c.l.b16 %v4819
        %v4948 = vunpack.c.l.b16 %v4820
        %v4949 = vunpack.c.l.b16 %v4821
        %v4950 = vunpack.c.l.b16 %v4822
        %v4951 = vunpack.c.l.b16 %v4823
        %v4952 = vunpack.c.l.b16 %v4824
        %v4953 = vunpack.c.l.b16 %v4825
        %v4954 = vunpack.c.l.b16 %v4826
        %v4955 = vunpack.c.l.b16 %v4827
        %v4956 = vunpack.c.l.b16 %v4828
        %v4957 = vunpack.c.l.b16 %v4829
        %v4958 = vunpack.c.l.b16 %v4830
        %v4959 = vunpack.c.l.b16 %v4831
        %v4960 = vunpack.c.l.b16 %v4832
        %v4961 = vunpack.c.l.b16 %v4833
        %v4962 = vunpack.c.l.b16 %v4834
        %v4963 = vunpack.c.l.b16 %v4835
        %v4964 = vunpack.c.l.b16 %v4836
        %v4965 = vunpack.c.l.b16 %v4837
        %v4966 = vunpack.c.l.b16 %v4838
        %v4967 = vunpack.c.l.b16 %v4839
        %v4968 = vunpack.c.l.b16 %v4840
        %v4969 = vunpack.c.l.b16 %v4841
        %v4970 = vunpack.c.l.b16 %v4842
        %v4971 = vunpack.c.l.b16 %v4843
        %v4972 = vunpack.c.l.b16 %v4844
        %v4973 = vunpack.c.l.b16 %v4845
        %v4974 = vunpack.c.l.b16 %v4846
        %v4975 = vunpack.c.l.b16 %v4847
        %v4976 = vunpack.c.l.b16 %v4848
        %v4977 = vunpack.c.l.b16 %v4849
        %v4978 = vunpack.c.l.b16 %v4850
        %v4979 = vunpack.c.l.b16 %v4851
        %v4980 = vunpack.c.l.b16 %v4852
        %v4981 = vunpack.c.l.b16 %v4853
        %v4982 = vunpack.c.l.b16 %v4854
        %v4983 = vunpack.c.l.b16 %v4855
        %v4984 = vunpack.c.l.b16 %v4856
        %v4985 = vunpack.c.l.b16 %v4857
        %v4986 = vunpack.c.l.b16 %v4858
        %v4987 = vunpack.c.l.b16 %v4859
        %v4988 = vunpack.c.l.b16 %v4860
        %v4989 = vunpack.c.l.b16 %v4861
        %v4990 = vunpack.c.l.b16 %v4862
        %v4991 = vunpack.c.l.b16 %v4863
        %v4992 = vunpack.c.l.b16 %v4864
        %v4993 = vunpack.c.l.b16 %v4865
        %v4994 = vunpack.c.l.b16 %v4866
        %v4995 = vunpack.c.l.b16 %v4867
        %v4996 = vunpack.c.l.b16 %v4868
        %v4997 = vunpack.c.l.b16 %v4869
        %v4998 = vunpack.c.l.b16 %v4870
        %v4999 = vpack.c.b16 %v4936, %v4935
        %v5000 = vpack.c.b16 %v4938, %v4937
        %v5001 = vpack.c.b16 %v4940, %v4939
        %v5002 = vpack.c.b16 %v4942, %v4941
        %v5003 = vpack.c.b16 %v4944, %v4943
        %v5004 = vpack.c.b16 %v4946, %v4945
        %v5005 = vpack.c.b16 %v4948, %v4947
        %v5006 = vpack.c.b16 %v4950, %v4949
        %v5007 = vpack.c.b16 %v4952, %v4951
        %v5008 = vpack.c.b16 %v4954, %v4953
        %v5009 = vpack.c.b16 %v4956, %v4955
        %v5010 = vpack.c.b16 %v4958, %v4957
        %v5011 = vpack.c.b16 %v4960, %v4959
        %v5012 = vpack.c.b16 %v4962, %v4961
        %v5013 = vpack.c.b16 %v4964, %v4963
        %v5014 = vpack.c.b16 %v4966, %v4965
        %v5015 = vpack.c.b16 %v4968, %v4967
        %v5016 = vpack.c.b16 %v4970, %v4969
        %v5017 = vpack.c.b16 %v4972, %v4971
        %v5018 = vpack.c.b16 %v4974, %v4973
        %v5019 = vpack.c.b16 %v4976, %v4975
        %v5020 = vpack.c.b16 %v4978, %v4977
        %v5021 = vpack.c.b16 %v4980, %v4979
        %v5022 = vpack.c.b16 %v4982, %v4981
        %v5023 = vpack.c.b16 %v4984, %v4983
        %v5024 = vpack.c.b16 %v4986, %v4985
        %v5025 = vpack.c.b16 %v4988, %v4987
        %v5026 = vpack.c.b16 %v4990, %v4989
        %v5027 = vpack.c.b16 %v4992, %v4991
        %v5028 = vpack.c.b16 %v4994, %v4993
        %v5029 = vpack.c.b16 %v4996, %v4995
        %v5030 = vpack.c.b16 %v4998, %v4997
        %5063 = vmatprep.subr.bf16.mxu0 0
        %5064 = vmatpush1.bf16.msra.mxu0 %v4999
        %5065 = vmatprep.subr.bf16.mxu0 0
        %5066 = vmatpush1.bf16.msra.mxu0 %v5000
        %5067 = vmatprep.subr.bf16.mxu0 0
        %5068 = vmatpush1.bf16.msra.mxu0 %v5001
        %5069 = vmatprep.subr.bf16.mxu0 0
        %5070 = vmatpush1.bf16.msra.mxu0 %v5002
        %5071 = vmatprep.subr.bf16.mxu0 0
        %5072 = vmatpush1.bf16.msra.mxu0 %v5003
        %5073 = vmatprep.subr.bf16.mxu0 0
        %5074 = vmatpush1.bf16.msra.mxu0 %v5004
        %5075 = vmatprep.subr.bf16.mxu0 0
        %5076 = vmatpush1.bf16.msra.mxu0 %v5005
        %5077 = vmatprep.subr.bf16.mxu0 0
        %5078 = vmatpush1.bf16.msra.mxu0 %v5006
        %5079 = vmatprep.subr.bf16.mxu0 0
        %5080 = vmatpush1.bf16.msra.mxu0 %v5007
        %5081 = vmatprep.subr.bf16.mxu0 0
        %5082 = vmatpush1.bf16.msra.mxu0 %v5008
        %5083 = vmatprep.subr.bf16.mxu0 0
        %5084 = vmatpush1.bf16.msra.mxu0 %v5009
        %5085 = vmatprep.subr.bf16.mxu0 0
        %5086 = vmatpush1.bf16.msra.mxu0 %v5010
        %5087 = vmatprep.subr.bf16.mxu0 0
        %5088 = vmatpush1.bf16.msra.mxu0 %v5011
        %5089 = vmatprep.subr.bf16.mxu0 0
        %5090 = vmatpush1.bf16.msra.mxu0 %v5012
        %5091 = vmatprep.subr.bf16.mxu0 0
        %5092 = vmatpush1.bf16.msra.mxu0 %v5013
        %5093 = vmatprep.subr.bf16.mxu0 0
        %5094 = vmatpush1.bf16.msra.mxu0 %v5014
        %5095 = vmatprep.mubr.bf16.mxu0 %v4776
        %5096 = vmatmul.mubr.bf16.gmra.mrb[0].mxu0 %v4775
        %v5097 = vpop.f32.mrb[0].mxu0
        %v5098 = vadd.f32 0.0, %v5097
        %v5099 = vpop.f32.mrb[0].mxu0
        %v5100 = vpop.f32.mrb[0].mxu0
        %v5101 = vadd.f32 0.0, %v5100
        %v5102 = vpop.f32.mrb[0].mxu0
        %5103 = vmatprep.mubr.bf16.mxu0 %v4780
        %5104 = vmatmul.mubr.bf16.gmra.mrb[0].mxu0 %v4779
        %v5105 = vpop.f32.mrb[0].mxu0
        %v5106 = vadd.f32 0.0, %v5105
        %v5107 = vpop.f32.mrb[0].mxu0
        %v5108 = vpop.f32.mrb[0].mxu0
        %v5109 = vadd.f32 0.0, %v5108
        %v5110 = vpop.f32.mrb[0].mxu0
        %5111 = vmatprep.mubr.bf16.mxu0 %v4784
        %5112 = vmatmul.mubr.bf16.gmra.mrb[0].mxu0 %v4783
        %v5113 = vpop.f32.mrb[0].mxu0
        %v5114 = vadd.f32 0.0, %v5113
        %v5115 = vpop.f32.mrb[0].mxu0
        %v5116 = vpop.f32.mrb[0].mxu0
        %v5117 = vadd.f32 0.0, %v5116
        %v5118 = vpop.f32.mrb[0].mxu0
        %5119 = vmatprep.mubr.bf16.mxu0 %v4788
        %5120 = vmatmul.mubr.bf16.gmra.mrb[0].mxu0 %v4787
        %v5121 = vpop.f32.mrb[0].mxu0
        %v5122 = vadd.f32 0.0, %v5121
        %v5123 = vpop.f32.mrb[0].mxu0
        %v5124 = vpop.f32.mrb[0].mxu0
        %v5125 = vadd.f32 0.0, %v5124
        %v5126 = vpop.f32.mrb[0].mxu0
        %5127 = vmatprep.mubr.bf16.mxu0 %v4792
        %5128 = vmatmul.mubr.bf16.gmra.mrb[0].mxu0 %v4791
        %v5129 = vpop.f32.mrb[0].mxu0
        %v5130 = vadd.f32 0.0, %v5129
        %v5131 = vpop.f32.mrb[0].mxu0
        %v5132 = vpop.f32.mrb[0].mxu0
        %v5133 = vadd.f32 0.0, %v5132
        %v5134 = vpop.f32.mrb[0].mxu0
        %5135 = vmatprep.mubr.bf16.mxu0 %v4796
        %5136 = vmatmul.mubr.bf16.gmra.mrb[0].mxu0 %v4795
        %v5137 = vpop.f32.mrb[0].mxu0
        %v5138 = vadd.f32 0.0, %v5137
        %v5139 = vpop.f32.mrb[0].mxu0
        %v5140 = vpop.f32.mrb[0].mxu0
        %v5141 = vadd.f32 0.0, %v5140
        %v5142 = vpop.f32.mrb[0].mxu0
        %5143 = vmatprep.mubr.bf16.mxu0 %v4800
        %5144 = vmatmul.mubr.bf16.gmra.mrb[0].mxu0 %v4799
        %v5145 = vpop.f32.mrb[0].mxu0
        %v5146 = vadd.f32 0.0, %v5145
        %v5147 = vpop.f32.mrb[0].mxu0
        %v5148 = vpop.f32.mrb[0].mxu0
        %v5149 = vadd.f32 0.0, %v5148
        %v5150 = vpop.f32.mrb[0].mxu0
        %5151 = vmatprep.mubr.bf16.mxu0 %v4804
        %5152 = vmatmul.mubr.bf16.gmra.mrb[0].mxu0 %v4803
        %v5153 = vpop.f32.mrb[0].mxu0
        %v5154 = vadd.f32 0.0, %v5153
        %v5155 = vpop.f32.mrb[0].mxu0
        %v5156 = vpop.f32.mrb[0].mxu0
        %v5157 = vadd.f32 0.0, %v5156
        %v5158 = vpop.f32.mrb[0].mxu0
        %5159 = vdwg.mxu0
        %5160 = vmatprep.subr.bf16.mxu0 0
        %5161 = vmatpush1.bf16.msra.mxu0 %v5015
        %5162 = vmatprep.subr.bf16.mxu0 0
        %5163 = vmatpush1.bf16.msra.mxu0 %v5016
        %5164 = vmatprep.subr.bf16.mxu0 0
        %5165 = vmatpush1.bf16.msra.mxu0 %v5017
        %5166 = vmatprep.subr.bf16.mxu0 0
        %5167 = vmatpush1.bf16.msra.mxu0 %v5018
        %5168 = vmatprep.subr.bf16.mxu0 0
        %5169 = vmatpush1.bf16.msra.mxu0 %v5019
        %5170 = vmatprep.subr.bf16.mxu0 0
        %5171 = vmatpush1.bf16.msra.mxu0 %v5020
        %5172 = vmatprep.subr.bf16.mxu0 0
        %5173 = vmatpush1.bf16.msra.mxu0 %v5021
        %5174 = vmatprep.subr.bf16.mxu0 0
        %5175 = vmatpush1.bf16.msra.mxu0 %v5022
        %5176 = vmatprep.subr.bf16.mxu0 0
        %5177 = vmatpush1.bf16.msra.mxu0 %v5023
        %5178 = vmatprep.subr.bf16.mxu0 0
        %5179 = vmatpush1.bf16.msra.mxu0 %v5024
        %5180 = vmatprep.subr.bf16.mxu0 0
        %5181 = vmatpush1.bf16.msra.mxu0 %v5025
        %5182 = vmatprep.subr.bf16.mxu0 0
        %5183 = vmatpush1.bf16.msra.mxu0 %v5026
        %5184 = vmatprep.subr.bf16.mxu0 0
        %5185 = vmatpush1.bf16.msra.mxu0 %v5027
        %5186 = vmatprep.subr.bf16.mxu0 0
        %5187 = vmatpush1.bf16.msra.mxu0 %v5028
        %5188 = vmatprep.subr.bf16.mxu0 0
        %5189 = vmatpush1.bf16.msra.mxu0 %v5029
        %5190 = vmatprep.subr.bf16.mxu0 0
        %5191 = vmatpush1.bf16.msra.mxu0 %v5030
        %5192 = vmatprep.mubr.bf16.mxu0 %v4778
        %5193 = vmatmul.mubr.bf16.gmra.mrb[0].mxu0 %v4777
        %v5194 = vpop.f32.mrb[0].mxu0
        %v5195 = vadd.f32 %v5098, %v5194
        %v5196 = vpop.f32.mrb[0].mxu0
        %v5197 = vpop.f32.mrb[0].mxu0
        %v5198 = vadd.f32 %v5101, %v5197
        %v5199 = vpop.f32.mrb[0].mxu0
        %5200 = vmatprep.mubr.bf16.mxu0 %v4782
        %5201 = vmatmul.mubr.bf16.gmra.mrb[0].mxu0 %v4781
        %v5202 = vpop.f32.mrb[0].mxu0
        %v5203 = vadd.f32 %v5106, %v5202
        %v5204 = vpop.f32.mrb[0].mxu0
        %v5205 = vpop.f32.mrb[0].mxu0
        %v5206 = vadd.f32 %v5109, %v5205
        %v5207 = vpop.f32.mrb[0].mxu0
        %5208 = vmatprep.mubr.bf16.mxu0 %v4786
        %5209 = vmatmul.mubr.bf16.gmra.mrb[0].mxu0 %v4785
        %v5210 = vpop.f32.mrb[0].mxu0
        %v5211 = vadd.f32 %v5114, %v5210
        %v5212 = vpop.f32.mrb[0].mxu0
        %v5213 = vpop.f32.mrb[0].mxu0
        %v5214 = vadd.f32 %v5117, %v5213
        %v5215 = vpop.f32.mrb[0].mxu0
        %5216 = vmatprep.mubr.bf16.mxu0 %v4790
        %5217 = vmatmul.mubr.bf16.gmra.mrb[0].mxu0 %v4789
        %v5218 = vpop.f32.mrb[0].mxu0
        %v5219 = vadd.f32 %v5122, %v5218
        %v5220 = vpop.f32.mrb[0].mxu0
        %v5221 = vpop.f32.mrb[0].mxu0
        %v5222 = vadd.f32 %v5125, %v5221
        %v5223 = vpop.f32.mrb[0].mxu0
        %5224 = vmatprep.mubr.bf16.mxu0 %v4794
        %5225 = vmatmul.mubr.bf16.gmra.mrb[0].mxu0 %v4793
        %v5226 = vpop.f32.mrb[0].mxu0
        %v5227 = vadd.f32 %v5130, %v5226
        %v5228 = vpop.f32.mrb[0].mxu0
        %v5229 = vpop.f32.mrb[0].mxu0
        %v5230 = vadd.f32 %v5133, %v5229
        %v5231 = vpop.f32.mrb[0].mxu0
        %5232 = vmatprep.mubr.bf16.mxu0 %v4798
        %5233 = vmatmul.mubr.bf16.gmra.mrb[0].mxu0 %v4797
        %v5234 = vpop.f32.mrb[0].mxu0
        %v5235 = vadd.f32 %v5138, %v5234
        %v5236 = vpop.f32.mrb[0].mxu0
        %v5237 = vpop.f32.mrb[0].mxu0
        %v5238 = vadd.f32 %v5141, %v5237
        %v5239 = vpop.f32.mrb[0].mxu0
        %5240 = vmatprep.mubr.bf16.mxu0 %v4802
        %5241 = vmatmul.mubr.bf16.gmra.mrb[0].mxu0 %v4801
        %v5242 = vpop.f32.mrb[0].mxu0
        %v5243 = vadd.f32 %v5146, %v5242
        %v5244 = vpop.f32.mrb[0].mxu0
        %v5245 = vpop.f32.mrb[0].mxu0
        %v5246 = vadd.f32 %v5149, %v5245
        %v5247 = vpop.f32.mrb[0].mxu0
        %5248 = vmatprep.mubr.bf16.mxu0 %v4806
        %5249 = vmatmul.mubr.bf16.gmra.mrb[0].mxu0 %v4805
        %v5250 = vpop.f32.mrb[0].mxu0
        %v5251 = vadd.f32 %v5154, %v5250
        %v5252 = vpop.f32.mrb[0].mxu0
        %v5253 = vpop.f32.mrb[0].mxu0
        %v5254 = vadd.f32 %v5157, %v5253
        %v5255 = vpop.f32.mrb[0].mxu0
        %5256 = vdwg.mxu0
        %v5257 = vadd.f32 %v3513, %v5195
        %v5258 = vadd.f32 %v3514, %v5198
        %v5259 = vadd.f32 %v3515, %v5203
        %v5260 = vadd.f32 %v3516, %v5206
        %v5261 = vadd.f32 %v3517, %v5211
        %v5262 = vadd.f32 %v3518, %v5214
        %v5263 = vadd.f32 %v3519, %v5219
        %v5264 = vadd.f32 %v3520, %v5222
        %v5265 = vadd.f32 %v3521, %v5227
        %v5266 = vadd.f32 %v3522, %v5230
        %v5267 = vadd.f32 %v3523, %v5235
        %v5268 = vadd.f32 %v3524, %v5238
        %v5269 = vadd.f32 %v3525, %v5243
        %v5270 = vadd.f32 %v3526, %v5246
        %v5271 = vadd.f32 %v3527, %v5251
        %v5272 = vadd.f32 %v3528, %v5254
        %v5273 = vld [vmem:[%s1171] sm:$0x1]
        %v5275 = vlaneseq
        %v5276 = vshrl.u32 %v5275, 7
        %v5277 = vsub.s32 0, %v5276
        %v5278 = vrot.slane %v5273, %v5277
        %v5280 = vadd.f32 %v5257, %v5278
        %v5281 = vadd.f32 %v5258, %v5278
        %v5282 = vadd.f32 %v5259, %v5278
        %v5283 = vadd.f32 %v5260, %v5278
        %v5284 = vadd.f32 %v5261, %v5278
        %v5285 = vadd.f32 %v5262, %v5278
        %v5286 = vadd.f32 %v5263, %v5278
        %v5287 = vadd.f32 %v5264, %v5278
        %v5288 = vadd.f32 %v5265, %v5278
        %v5289 = vadd.f32 %v5266, %v5278
        %v5290 = vadd.f32 %v5267, %v5278
        %v5291 = vadd.f32 %v5268, %v5278
        %v5292 = vadd.f32 %v5269, %v5278
        %v5293 = vadd.f32 %v5270, %v5278
        %v5294 = vadd.f32 %v5271, %v5278
        %v5295 = vadd.f32 %v5272, %v5278
        %v5296 = vld [vmem:[%s1174] sm:$0x1]
        %v5297 = vld [vmem:[%s1177] sm:$0x1]
        %5298 = vadd.xlane.f32.xlu0 %v5280
        %v5299 = vpop.xlane.xlu0 %5298
        %5300 = vadd.xlane.f32.xlu0 %v5281
        %v5301 = vpop.xlane.xlu0 %5300
        %5302 = vadd.xlane.f32.xlu0 %v5282
        %v5303 = vpop.xlane.xlu0 %5302
        %5304 = vadd.xlane.f32.xlu0 %v5283
        %v5305 = vpop.xlane.xlu0 %5304
        %5306 = vadd.xlane.f32.xlu0 %v5284
        %v5307 = vpop.xlane.xlu0 %5306
        %5308 = vadd.xlane.f32.xlu0 %v5285
        %v5309 = vpop.xlane.xlu0 %5308
        %5310 = vadd.xlane.f32.xlu0 %v5286
        %v5311 = vpop.xlane.xlu0 %5310
        %5312 = vadd.xlane.f32.xlu0 %v5287
        %v5313 = vpop.xlane.xlu0 %5312
        %5314 = vadd.xlane.f32.xlu0 %v5288
        %v5315 = vpop.xlane.xlu0 %5314
        %5316 = vadd.xlane.f32.xlu0 %v5289
        %v5317 = vpop.xlane.xlu0 %5316
        %5318 = vadd.xlane.f32.xlu0 %v5290
        %v5319 = vpop.xlane.xlu0 %5318
        %5320 = vadd.xlane.f32.xlu0 %v5291
        %v5321 = vpop.xlane.xlu0 %5320
        %5322 = vadd.xlane.f32.xlu0 %v5292
        %v5323 = vpop.xlane.xlu0 %5322
        %5324 = vadd.xlane.f32.xlu0 %v5293
        %v5325 = vpop.xlane.xlu0 %5324
        %5326 = vadd.xlane.f32.xlu0 %v5294
        %v5327 = vpop.xlane.xlu0 %5326
        %5328 = vadd.xlane.f32.xlu0 %v5295
        %v5329 = vpop.xlane.xlu0 %5328
        %v5330 = vmul.f32 %v5299, %v2156
        %v5331 = vmul.f32 %v5301, %v2156
        %v5332 = vmul.f32 %v5303, %v2156
        %v5333 = vmul.f32 %v5305, %v2156
        %v5334 = vmul.f32 %v5307, %v2156
        %v5335 = vmul.f32 %v5309, %v2156
        %v5336 = vmul.f32 %v5311, %v2156
        %v5337 = vmul.f32 %v5313, %v2156
        %v5338 = vmul.f32 %v5315, %v2156
        %v5339 = vmul.f32 %v5317, %v2156
        %v5340 = vmul.f32 %v5319, %v2156
        %v5341 = vmul.f32 %v5321, %v2156
        %v5342 = vmul.f32 %v5323, %v2156
        %v5343 = vmul.f32 %v5325, %v2156
        %v5344 = vmul.f32 %v5327, %v2156
        %v5345 = vmul.f32 %v5329, %v2156
        %v5346 = vsub.f32 %v5280, %v5330
        %v5347 = vsub.f32 %v5281, %v5331
        %v5348 = vsub.f32 %v5282, %v5332
        %v5349 = vsub.f32 %v5283, %v5333
        %v5350 = vsub.f32 %v5284, %v5334
        %v5351 = vsub.f32 %v5285, %v5335
        %v5352 = vsub.f32 %v5286, %v5336
        %v5353 = vsub.f32 %v5287, %v5337
        %v5354 = vsub.f32 %v5288, %v5338
        %v5355 = vsub.f32 %v5289, %v5339
        %v5356 = vsub.f32 %v5290, %v5340
        %v5357 = vsub.f32 %v5291, %v5341
        %v5358 = vsub.f32 %v5292, %v5342
        %v5359 = vsub.f32 %v5293, %v5343
        %v5360 = vsub.f32 %v5294, %v5344
        %v5361 = vsub.f32 %v5295, %v5345
        %v5362 = vmul.f32 %v5346, %v5346
        %v5363 = vmul.f32 %v5347, %v5347
        %v5364 = vmul.f32 %v5348, %v5348
        %v5365 = vmul.f32 %v5349, %v5349
        %v5366 = vmul.f32 %v5350, %v5350
        %v5367 = vmul.f32 %v5351, %v5351
        %v5368 = vmul.f32 %v5352, %v5352
        %v5369 = vmul.f32 %v5353, %v5353
        %v5370 = vmul.f32 %v5354, %v5354
        %v5371 = vmul.f32 %v5355, %v5355
        %v5372 = vmul.f32 %v5356, %v5356
        %v5373 = vmul.f32 %v5357, %v5357
        %v5374 = vmul.f32 %v5358, %v5358
        %v5375 = vmul.f32 %v5359, %v5359
        %v5376 = vmul.f32 %v5360, %v5360
        %v5377 = vmul.f32 %v5361, %v5361
        %5378 = vadd.xlane.f32.xlu0 %v5362
        %v5379 = vpop.xlane.xlu0 %5378
        %5380 = vadd.xlane.f32.xlu0 %v5363
        %v5381 = vpop.xlane.xlu0 %5380
        %5382 = vadd.xlane.f32.xlu0 %v5364
        %v5383 = vpop.xlane.xlu0 %5382
        %5384 = vadd.xlane.f32.xlu0 %v5365
        %v5385 = vpop.xlane.xlu0 %5384
        %5386 = vadd.xlane.f32.xlu0 %v5366
        %v5387 = vpop.xlane.xlu0 %5386
        %5388 = vadd.xlane.f32.xlu0 %v5367
        %v5389 = vpop.xlane.xlu0 %5388
        %5390 = vadd.xlane.f32.xlu0 %v5368
        %v5391 = vpop.xlane.xlu0 %5390
        %5392 = vadd.xlane.f32.xlu0 %v5369
        %v5393 = vpop.xlane.xlu0 %5392
        %5394 = vadd.xlane.f32.xlu0 %v5370
        %v5395 = vpop.xlane.xlu0 %5394
        %5396 = vadd.xlane.f32.xlu0 %v5371
        %v5397 = vpop.xlane.xlu0 %5396
        %5398 = vadd.xlane.f32.xlu0 %v5372
        %v5399 = vpop.xlane.xlu0 %5398
        %5400 = vadd.xlane.f32.xlu0 %v5373
        %v5401 = vpop.xlane.xlu0 %5400
        %5402 = vadd.xlane.f32.xlu0 %v5374
        %v5403 = vpop.xlane.xlu0 %5402
        %5404 = vadd.xlane.f32.xlu0 %v5375
        %v5405 = vpop.xlane.xlu0 %5404
        %5406 = vadd.xlane.f32.xlu0 %v5376
        %v5407 = vpop.xlane.xlu0 %5406
        %5408 = vadd.xlane.f32.xlu0 %v5377
        %v5409 = vpop.xlane.xlu0 %5408
        %v5410 = vmul.f32 %v5379, %v2156
        %v5411 = vmul.f32 %v5381, %v2156
        %v5412 = vmul.f32 %v5383, %v2156
        %v5413 = vmul.f32 %v5385, %v2156
        %v5414 = vmul.f32 %v5387, %v2156
        %v5415 = vmul.f32 %v5389, %v2156
        %v5416 = vmul.f32 %v5391, %v2156
        %v5417 = vmul.f32 %v5393, %v2156
        %v5418 = vmul.f32 %v5395, %v2156
        %v5419 = vmul.f32 %v5397, %v2156
        %v5420 = vmul.f32 %v5399, %v2156
        %v5421 = vmul.f32 %v5401, %v2156
        %v5422 = vmul.f32 %v5403, %v2156
        %v5423 = vmul.f32 %v5405, %v2156
        %v5424 = vmul.f32 %v5407, %v2156
        %v5425 = vmul.f32 %v5409, %v2156
        %v5426 = vadd.f32 %v5410, 1e-05
        %v5427 = vadd.f32 %v5411, 1e-05
        %v5428 = vadd.f32 %v5412, 1e-05
        %v5429 = vadd.f32 %v5413, 1e-05
        %v5430 = vadd.f32 %v5414, 1e-05
        %v5431 = vadd.f32 %v5415, 1e-05
        %v5432 = vadd.f32 %v5416, 1e-05
        %v5433 = vadd.f32 %v5417, 1e-05
        %v5434 = vadd.f32 %v5418, 1e-05
        %v5435 = vadd.f32 %v5419, 1e-05
        %v5436 = vadd.f32 %v5420, 1e-05
        %v5437 = vadd.f32 %v5421, 1e-05
        %v5438 = vadd.f32 %v5422, 1e-05
        %v5439 = vadd.f32 %v5423, 1e-05
        %v5440 = vadd.f32 %v5424, 1e-05
        %v5441 = vadd.f32 %v5425, 1e-05
        %v5442 = vrsqrt.pop %v5426
        %v5443 = vrsqrt.pop %v5427
        %v5444 = vrsqrt.pop %v5428
        %v5445 = vrsqrt.pop %v5429
        %v5446 = vrsqrt.pop %v5430
        %v5447 = vrsqrt.pop %v5431
        %v5448 = vrsqrt.pop %v5432
        %v5449 = vrsqrt.pop %v5433
        %v5450 = vrsqrt.pop %v5434
        %v5451 = vrsqrt.pop %v5435
        %v5452 = vrsqrt.pop %v5436
        %v5453 = vrsqrt.pop %v5437
        %v5454 = vrsqrt.pop %v5438
        %v5455 = vrsqrt.pop %v5439
        %v5456 = vrsqrt.pop %v5440
        %v5457 = vrsqrt.pop %v5441
        %v5458 = vmul.f32 %v5346, %v5442
        %v5459 = vmul.f32 %v5347, %v5443
        %v5460 = vmul.f32 %v5348, %v5444
        %v5461 = vmul.f32 %v5349, %v5445
        %v5462 = vmul.f32 %v5350, %v5446
        %v5463 = vmul.f32 %v5351, %v5447
        %v5464 = vmul.f32 %v5352, %v5448
        %v5465 = vmul.f32 %v5353, %v5449
        %v5466 = vmul.f32 %v5354, %v5450
        %v5467 = vmul.f32 %v5355, %v5451
        %v5468 = vmul.f32 %v5356, %v5452
        %v5469 = vmul.f32 %v5357, %v5453
        %v5470 = vmul.f32 %v5358, %v5454
        %v5471 = vmul.f32 %v5359, %v5455
        %v5472 = vmul.f32 %v5360, %v5456
        %v5473 = vmul.f32 %v5361, %v5457
        %v5475 = vlaneseq
        %v5476 = vshrl.u32 %v5475, 7
        %v5477 = vsub.s32 0, %v5476
        %v5478 = vrot.slane %v5296, %v5477
        %v5480 = vmul.f32 %v5458, %v5478
        %v5481 = vmul.f32 %v5459, %v5478
        %v5482 = vmul.f32 %v5460, %v5478
        %v5483 = vmul.f32 %v5461, %v5478
        %v5484 = vmul.f32 %v5462, %v5478
        %v5485 = vmul.f32 %v5463, %v5478
        %v5486 = vmul.f32 %v5464, %v5478
        %v5487 = vmul.f32 %v5465, %v5478
        %v5488 = vmul.f32 %v5466, %v5478
        %v5489 = vmul.f32 %v5467, %v5478
        %v5490 = vmul.f32 %v5468, %v5478
        %v5491 = vmul.f32 %v5469, %v5478
        %v5492 = vmul.f32 %v5470, %v5478
        %v5493 = vmul.f32 %v5471, %v5478
        %v5494 = vmul.f32 %v5472, %v5478
        %v5495 = vmul.f32 %v5473, %v5478
        %v5497 = vlaneseq
        %v5498 = vshrl.u32 %v5497, 7
        %v5499 = vsub.s32 0, %v5498
        %v5500 = vrot.slane %v5297, %v5499
        %v5502 = vadd.f32 %v5480, %v5500
        %v5503 = vadd.f32 %v5481, %v5500
        %v5504 = vadd.f32 %v5482, %v5500
        %v5505 = vadd.f32 %v5483, %v5500
        %v5506 = vadd.f32 %v5484, %v5500
        %v5507 = vadd.f32 %v5485, %v5500
        %v5508 = vadd.f32 %v5486, %v5500
        %v5509 = vadd.f32 %v5487, %v5500
        %v5510 = vadd.f32 %v5488, %v5500
        %v5511 = vadd.f32 %v5489, %v5500
        %v5512 = vadd.f32 %v5490, %v5500
        %v5513 = vadd.f32 %v5491, %v5500
        %v5514 = vadd.f32 %v5492, %v5500
        %v5515 = vadd.f32 %v5493, %v5500
        %v5516 = vadd.f32 %v5494, %v5500
        %v5517 = vadd.f32 %v5495, %v5500
        %v5518 = vpack.c.bf16 %v5503, %v5502
        %v5519 = vpack.c.bf16 %v5505, %v5504
        %v5520 = vpack.c.bf16 %v5507, %v5506
        %v5521 = vpack.c.bf16 %v5509, %v5508
        %v5522 = vpack.c.bf16 %v5511, %v5510
        %v5523 = vpack.c.bf16 %v5513, %v5512
        %v5524 = vpack.c.bf16 %v5515, %v5514
        %v5525 = vpack.c.bf16 %v5517, %v5516
        %v5526 = vld [vmem:[%s1182] sm:$0xf]
        %v5527 = vld [vmem:[%s1182 + $0x4] sm:$0xf]
        %v5528 = vld [vmem:[%s1182 + $0x8] sm:$0xf]
        %v5529 = vld [vmem:[%s1182 + $0xc] sm:$0xf]
        %v5530 = vld [vmem:[%s1182 + $0x10] sm:$0xf]
        %v5531 = vld [vmem:[%s1182 + $0x14] sm:$0xf]
        %v5532 = vld [vmem:[%s1182 + $0x18] sm:$0xf]
        %v5533 = vld [vmem:[%s1182 + $0x1c] sm:$0xf]
        %v5534 = vld [vmem:[%s1182 + $0x20] sm:$0xf]
        %v5535 = vld [vmem:[%s1182 + $0x24] sm:$0xf]
        %v5536 = vld [vmem:[%s1182 + $0x28] sm:$0xf]
        %v5537 = vld [vmem:[%s1182 + $0x2c] sm:$0xf]
        %v5538 = vld [vmem:[%s1182 + $0x30] sm:$0xf]
        %v5539 = vld [vmem:[%s1182 + $0x34] sm:$0xf]
        %v5540 = vld [vmem:[%s1182 + $0x38] sm:$0xf]
        %v5541 = vld [vmem:[%s1182 + $0x3c] sm:$0xf]
        %v5542 = vld [vmem:[%s1185] sm:$0x1]
        %v5544 = vlaneseq
        %v5545 = vshrl.u32 %v5544, 7
        %v5546 = vsub.s32 0, %v5545
        %v5547 = vrot.slane %v5542, %v5546
        %v5565 = vunpack.c.l.b16 %v5526
        %v5566 = vunpack.c.l.b16 %v5527
        %v5567 = vunpack.c.l.b16 %v5528
        %v5568 = vunpack.c.l.b16 %v5529
        %v5569 = vunpack.c.l.b16 %v5530
        %v5570 = vunpack.c.l.b16 %v5531
        %v5571 = vunpack.c.l.b16 %v5532
        %v5572 = vunpack.c.l.b16 %v5533
        %v5573 = vunpack.c.l.b16 %v5534
        %v5574 = vunpack.c.l.b16 %v5535
        %v5575 = vunpack.c.l.b16 %v5536
        %v5576 = vunpack.c.l.b16 %v5537
        %v5577 = vunpack.c.l.b16 %v5538
        %v5578 = vunpack.c.l.b16 %v5539
        %v5579 = vunpack.c.l.b16 %v5540
        %v5580 = vunpack.c.l.b16 %v5541
        %v5581 = vpack.c.b16 %v5566, %v5565
        %v5582 = vpack.c.b16 %v5568, %v5567
        %v5583 = vpack.c.b16 %v5570, %v5569
        %v5584 = vpack.c.b16 %v5572, %v5571
        %v5585 = vpack.c.b16 %v5574, %v5573
        %v5586 = vpack.c.b16 %v5576, %v5575
        %v5587 = vpack.c.b16 %v5578, %v5577
        %v5588 = vpack.c.b16 %v5580, %v5579
        %5597 = vmatprep.subr.bf16.mxu0 0
        %5598 = vmatpush1.bf16.msra.mxu0 %v5581
        %5599 = vmatprep.subr.bf16.mxu0 0
        %5600 = vmatpush1.bf16.msra.mxu0 %v5582
        %5601 = vmatprep.subr.bf16.mxu0 0
        %5602 = vmatpush1.bf16.msra.mxu0 %v5583
        %5603 = vmatprep.subr.bf16.mxu0 0
        %5604 = vmatpush1.bf16.msra.mxu0 %v5584
        %5605 = vmatprep.subr.bf16.mxu0 0
        %5606 = vmatpush1.bf16.msra.mxu0 %v5585
        %5607 = vmatprep.subr.bf16.mxu0 0
        %5608 = vmatpush1.bf16.msra.mxu0 %v5586
        %5609 = vmatprep.subr.bf16.mxu0 0
        %5610 = vmatpush1.bf16.msra.mxu0 %v5587
        %5611 = vmatprep.subr.bf16.mxu0 0
        %5612 = vmatpush1.bf16.msra.mxu0 %v5588
        %5613 = vmatprep.subr.bf16.mxu0 0
        %5614 = vmatpush1.bf16.msra.mxu0 0
        %5615 = vmatprep.subr.bf16.mxu0 0
        %5616 = vmatpush1.bf16.msra.mxu0 0
        %5617 = vmatprep.subr.bf16.mxu0 0
        %5618 = vmatpush1.bf16.msra.mxu0 0
        %5619 = vmatprep.subr.bf16.mxu0 0
        %5620 = vmatpush1.bf16.msra.mxu0 0
        %5621 = vmatprep.subr.bf16.mxu0 0
        %5622 = vmatpush1.bf16.msra.mxu0 0
        %5623 = vmatprep.subr.bf16.mxu0 0
        %5624 = vmatpush1.bf16.msra.mxu0 0
        %5625 = vmatprep.subr.bf16.mxu0 0
        %5626 = vmatpush1.bf16.msra.mxu0 0
        %5627 = vmatprep.subr.bf16.mxu0 0
        %5628 = vmatpush1.bf16.msra.mxu0 0
        %5629 = vmatprep.mubr.bf16.mxu0 0
        %5630 = vmatmul.mubr.bf16.gmra.mrb[0].mxu0 %v5518
        %v5631 = vpop.f32.mrb[0].mxu0
        %v5632 = vadd.f32 %v5547, %v5631
        %v5633 = vpop.f32.mrb[0].mxu0
        %v5634 = vpop.f32.mrb[0].mxu0
        %v5635 = vadd.f32 %v5547, %v5634
        %v5636 = vpop.f32.mrb[0].mxu0
        %5637 = vmatprep.mubr.bf16.mxu0 0
        %5638 = vmatmul.mubr.bf16.gmra.mrb[0].mxu0 %v5519
        %v5639 = vpop.f32.mrb[0].mxu0
        %v5640 = vadd.f32 %v5547, %v5639
        %v5641 = vpop.f32.mrb[0].mxu0
        %v5642 = vpop.f32.mrb[0].mxu0
        %v5643 = vadd.f32 %v5547, %v5642
        %v5644 = vpop.f32.mrb[0].mxu0
        %5645 = vmatprep.mubr.bf16.mxu0 0
        %5646 = vmatmul.mubr.bf16.gmra.mrb[0].mxu0 %v5520
        %v5647 = vpop.f32.mrb[0].mxu0
        %v5648 = vadd.f32 %v5547, %v5647
        %v5649 = vpop.f32.mrb[0].mxu0
        %v5650 = vpop.f32.mrb[0].mxu0
        %v5651 = vadd.f32 %v5547, %v5650
        %v5652 = vpop.f32.mrb[0].mxu0
        %5653 = vmatprep.mubr.bf16.mxu0 0
        %5654 = vmatmul.mubr.bf16.gmra.mrb[0].mxu0 %v5521
        %v5655 = vpop.f32.mrb[0].mxu0
        %v5656 = vadd.f32 %v5547, %v5655
        %v5657 = vpop.f32.mrb[0].mxu0
        %v5658 = vpop.f32.mrb[0].mxu0
        %v5659 = vadd.f32 %v5547, %v5658
        %v5660 = vpop.f32.mrb[0].mxu0
        %5661 = vmatprep.mubr.bf16.mxu0 0
        %5662 = vmatmul.mubr.bf16.gmra.mrb[0].mxu0 %v5522
        %v5663 = vpop.f32.mrb[0].mxu0
        %v5664 = vadd.f32 %v5547, %v5663
        %v5665 = vpop.f32.mrb[0].mxu0
        %v5666 = vpop.f32.mrb[0].mxu0
        %v5667 = vadd.f32 %v5547, %v5666
        %v5668 = vpop.f32.mrb[0].mxu0
        %5669 = vmatprep.mubr.bf16.mxu0 0
        %5670 = vmatmul.mubr.bf16.gmra.mrb[0].mxu0 %v5523
        %v5671 = vpop.f32.mrb[0].mxu0
        %v5672 = vadd.f32 %v5547, %v5671
        %v5673 = vpop.f32.mrb[0].mxu0
        %v5674 = vpop.f32.mrb[0].mxu0
        %v5675 = vadd.f32 %v5547, %v5674
        %v5676 = vpop.f32.mrb[0].mxu0
        %5677 = vmatprep.mubr.bf16.mxu0 0
        %5678 = vmatmul.mubr.bf16.gmra.mrb[0].mxu0 %v5524
        %v5679 = vpop.f32.mrb[0].mxu0
        %v5680 = vadd.f32 %v5547, %v5679
        %v5681 = vpop.f32.mrb[0].mxu0
        %v5682 = vpop.f32.mrb[0].mxu0
        %v5683 = vadd.f32 %v5547, %v5682
        %v5684 = vpop.f32.mrb[0].mxu0
        %5685 = vmatprep.mubr.bf16.mxu0 0
        %5686 = vmatmul.mubr.bf16.gmra.mrb[0].mxu0 %v5525
        %v5687 = vpop.f32.mrb[0].mxu0
        %v5688 = vadd.f32 %v5547, %v5687
        %v5689 = vpop.f32.mrb[0].mxu0
        %v5690 = vpop.f32.mrb[0].mxu0
        %v5691 = vadd.f32 %v5547, %v5690
        %v5692 = vpop.f32.mrb[0].mxu0
        %5693 = vdwg.mxu0
        %5694 = vst.msk [vmem:[%s1190] sm:$0xff] %vm1984, %v5632
        %5695 = vst.msk [vmem:[%s1190 + $0x8] sm:$0xff] %vm1984, %v5635
        %5696 = vst.msk [vmem:[%s1190 + $0x10] sm:$0xff] %vm1984, %v5640
        %5697 = vst.msk [vmem:[%s1190 + $0x18] sm:$0xff] %vm1984, %v5643
        %5698 = vst.msk [vmem:[%s1190 + $0x20] sm:$0xff] %vm1984, %v5648
        %5699 = vst.msk [vmem:[%s1190 + $0x28] sm:$0xff] %vm1984, %v5651
        %5700 = vst.msk [vmem:[%s1190 + $0x30] sm:$0xff] %vm1984, %v5656
        %5701 = vst.msk [vmem:[%s1190 + $0x38] sm:$0xff] %vm1984, %v5659
        %5702 = vst.msk [vmem:[%s1190 + $0x40] sm:$0xff] %vm1984, %v5664
        %5703 = vst.msk [vmem:[%s1190 + $0x48] sm:$0xff] %vm1984, %v5667
        %5704 = vst.msk [vmem:[%s1190 + $0x50] sm:$0xff] %vm1984, %v5672
        %5705 = vst.msk [vmem:[%s1190 + $0x58] sm:$0xff] %vm1984, %v5675
        %5706 = vst.msk [vmem:[%s1190 + $0x60] sm:$0xff] %vm1984, %v5680
        %5707 = vst.msk [vmem:[%s1190 + $0x68] sm:$0xff] %vm1984, %v5683
        %5708 = vst.msk [vmem:[%s1190 + $0x70] sm:$0xff] %vm1984, %v5688
        %5709 = vst.msk [vmem:[%s1190 + $0x78] sm:$0xff] %vm1984, %v5691
        %p5710 = scmp.lt.s32.totalorder %s40, 1
        %s5711 = scalar_select %p5710, %s40, 1
        %s5712 = smul.addr %s5711, 16
        %s5713 = smul.addr %s5712, 8
        %s5714 = scalar_lea.vmem %s27, %s5713
        // Predicated region
        $region137: #{run_diffusion_forward.1} parent=127 // pred_check
          %p5715 = pneg %p735
        $region138: #{run_diffusion_forward.1} parent=127 // pred_check_branch
          %5717 = sbr.rel (%p5715) target = $region140
        $region139: #{run_diffusion_forward.1} parent=127 // pred_region
          _
        $region140: #{run_diffusion_forward.1} parent=127 // pred_fallthru
          _
      $region128: #{run_diffusion_forward.1} parent=5 // pred_fallthru
        _
      %p5718 = scmp.le.s32.totalorder 2, %s35
      // Predicated region
      $region141: #{run_diffusion_forward.1} parent=5 // pred_check
        %p5719 = pneg %p5718
      $region142: #{run_diffusion_forward.1} parent=5 // pred_check_branch
        %5721 = sbr.rel (%p5719) target = $region144
      $region143: #{run_diffusion_forward.1} parent=5 // pred_region
        %s5722 = ssub.s32 %s35, 2
        // Predicated region
        $region145: #{run_diffusion_forward.1} parent=143 // pred_check
          %p5723 = pneg %p741
        $region146: #{run_diffusion_forward.1} parent=143 // pred_check_branch
          %5725 = sbr.rel (%p5723) target = $region148
        $region147: #{run_diffusion_forward.1} parent=143 // pred_region
          %p5726 = scmp.lt.s32.totalorder %s41, 1
          %s5727 = scalar_select %p5726, %s41, 1
          %s5728 = smul.addr %s5727, 16
          %s5729 = smul.addr %s5728, 8
          %s5730 = scalar_lea.vmem %s27, %s5729
        $region148: #{run_diffusion_forward.1} parent=143 // pred_fallthru
          _
      $region144: #{run_diffusion_forward.1} parent=5 // pred_fallthru
        _
    $region6: #{run_diffusion_forward.1} parent=1 // loop_footer
      %s39 = sadd.s32 1, %s35
    $region7: #{run_diffusion_forward.1} parent=1 // loop_footer_branch
      %34 = sbr.rel target = $region3
    $region8: #{run_diffusion_forward.1} parent=1 // loop_exit
      _
    %5731 = vsyncpa [#allocation3], 1
    %s5732 = scalar_lea.sflag [#allocation3], 1
    %5733 = vsyncpa %s5732, 1
    %5734 = vsyncpa [#allocation5], 1

</llo_original>
